<compile_context>
chip_gen: v5e
topology: v5e:2x2
jax: 0.10.0
libtpu: 0.0.40
codegen_flags: <defaults>
</compile_context>

<pallas_src>
import functools

import numpy as np
import jax
import jax.numpy as jnp
from jax.experimental import pallas as pl
from jax.experimental.pallas import tpu as pltpu


_PAD_TOP = 8  # interior rows start sublane-aligned; row _PAD_TOP-1 is the zero top pad


# ---------------------------------------------------------------------------
# Fused decoder kernel: one grid step == one batch element.
# ---------------------------------------------------------------------------
def _decoder_kernel(x_ref, w_stem, sh_stem, w_blk, sh_blk,
                    w_up1, sh_up1, w_up2, sh_up2, w_up3, sh_up3,
                    o_ref,
                    pad_s, pad_a, pad_b, pad_u1, pad_u2, *, H):
    f32, bf16 = jnp.float32, jnp.bfloat16
    T = _PAD_TOP

    def band_conv(src, wget, shift, n_taps, rows, row_off=0):
        """sum_dy  src[vertical shift dy] @ W[dy]  + shift   (bf16 MXU, f32 acc)."""
        acc = None
        for dy in range(n_taps):
            off = T - 1 + row_off + dy
            lhs = src[off:off + rows, :].astype(bf16)
            p = jnp.dot(lhs, wget(dy), preferred_element_type=f32)
            acc = p if acc is None else acc + p
        return acc + shift

    def interleave_rows(y_even, y_odd):
        """rows 2i <- y_even[i], rows 2i+1 <- y_odd[i] via 0/1 permutation matmuls."""
        r = y_even.shape[0]
        i = jax.lax.broadcasted_iota(jnp.int32, (2 * r, r), 0)
        j = jax.lax.broadcasted_iota(jnp.int32, (2 * r, r), 1)
        pe = (i == 2 * j).astype(f32)
        po = (i == 2 * j + 1).astype(f32)
        return (jnp.dot(pe, y_even, preferred_element_type=f32)
                + jnp.dot(po, y_odd, preferred_element_type=f32))

    def upconv(src, w, shift, rows_in):
        """Phase-decomposed ConvTranspose2d(k=4, s=2, p=1): no zero-insertion.
        Column interleave is baked into the banded weights (output lanes are
        ox*Cout + co); row interleave is done with permutation matmuls."""
        phases = []
        for ry in range(2):
            phases.append(band_conv(src, lambda dy: w[ry, dy], shift,
                                    n_taps=2, rows=rows_in, row_off=ry))
        return interleave_rows(phases[0], phases[1])

    # ---- clear scratch: the border rows double as the conv zero padding ----
    for buf in (pad_s, pad_a, pad_b, pad_u1, pad_u2):
        buf[...] = jnp.zeros_like(buf)

    # ---- stem: Conv2d(embed_dim, n_hidden, 3,1,1) + BN (folded) + ReLU ----
    pad_s[T:T + H, :] = x_ref[0]
    y = band_conv(pad_s, lambda dy: w_stem[dy], sh_stem[...], n_taps=3, rows=H)
    pad_a[T:T + H, :] = jnp.maximum(y, 0.0)

    # ---- two BasicBlocks: conv3x3+BN+ReLU, conv3x3+BN, +identity, ReLU ----
    for b in range(2):
        identity = pad_a[T:T + H, :]
        y = band_conv(pad_a, lambda dy: w_blk[2 * b, dy], sh_blk[2 * b],
                      n_taps=3, rows=H)
        pad_b[T:T + H, :] = jnp.maximum(y, 0.0)
        y = band_conv(pad_b, lambda dy: w_blk[2 * b + 1, dy], sh_blk[2 * b + 1],
                      n_taps=3, rows=H)
        pad_a[T:T + H, :] = jnp.maximum(y + identity, 0.0)

    # ---- upscale_net (upscale == 8): three ConvTranspose2d(4,2,1) ----
    y = upconv(pad_a, w_up1, sh_up1[...], rows_in=H)            # H   -> 2H, ReLU
    pad_u1[T:T + 2 * H, :] = jnp.maximum(y, 0.0)

    y = upconv(pad_u1, w_up2, sh_up2[...], rows_in=2 * H)       # 2H  -> 4H, ReLU
    pad_u2[T:T + 4 * H, :] = jnp.maximum(y, 0.0)

    y = upconv(pad_u2, w_up3, sh_up3[...], rows_in=4 * H)       # 4H  -> 8H, no ReLU
    o_ref[0, :, :] = y


# ---------------------------------------------------------------------------
# Banded-weight construction (host side, runs once).
# ---------------------------------------------------------------------------
def _conv3x3_band(w, out_scale, width):
    """Conv2d weight (Cout, Cin, 3, 3) -> (3, width*Cin, width*Cout) banded matrices.
    band[dy, wx*Cin+ci, px*Cout+co] = scale[co] * W[co, ci, dy, wx-px+1]."""
    w = np.asarray(w, np.float32) * np.asarray(out_scale, np.float32)[:, None, None, None]
    cout, cin = w.shape[0], w.shape[1]
    band = np.zeros((3, width * cin, width * cout), np.float32)
    for dy in range(3):
        for px in range(width):
            for dx in range(3):
                wx = px + dx - 1
                if 0 <= wx < width:
                    band[dy, wx * cin:(wx + 1) * cin,
                         px * cout:(px + 1) * cout] = w[:, :, dy, dx].T
    return band


def _convT4x4_band(w, width):
    """ConvTranspose2d weight (Cin, Cout, 4, 4) -> (2, 2, width*Cin, 2*width*Cout)
    phase-decomposed banded matrices, indexed [row_phase ry, vertical tap dy].
    Output lane ordering is ox*Cout + co with ox = 2*px + rx (column interleave
    of the stride-2 upsampling is already folded in)."""
    w = np.asarray(w, np.float32)
    cin, cout = w.shape[0], w.shape[1]
    band = np.zeros((2, 2, width * cin, 2 * width * cout), np.float32)
    for ry in range(2):
        for dy in range(2):
            ky = 3 - ry - 2 * dy
            for rx in range(2):
                for dx in range(2):
                    kx = 3 - rx - 2 * dx
                    for px in range(width):
                        wx = px + rx + dx - 1
                        if not (0 <= wx < width):
                            continue
                        ox = 2 * px + rx
                        band[ry, dy, wx * cin:(wx + 1) * cin,
                             ox * cout:(ox + 1) * cout] = w[:, :, ky, kx]
    return band


def init_decoder_params(key, embed_dim, n_hidden):
    """Deterministic PyTorch-layout weights for Decoder(embed_dim, upscale=8, n_hidden)."""
    h2 = n_hidden // 2
    ks = jax.random.split(key, 12)
    nrm = lambda k, shape: 0.05 * jax.random.normal(k, shape, jnp.float32)
    return dict(
        stem_w=nrm(ks[0], (n_hidden, embed_dim, 3, 3)),
        stem_b=nrm(ks[1], (n_hidden,)),
        b0c1=nrm(ks[2], (n_hidden, n_hidden, 3, 3)),
        b0c2=nrm(ks[3], (n_hidden, n_hidden, 3, 3)),
        b1c1=nrm(ks[4], (n_hidden, n_hidden, 3, 3)),
        b1c2=nrm(ks[5], (n_hidden, n_hidden, 3, 3)),
        up1_w=nrm(ks[6], (n_hidden, h2, 4, 4)),
        up1_b=nrm(ks[7], (h2,)),
        up2_w=nrm(ks[8], (h2, h2, 4, 4)),
        up2_b=nrm(ks[9], (h2,)),
        up3_w=nrm(ks[10], (h2, 3, 4, 4)),
        up3_b=nrm(ks[11], (3,)),
    )


def pack_decoder_params(raw, H, W, eps=1e-5):
    """Fold eval-mode BatchNorm (fresh running stats) into the weights and build
    the banded matrices / tiled shift vectors consumed by the fused kernel."""
    del H  # band matrices depend only on the spatial width
    bn_scale = 1.0 / np.sqrt(1.0 + eps)          # gamma=1, beta=0, mean=0, var=1
    n_hidden = raw["stem_w"].shape[0]
    scale_vec = np.full((n_hidden,), bn_scale, np.float32)

    def tile_shift(v, reps):
        return np.tile(np.asarray(v, np.float32), reps)[None, :]

    w_stem = _conv3x3_band(raw["stem_w"], scale_vec, W)
    sh_stem = tile_shift(bn_scale * np.asarray(raw["stem_b"], np.float32), W)

    w_blk = np.stack([_conv3x3_band(raw[k], scale_vec, W)
                      for k in ("b0c1", "b0c2", "b1c1", "b1c2")])
    sh_blk = np.zeros((4, 1, W * n_hidden), np.float32)   # bias-free convs, BN beta=0

    w_up1 = _convT4x4_band(raw["up1_w"], W)
    w_up2 = _convT4x4_band(raw["up2_w"], 2 * W)
    w_up3 = _convT4x4_band(raw["up3_w"], 4 * W)
    sh_up1 = tile_shift(raw["up1_b"], 2 * W)
    sh_up2 = tile_shift(raw["up2_b"], 4 * W)
    sh_up3 = tile_shift(raw["up3_b"], 8 * W)

    bf = lambda a: jnp.asarray(a, jnp.bfloat16)   # MXU operands in bf16
    f32 = lambda a: jnp.asarray(a, jnp.float32)   # epilogue shifts in f32
    return dict(
        w_stem=bf(w_stem), sh_stem=f32(sh_stem),
        w_blk=bf(w_blk), sh_blk=f32(sh_blk),
        w_up1=bf(w_up1), sh_up1=f32(sh_up1),
        w_up2=bf(w_up2), sh_up2=f32(sh_up2),
        w_up3=bf(w_up3), sh_up3=f32(sh_up3),
    )


# ---------------------------------------------------------------------------
# Forward pass wrapper (PyTorch NCHW in / NCHW out).
# ---------------------------------------------------------------------------
def decoder_forward(z, kp):
    N, C0, H, W = z.shape
    L_in = W * C0
    L_a = kp["w_stem"].shape[-1]       # W * n_hidden
    L_u1 = kp["w_up1"].shape[-1]       # 2W * n_hidden//2
    L_u2 = kp["w_up2"].shape[-1]       # 4W * n_hidden//2
    L_out = kp["w_up3"].shape[-1]      # 8W * 3
    H_out, W_out = 8 * H, 8 * W

    # NCHW -> row-flattened NHWC (rows = H, lanes = W*C) at the boundary.
    x = jnp.transpose(z, (0, 2, 3, 1)).reshape(N, H, L_in).astype(jnp.float32)

    def full_spec(arr):
        nd = arr.ndim
        return pl.BlockSpec(arr.shape, lambda n, _nd=nd: (0,) * _nd)

    weight_args = (kp["w_stem"], kp["sh_stem"], kp["w_blk"], kp["sh_blk"],
                   kp["w_up1"], kp["sh_up1"], kp["w_up2"], kp["sh_up2"],
                   kp["w_up3"], kp["sh_up3"])

    out = pl.pallas_call(
        functools.partial(_decoder_kernel, H=H),
        out_shape=jax.ShapeDtypeStruct((N, H_out, L_out), jnp.float32),
        grid=(N,),
        in_specs=[pl.BlockSpec((1, H, L_in), lambda n: (n, 0, 0))]
                 + [full_spec(a) for a in weight_args],
        out_specs=pl.BlockSpec((1, H_out, L_out), lambda n: (n, 0, 0)),
        scratch_shapes=[
            pltpu.VMEM((_PAD_TOP + H + 1, L_in), jnp.float32),        # padded stem input
            pltpu.VMEM((_PAD_TOP + H + 1, L_a), jnp.float32),         # ping
            pltpu.VMEM((_PAD_TOP + H + 1, L_a), jnp.float32),         # pong
            pltpu.VMEM((_PAD_TOP + 2 * H + 1, L_u1), jnp.float32),    # up1 output (padded)
            pltpu.VMEM((_PAD_TOP + 4 * H + 1, L_u2), jnp.float32),    # up2 output (padded)
        ],
        compiler_params=pltpu.CompilerParams(
            dimension_semantics=("parallel",)),                        # megacore on v7x
    )(x, *weight_args)

    # kernel output lanes are ox*3 + c  ->  (N, H_out, W_out, 3)  ->  NCHW
    out = out.reshape(N, H_out, W_out, 3)
    return jnp.transpose(out, (0, 3, 1, 2))


# ---------------------------------------------------------------------------
# Pure-XLA reference (eval-mode BN), used only for a loose numerical check.
# ---------------------------------------------------------------------------
def _ref_decoder(z, raw, eps=1e-5):
    dn = ("NCHW", "OIHW", "NCHW")
    bn_scale = 1.0 / np.sqrt(1.0 + eps)
    relu = lambda x: jnp.maximum(x, 0.0)

    def conv3(x, w):
        return jax.lax.conv_general_dilated(x, w, (1, 1), ((1, 1), (1, 1)),
                                            dimension_numbers=dn)

    def convT(x, w, b):
        wf = jnp.flip(w, (2, 3)).transpose(1, 0, 2, 3)
        y = jax.lax.conv_general_dilated(x, wf, (1, 1), ((2, 2), (2, 2)),
                                         lhs_dilation=(2, 2), dimension_numbers=dn)
        return y + b[None, :, None, None]

    x = relu(bn_scale * (conv3(z, raw["stem_w"]) + raw["stem_b"][None, :, None, None]))
    for c1, c2 in (("b0c1", "b0c2"), ("b1c1", "b1c2")):
        idn = x
        y = relu(bn_scale * conv3(x, raw[c1]))
        y = bn_scale * conv3(y, raw[c2])
        x = relu(y + idn)
    x = relu(convT(x, raw["up1_w"], raw["up1_b"]))
    x = relu(convT(x, raw["up2_w"], raw["up2_b"]))
    return convT(x, raw["up3_w"], raw["up3_b"])


if __name__ == "__main__":
    BATCH, EMBED_DIM, H, W = 2, 8, 4, 4
    N_HIDDEN, UPSCALE = 32, 8

    key = jax.random.PRNGKey(0)
    k_params, k_input = jax.random.split(key)

    raw = init_decoder_params(k_params, EMBED_DIM, N_HIDDEN)
    kp = pack_decoder_params(raw, H, W)
    z = jax.random.normal(k_input, (BATCH, EMBED_DIM, H, W), jnp.float32)

    out = jax.jit(decoder_forward)(z, kp)
    out = jax.block_until_ready(out)

    assert out.shape == (BATCH, 3, UPSCALE * H, UPSCALE * W), out.shape
    assert bool(jnp.all(jnp.isfinite(out)))

    # Loose numerical check against the pure-XLA reference (kernel uses bf16 MXU operands).
    ref = _ref_decoder(z, raw)
    err = float(jnp.max(jnp.abs(out - ref)))
    tol = 1e-2 + 2e-2 * float(jnp.max(jnp.abs(ref)))
    assert err < tol, (err, tol)

    print("KERNEL_OK")
</pallas_src>

<mosaic_0001>
module attributes {stable_mosaic.version = 11 : i64} {
  func.func @_decoder_kernel(%arg0: i32, %arg1: memref<1x4x32xf32, #tpu.memory_space<vmem>>, %arg2: memref<3x32x128xbf16, #tpu.memory_space<vmem>>, %arg3: memref<1x128xf32, #tpu.memory_space<vmem>>, %arg4: memref<4x3x128x128xbf16, #tpu.memory_space<vmem>>, %arg5: memref<4x1x128xf32, #tpu.memory_space<vmem>>, %arg6: memref<2x2x128x128xbf16, #tpu.memory_space<vmem>>, %arg7: memref<1x128xf32, #tpu.memory_space<vmem>>, %arg8: memref<2x2x128x256xbf16, #tpu.memory_space<vmem>>, %arg9: memref<1x256xf32, #tpu.memory_space<vmem>>, %arg10: memref<2x2x256x96xbf16, #tpu.memory_space<vmem>>, %arg11: memref<1x96xf32, #tpu.memory_space<vmem>>, %arg12: memref<1x32x96xf32, #tpu.memory_space<vmem>>, %arg13: memref<13x32xf32, #tpu.memory_space<vmem>>, %arg14: memref<13x128xf32, #tpu.memory_space<vmem>>, %arg15: memref<13x128xf32, #tpu.memory_space<vmem>>, %arg16: memref<17x128xf32, #tpu.memory_space<vmem>>, %arg17: memref<25x256xf32, #tpu.memory_space<vmem>>) attributes {dimension_semantics = [#tpu.dimension_semantics<parallel>], iteration_bounds = array<i64: 2>, scalar_prefetch = 0 : i64, scratch_operands = 5 : i64, tpu.core_type = #tpu.core_type<tc>, window_params = [{transform_indices = @transform_0, window_bounds = array<i64: 1, 4, 32>}, {pipeline_mode = #tpu.pipeline_mode<synchronous>, transform_indices = @transform_1, window_bounds = array<i64: 3, 32, 128>}, {pipeline_mode = #tpu.pipeline_mode<synchronous>, transform_indices = @transform_2, window_bounds = array<i64: 1, 128>}, {pipeline_mode = #tpu.pipeline_mode<synchronous>, transform_indices = @transform_3, window_bounds = array<i64: 4, 3, 128, 128>}, {pipeline_mode = #tpu.pipeline_mode<synchronous>, transform_indices = @transform_4, window_bounds = array<i64: 4, 1, 128>}, {pipeline_mode = #tpu.pipeline_mode<synchronous>, transform_indices = @transform_5, window_bounds = array<i64: 2, 2, 128, 128>}, {pipeline_mode = #tpu.pipeline_mode<synchronous>, transform_indices = @transform_6, window_bounds = array<i64: 1, 128>}, {pipeline_mode = #tpu.pipeline_mode<synchronous>, transform_indices = @transform_7, window_bounds = array<i64: 2, 2, 128, 256>}, {pipeline_mode = #tpu.pipeline_mode<synchronous>, transform_indices = @transform_8, window_bounds = array<i64: 1, 256>}, {pipeline_mode = #tpu.pipeline_mode<synchronous>, transform_indices = @transform_9, window_bounds = array<i64: 2, 2, 256, 96>}, {pipeline_mode = #tpu.pipeline_mode<synchronous>, transform_indices = @transform_10, window_bounds = array<i64: 1, 96>}, {transform_indices = @transform_11, window_bounds = array<i64: 1, 32, 96>}]} {
    %cst = arith.constant 0.000000e+00 : f32
    %0 = vector.broadcast %cst : f32 to vector<13x32xf32>
    %c0 = arith.constant 0 : index
    %c0_0 = arith.constant 0 : index
    %1 = vector.load %arg13[%c0, %c0_0] : memref<13x32xf32, #tpu.memory_space<vmem>>, vector<13x32xf32>
    tpu.vector_store %arg13[%c0, %c0_0], %0 {strides = array<i32>} : memref<13x32xf32, #tpu.memory_space<vmem>>, vector<13x32xf32>,
    %cst_1 = arith.constant 0.000000e+00 : f32
    %2 = vector.broadcast %cst_1 : f32 to vector<13x128xf32>
    %c0_2 = arith.constant 0 : index
    %c0_3 = arith.constant 0 : index
    %3 = vector.load %arg14[%c0_2, %c0_3] : memref<13x128xf32, #tpu.memory_space<vmem>>, vector<13x128xf32>
    tpu.vector_store %arg14[%c0_2, %c0_3], %2 {strides = array<i32>} : memref<13x128xf32, #tpu.memory_space<vmem>>, vector<13x128xf32>,
    %cst_4 = arith.constant 0.000000e+00 : f32
    %4 = vector.broadcast %cst_4 : f32 to vector<13x128xf32>
    %c0_5 = arith.constant 0 : index
    %c0_6 = arith.constant 0 : index
    %5 = vector.load %arg15[%c0_5, %c0_6] : memref<13x128xf32, #tpu.memory_space<vmem>>, vector<13x128xf32>
    tpu.vector_store %arg15[%c0_5, %c0_6], %4 {strides = array<i32>} : memref<13x128xf32, #tpu.memory_space<vmem>>, vector<13x128xf32>,
    %cst_7 = arith.constant 0.000000e+00 : f32
    %6 = vector.broadcast %cst_7 : f32 to vector<17x128xf32>
    %c0_8 = arith.constant 0 : index
    %c0_9 = arith.constant 0 : index
    %7 = vector.load %arg16[%c0_8, %c0_9] : memref<17x128xf32, #tpu.memory_space<vmem>>, vector<17x128xf32>
    tpu.vector_store %arg16[%c0_8, %c0_9], %6 {strides = array<i32>} : memref<17x128xf32, #tpu.memory_space<vmem>>, vector<17x128xf32>,
    %cst_10 = arith.constant 0.000000e+00 : f32
    %8 = vector.broadcast %cst_10 : f32 to vector<25x256xf32>
    %c0_11 = arith.constant 0 : index
    %c0_12 = arith.constant 0 : index
    %9 = vector.load %arg17[%c0_11, %c0_12] : memref<25x256xf32, #tpu.memory_space<vmem>>, vector<25x256xf32>
    tpu.vector_store %arg17[%c0_11, %c0_12], %8 {strides = array<i32>} : memref<25x256xf32, #tpu.memory_space<vmem>>, vector<25x256xf32>,
    %c0_13 = arith.constant 0 : index
    %c0_14 = arith.constant 0 : index
    %c0_15 = arith.constant 0 : index
    %10 = vector.load %arg1[%c0_13, %c0_14, %c0_15] : memref<1x4x32xf32, #tpu.memory_space<vmem>>, vector<1x4x32xf32>
    %11 = vector.shape_cast %10 : vector<1x4x32xf32> to vector<4x32xf32>
    %c8 = arith.constant 8 : index
    %c0_16 = arith.constant 0 : index
    %12 = vector.load %arg13[%c8, %c0_16] : memref<13x32xf32, #tpu.memory_space<vmem>>, vector<4x32xf32>
    tpu.vector_store %arg13[%c8, %c0_16], %11 {strides = array<i32>} : memref<13x32xf32, #tpu.memory_space<vmem>>, vector<4x32xf32>,
    %c0_17 = arith.constant 0 : index
    %c0_18 = arith.constant 0 : index
    %13 = vector.load %arg3[%c0_17, %c0_18] : memref<1x128xf32, #tpu.memory_space<vmem>>, vector<1x128xf32>
    %c7 = arith.constant 7 : index
    %c0_19 = arith.constant 0 : index
    %14 = vector.load %arg13[%c7, %c0_19] : memref<13x32xf32, #tpu.memory_space<vmem>>, vector<4x32xf32>
    %15 = arith.truncf %14 : vector<4x32xf32> to vector<4x32xbf16>
    %c0_20 = arith.constant 0 : index
    %c0_21 = arith.constant 0 : index
    %c0_22 = arith.constant 0 : index
    %16 = vector.load %arg2[%c0_20, %c0_21, %c0_22] : memref<3x32x128xbf16, #tpu.memory_space<vmem>>, vector<1x32x128xbf16>
    %17 = vector.shape_cast %16 : vector<1x32x128xbf16> to vector<32x128xbf16>
    %cst_23 = arith.constant dense<0.000000e+00> : vector<4x128xf32>
    %18 = tpu.matmul %15, %17, %cst_23 {dimension_numbers = #tpu.dot_dimension_numbers<[1], [0], [0], [1], [0, 0, 1, 1], [], []>} : vector<4x32xbf16>, vector<32x128xbf16>, vector<4x128xf32> -> vector<4x128xf32>
    %c8_24 = arith.constant 8 : index
    %c0_25 = arith.constant 0 : index
    %19 = vector.load %arg13[%c8_24, %c0_25] : memref<13x32xf32, #tpu.memory_space<vmem>>, vector<4x32xf32>
    %20 = arith.truncf %19 : vector<4x32xf32> to vector<4x32xbf16>
    %c1 = arith.constant 1 : index
    %c0_26 = arith.constant 0 : index
    %c0_27 = arith.constant 0 : index
    %21 = vector.load %arg2[%c1, %c0_26, %c0_27] : memref<3x32x128xbf16, #tpu.memory_space<vmem>>, vector<1x32x128xbf16>
    %22 = vector.shape_cast %21 : vector<1x32x128xbf16> to vector<32x128xbf16>
    %cst_28 = arith.constant dense<0.000000e+00> : vector<4x128xf32>
    %23 = tpu.matmul %20, %22, %cst_28 {dimension_numbers = #tpu.dot_dimension_numbers<[1], [0], [0], [1], [0, 0, 1, 1], [], []>} : vector<4x32xbf16>, vector<32x128xbf16>, vector<4x128xf32> -> vector<4x128xf32>
    %24 = arith.addf %18, %23 : vector<4x128xf32>
    %c9 = arith.constant 9 : index
    %c0_29 = arith.constant 0 : index
    %25 = vector.load %arg13[%c9, %c0_29] : memref<13x32xf32, #tpu.memory_space<vmem>>, vector<4x32xf32>
    %26 = arith.truncf %25 : vector<4x32xf32> to vector<4x32xbf16>
    %c2 = arith.constant 2 : index
    %c0_30 = arith.constant 0 : index
    %c0_31 = arith.constant 0 : index
    %27 = vector.load %arg2[%c2, %c0_30, %c0_31] : memref<3x32x128xbf16, #tpu.memory_space<vmem>>, vector<1x32x128xbf16>
    %28 = vector.shape_cast %27 : vector<1x32x128xbf16> to vector<32x128xbf16>
    %cst_32 = arith.constant dense<0.000000e+00> : vector<4x128xf32>
    %29 = tpu.matmul %26, %28, %cst_32 {dimension_numbers = #tpu.dot_dimension_numbers<[1], [0], [0], [1], [0, 0, 1, 1], [], []>} : vector<4x32xbf16>, vector<32x128xbf16>, vector<4x128xf32> -> vector<4x128xf32>
    %30 = arith.addf %24, %29 : vector<4x128xf32>
    %31 = vector.broadcast %13 : vector<1x128xf32> to vector<4x128xf32>
    %32 = arith.addf %30, %31 : vector<4x128xf32>
    %cst_33 = arith.constant 0.000000e+00 : f32
    %33 = vector.broadcast %cst_33 : f32 to vector<4x128xf32>
    %34 = arith.maximumf %32, %33 : vector<4x128xf32>
    %c8_34 = arith.constant 8 : index
    %c0_35 = arith.constant 0 : index
    %35 = vector.load %arg14[%c8_34, %c0_35] : memref<13x128xf32, #tpu.memory_space<vmem>>, vector<4x128xf32>
    tpu.vector_store %arg14[%c8_34, %c0_35], %34 {strides = array<i32>} : memref<13x128xf32, #tpu.memory_space<vmem>>, vector<4x128xf32>,
    %c8_36 = arith.constant 8 : index
    %c0_37 = arith.constant 0 : index
    %36 = vector.load %arg14[%c8_36, %c0_37] : memref<13x128xf32, #tpu.memory_space<vmem>>, vector<4x128xf32>
    %c0_38 = arith.constant 0 : index
    %c0_39 = arith.constant 0 : index
    %c0_40 = arith.constant 0 : index
    %37 = vector.load %arg5[%c0_38, %c0_39, %c0_40] : memref<4x1x128xf32, #tpu.memory_space<vmem>>, vector<1x1x128xf32>
    %38 = vector.shape_cast %37 : vector<1x1x128xf32> to vector<1x128xf32>
    %c7_41 = arith.constant 7 : index
    %c0_42 = arith.constant 0 : index
    %39 = vector.load %arg14[%c7_41, %c0_42] : memref<13x128xf32, #tpu.memory_space<vmem>>, vector<4x128xf32>
    %40 = arith.truncf %39 : vector<4x128xf32> to vector<4x128xbf16>
    %c0_43 = arith.constant 0 : index
    %c0_44 = arith.constant 0 : index
    %c0_45 = arith.constant 0 : index
    %c0_46 = arith.constant 0 : index
    %41 = vector.load %arg4[%c0_43, %c0_44, %c0_45, %c0_46] : memref<4x3x128x128xbf16, #tpu.memory_space<vmem>>, vector<1x1x128x128xbf16>
    %42 = vector.shape_cast %41 : vector<1x1x128x128xbf16> to vector<128x128xbf16>
    %cst_47 = arith.constant dense<0.000000e+00> : vector<4x128xf32>
    %43 = tpu.matmul %40, %42, %cst_47 {dimension_numbers = #tpu.dot_dimension_numbers<[1], [0], [0], [1], [0, 0, 1, 1], [], []>} : vector<4x128xbf16>, vector<128x128xbf16>, vector<4x128xf32> -> vector<4x128xf32>
    %c8_48 = arith.constant 8 : index
    %c0_49 = arith.constant 0 : index
    %44 = vector.load %arg14[%c8_48, %c0_49] : memref<13x128xf32, #tpu.memory_space<vmem>>, vector<4x128xf32>
    %45 = arith.truncf %44 : vector<4x128xf32> to vector<4x128xbf16>
    %c0_50 = arith.constant 0 : index
    %c1_51 = arith.constant 1 : index
    %c0_52 = arith.constant 0 : index
    %c0_53 = arith.constant 0 : index
    %46 = vector.load %arg4[%c0_50, %c1_51, %c0_52, %c0_53] : memref<4x3x128x128xbf16, #tpu.memory_space<vmem>>, vector<1x1x128x128xbf16>
    %47 = vector.shape_cast %46 : vector<1x1x128x128xbf16> to vector<128x128xbf16>
    %cst_54 = arith.constant dense<0.000000e+00> : vector<4x128xf32>
    %48 = tpu.matmul %45, %47, %cst_54 {dimension_numbers = #tpu.dot_dimension_numbers<[1], [0], [0], [1], [0, 0, 1, 1], [], []>} : vector<4x128xbf16>, vector<128x128xbf16>, vector<4x128xf32> -> vector<4x128xf32>
    %49 = arith.addf %43, %48 : vector<4x128xf32>
    %c9_55 = arith.constant 9 : index
    %c0_56 = arith.constant 0 : index
    %50 = vector.load %arg14[%c9_55, %c0_56] : memref<13x128xf32, #tpu.memory_space<vmem>>, vector<4x128xf32>
    %51 = arith.truncf %50 : vector<4x128xf32> to vector<4x128xbf16>
    %c0_57 = arith.constant 0 : index
    %c2_58 = arith.constant 2 : index
    %c0_59 = arith.constant 0 : index
    %c0_60 = arith.constant 0 : index
    %52 = vector.load %arg4[%c0_57, %c2_58, %c0_59, %c0_60] : memref<4x3x128x128xbf16, #tpu.memory_space<vmem>>, vector<1x1x128x128xbf16>
    %53 = vector.shape_cast %52 : vector<1x1x128x128xbf16> to vector<128x128xbf16>
    %cst_61 = arith.constant dense<0.000000e+00> : vector<4x128xf32>
    %54 = tpu.matmul %51, %53, %cst_61 {dimension_numbers = #tpu.dot_dimension_numbers<[1], [0], [0], [1], [0, 0, 1, 1], [], []>} : vector<4x128xbf16>, vector<128x128xbf16>, vector<4x128xf32> -> vector<4x128xf32>
    %55 = arith.addf %49, %54 : vector<4x128xf32>
    %56 = vector.broadcast %38 : vector<1x128xf32> to vector<4x128xf32>
    %57 = arith.addf %55, %56 : vector<4x128xf32>
    %cst_62 = arith.constant 0.000000e+00 : f32
    %58 = vector.broadcast %cst_62 : f32 to vector<4x128xf32>
    %59 = arith.maximumf %57, %58 : vector<4x128xf32>
    %c8_63 = arith.constant 8 : index
    %c0_64 = arith.constant 0 : index
    %60 = vector.load %arg15[%c8_63, %c0_64] : memref<13x128xf32, #tpu.memory_space<vmem>>, vector<4x128xf32>
    tpu.vector_store %arg15[%c8_63, %c0_64], %59 {strides = array<i32>} : memref<13x128xf32, #tpu.memory_space<vmem>>, vector<4x128xf32>,
    %c1_65 = arith.constant 1 : index
    %c0_66 = arith.constant 0 : index
    %c0_67 = arith.constant 0 : index
    %61 = vector.load %arg5[%c1_65, %c0_66, %c0_67] : memref<4x1x128xf32, #tpu.memory_space<vmem>>, vector<1x1x128xf32>
    %62 = vector.shape_cast %61 : vector<1x1x128xf32> to vector<1x128xf32>
    %c7_68 = arith.constant 7 : index
    %c0_69 = arith.constant 0 : index
    %63 = vector.load %arg15[%c7_68, %c0_69] : memref<13x128xf32, #tpu.memory_space<vmem>>, vector<4x128xf32>
    %64 = arith.truncf %63 : vector<4x128xf32> to vector<4x128xbf16>
    %c1_70 = arith.constant 1 : index
    %c0_71 = arith.constant 0 : index
    %c0_72 = arith.constant 0 : index
    %c0_73 = arith.constant 0 : index
    %65 = vector.load %arg4[%c1_70, %c0_71, %c0_72, %c0_73] : memref<4x3x128x128xbf16, #tpu.memory_space<vmem>>, vector<1x1x128x128xbf16>
    %66 = vector.shape_cast %65 : vector<1x1x128x128xbf16> to vector<128x128xbf16>
    %cst_74 = arith.constant dense<0.000000e+00> : vector<4x128xf32>
    %67 = tpu.matmul %64, %66, %cst_74 {dimension_numbers = #tpu.dot_dimension_numbers<[1], [0], [0], [1], [0, 0, 1, 1], [], []>} : vector<4x128xbf16>, vector<128x128xbf16>, vector<4x128xf32> -> vector<4x128xf32>
    %c8_75 = arith.constant 8 : index
    %c0_76 = arith.constant 0 : index
    %68 = vector.load %arg15[%c8_75, %c0_76] : memref<13x128xf32, #tpu.memory_space<vmem>>, vector<4x128xf32>
    %69 = arith.truncf %68 : vector<4x128xf32> to vector<4x128xbf16>
    %c1_77 = arith.constant 1 : index
    %c1_78 = arith.constant 1 : index
    %c0_79 = arith.constant 0 : index
    %c0_80 = arith.constant 0 : index
    %70 = vector.load %arg4[%c1_77, %c1_78, %c0_79, %c0_80] : memref<4x3x128x128xbf16, #tpu.memory_space<vmem>>, vector<1x1x128x128xbf16>
    %71 = vector.shape_cast %70 : vector<1x1x128x128xbf16> to vector<128x128xbf16>
    %cst_81 = arith.constant dense<0.000000e+00> : vector<4x128xf32>
    %72 = tpu.matmul %69, %71, %cst_81 {dimension_numbers = #tpu.dot_dimension_numbers<[1], [0], [0], [1], [0, 0, 1, 1], [], []>} : vector<4x128xbf16>, vector<128x128xbf16>, vector<4x128xf32> -> vector<4x128xf32>
    %73 = arith.addf %67, %72 : vector<4x128xf32>
    %c9_82 = arith.constant 9 : index
    %c0_83 = arith.constant 0 : index
    %74 = vector.load %arg15[%c9_82, %c0_83] : memref<13x128xf32, #tpu.memory_space<vmem>>, vector<4x128xf32>
    %75 = arith.truncf %74 : vector<4x128xf32> to vector<4x128xbf16>
    %c1_84 = arith.constant 1 : index
    %c2_85 = arith.constant 2 : index
    %c0_86 = arith.constant 0 : index
    %c0_87 = arith.constant 0 : index
    %76 = vector.load %arg4[%c1_84, %c2_85, %c0_86, %c0_87] : memref<4x3x128x128xbf16, #tpu.memory_space<vmem>>, vector<1x1x128x128xbf16>
    %77 = vector.shape_cast %76 : vector<1x1x128x128xbf16> to vector<128x128xbf16>
    %cst_88 = arith.constant dense<0.000000e+00> : vector<4x128xf32>
    %78 = tpu.matmul %75, %77, %cst_88 {dimension_numbers = #tpu.dot_dimension_numbers<[1], [0], [0], [1], [0, 0, 1, 1], [], []>} : vector<4x128xbf16>, vector<128x128xbf16>, vector<4x128xf32> -> vector<4x128xf32>
    %79 = arith.addf %73, %78 : vector<4x128xf32>
    %80 = vector.broadcast %62 : vector<1x128xf32> to vector<4x128xf32>
    %81 = arith.addf %79, %80 : vector<4x128xf32>
    %82 = arith.addf %81, %36 : vector<4x128xf32>
    %cst_89 = arith.constant 0.000000e+00 : f32
    %83 = vector.broadcast %cst_89 : f32 to vector<4x128xf32>
    %84 = arith.maximumf %82, %83 : vector<4x128xf32>
    %c8_90 = arith.constant 8 : index
    %c0_91 = arith.constant 0 : index
    %85 = vector.load %arg14[%c8_90, %c0_91] : memref<13x128xf32, #tpu.memory_space<vmem>>, vector<4x128xf32>
    tpu.vector_store %arg14[%c8_90, %c0_91], %84 {strides = array<i32>} : memref<13x128xf32, #tpu.memory_space<vmem>>, vector<4x128xf32>,
    %c8_92 = arith.constant 8 : index
    %c0_93 = arith.constant 0 : index
    %86 = vector.load %arg14[%c8_92, %c0_93] : memref<13x128xf32, #tpu.memory_space<vmem>>, vector<4x128xf32>
    %c2_94 = arith.constant 2 : index
    %c0_95 = arith.constant 0 : index
    %c0_96 = arith.constant 0 : index
    %87 = vector.load %arg5[%c2_94, %c0_95, %c0_96] : memref<4x1x128xf32, #tpu.memory_space<vmem>>, vector<1x1x128xf32>
    %88 = vector.shape_cast %87 : vector<1x1x128xf32> to vector<1x128xf32>
    %c7_97 = arith.constant 7 : index
    %c0_98 = arith.constant 0 : index
    %89 = vector.load %arg14[%c7_97, %c0_98] : memref<13x128xf32, #tpu.memory_space<vmem>>, vector<4x128xf32>
    %90 = arith.truncf %89 : vector<4x128xf32> to vector<4x128xbf16>
    %c2_99 = arith.constant 2 : index
    %c0_100 = arith.constant 0 : index
    %c0_101 = arith.constant 0 : index
    %c0_102 = arith.constant 0 : index
    %91 = vector.load %arg4[%c2_99, %c0_100, %c0_101, %c0_102] : memref<4x3x128x128xbf16, #tpu.memory_space<vmem>>, vector<1x1x128x128xbf16>
    %92 = vector.shape_cast %91 : vector<1x1x128x128xbf16> to vector<128x128xbf16>
    %cst_103 = arith.constant dense<0.000000e+00> : vector<4x128xf32>
    %93 = tpu.matmul %90, %92, %cst_103 {dimension_numbers = #tpu.dot_dimension_numbers<[1], [0], [0], [1], [0, 0, 1, 1], [], []>} : vector<4x128xbf16>, vector<128x128xbf16>, vector<4x128xf32> -> vector<4x128xf32>
    %c8_104 = arith.constant 8 : index
    %c0_105 = arith.constant 0 : index
    %94 = vector.load %arg14[%c8_104, %c0_105] : memref<13x128xf32, #tpu.memory_space<vmem>>, vector<4x128xf32>
    %95 = arith.truncf %94 : vector<4x128xf32> to vector<4x128xbf16>
    %c2_106 = arith.constant 2 : index
    %c1_107 = arith.constant 1 : index
    %c0_108 = arith.constant 0 : index
    %c0_109 = arith.constant 0 : index
    %96 = vector.load %arg4[%c2_106, %c1_107, %c0_108, %c0_109] : memref<4x3x128x128xbf16, #tpu.memory_space<vmem>>, vector<1x1x128x128xbf16>
    %97 = vector.shape_cast %96 : vector<1x1x128x128xbf16> to vector<128x128xbf16>
    %cst_110 = arith.constant dense<0.000000e+00> : vector<4x128xf32>
    %98 = tpu.matmul %95, %97, %cst_110 {dimension_numbers = #tpu.dot_dimension_numbers<[1], [0], [0], [1], [0, 0, 1, 1], [], []>} : vector<4x128xbf16>, vector<128x128xbf16>, vector<4x128xf32> -> vector<4x128xf32>
    %99 = arith.addf %93, %98 : vector<4x128xf32>
    %c9_111 = arith.constant 9 : index
    %c0_112 = arith.constant 0 : index
    %100 = vector.load %arg14[%c9_111, %c0_112] : memref<13x128xf32, #tpu.memory_space<vmem>>, vector<4x128xf32>
    %101 = arith.truncf %100 : vector<4x128xf32> to vector<4x128xbf16>
    %c2_113 = arith.constant 2 : index
    %c2_114 = arith.constant 2 : index
    %c0_115 = arith.constant 0 : index
    %c0_116 = arith.constant 0 : index
    %102 = vector.load %arg4[%c2_113, %c2_114, %c0_115, %c0_116] : memref<4x3x128x128xbf16, #tpu.memory_space<vmem>>, vector<1x1x128x128xbf16>
    %103 = vector.shape_cast %102 : vector<1x1x128x128xbf16> to vector<128x128xbf16>
    %cst_117 = arith.constant dense<0.000000e+00> : vector<4x128xf32>
    %104 = tpu.matmul %101, %103, %cst_117 {dimension_numbers = #tpu.dot_dimension_numbers<[1], [0], [0], [1], [0, 0, 1, 1], [], []>} : vector<4x128xbf16>, vector<128x128xbf16>, vector<4x128xf32> -> vector<4x128xf32>
    %105 = arith.addf %99, %104 : vector<4x128xf32>
    %106 = vector.broadcast %88 : vector<1x128xf32> to vector<4x128xf32>
    %107 = arith.addf %105, %106 : vector<4x128xf32>
    %cst_118 = arith.constant 0.000000e+00 : f32
    %108 = vector.broadcast %cst_118 : f32 to vector<4x128xf32>
    %109 = arith.maximumf %107, %108 : vector<4x128xf32>
    %c8_119 = arith.constant 8 : index
    %c0_120 = arith.constant 0 : index
    %110 = vector.load %arg15[%c8_119, %c0_120] : memref<13x128xf32, #tpu.memory_space<vmem>>, vector<4x128xf32>
    tpu.vector_store %arg15[%c8_119, %c0_120], %109 {strides = array<i32>} : memref<13x128xf32, #tpu.memory_space<vmem>>, vector<4x128xf32>,
    %c3 = arith.constant 3 : index
    %c0_121 = arith.constant 0 : index
    %c0_122 = arith.constant 0 : index
    %111 = vector.load %arg5[%c3, %c0_121, %c0_122] : memref<4x1x128xf32, #tpu.memory_space<vmem>>, vector<1x1x128xf32>
    %112 = vector.shape_cast %111 : vector<1x1x128xf32> to vector<1x128xf32>
    %c7_123 = arith.constant 7 : index
    %c0_124 = arith.constant 0 : index
    %113 = vector.load %arg15[%c7_123, %c0_124] : memref<13x128xf32, #tpu.memory_space<vmem>>, vector<4x128xf32>
    %114 = arith.truncf %113 : vector<4x128xf32> to vector<4x128xbf16>
    %c3_125 = arith.constant 3 : index
    %c0_126 = arith.constant 0 : index
    %c0_127 = arith.constant 0 : index
    %c0_128 = arith.constant 0 : index
    %115 = vector.load %arg4[%c3_125, %c0_126, %c0_127, %c0_128] : memref<4x3x128x128xbf16, #tpu.memory_space<vmem>>, vector<1x1x128x128xbf16>
    %116 = vector.shape_cast %115 : vector<1x1x128x128xbf16> to vector<128x128xbf16>
    %cst_129 = arith.constant dense<0.000000e+00> : vector<4x128xf32>
    %117 = tpu.matmul %114, %116, %cst_129 {dimension_numbers = #tpu.dot_dimension_numbers<[1], [0], [0], [1], [0, 0, 1, 1], [], []>} : vector<4x128xbf16>, vector<128x128xbf16>, vector<4x128xf32> -> vector<4x128xf32>
    %c8_130 = arith.constant 8 : index
    %c0_131 = arith.constant 0 : index
    %118 = vector.load %arg15[%c8_130, %c0_131] : memref<13x128xf32, #tpu.memory_space<vmem>>, vector<4x128xf32>
    %119 = arith.truncf %118 : vector<4x128xf32> to vector<4x128xbf16>
    %c3_132 = arith.constant 3 : index
    %c1_133 = arith.constant 1 : index
    %c0_134 = arith.constant 0 : index
    %c0_135 = arith.constant 0 : index
    %120 = vector.load %arg4[%c3_132, %c1_133, %c0_134, %c0_135] : memref<4x3x128x128xbf16, #tpu.memory_space<vmem>>, vector<1x1x128x128xbf16>
    %121 = vector.shape_cast %120 : vector<1x1x128x128xbf16> to vector<128x128xbf16>
    %cst_136 = arith.constant dense<0.000000e+00> : vector<4x128xf32>
    %122 = tpu.matmul %119, %121, %cst_136 {dimension_numbers = #tpu.dot_dimension_numbers<[1], [0], [0], [1], [0, 0, 1, 1], [], []>} : vector<4x128xbf16>, vector<128x128xbf16>, vector<4x128xf32> -> vector<4x128xf32>
    %123 = arith.addf %117, %122 : vector<4x128xf32>
    %c9_137 = arith.constant 9 : index
    %c0_138 = arith.constant 0 : index
    %124 = vector.load %arg15[%c9_137, %c0_138] : memref<13x128xf32, #tpu.memory_space<vmem>>, vector<4x128xf32>
    %125 = arith.truncf %124 : vector<4x128xf32> to vector<4x128xbf16>
    %c3_139 = arith.constant 3 : index
    %c2_140 = arith.constant 2 : index
    %c0_141 = arith.constant 0 : index
    %c0_142 = arith.constant 0 : index
    %126 = vector.load %arg4[%c3_139, %c2_140, %c0_141, %c0_142] : memref<4x3x128x128xbf16, #tpu.memory_space<vmem>>, vector<1x1x128x128xbf16>
    %127 = vector.shape_cast %126 : vector<1x1x128x128xbf16> to vector<128x128xbf16>
    %cst_143 = arith.constant dense<0.000000e+00> : vector<4x128xf32>
    %128 = tpu.matmul %125, %127, %cst_143 {dimension_numbers = #tpu.dot_dimension_numbers<[1], [0], [0], [1], [0, 0, 1, 1], [], []>} : vector<4x128xbf16>, vector<128x128xbf16>, vector<4x128xf32> -> vector<4x128xf32>
    %129 = arith.addf %123, %128 : vector<4x128xf32>
    %130 = vector.broadcast %112 : vector<1x128xf32> to vector<4x128xf32>
    %131 = arith.addf %129, %130 : vector<4x128xf32>
    %132 = arith.addf %131, %86 : vector<4x128xf32>
    %cst_144 = arith.constant 0.000000e+00 : f32
    %133 = vector.broadcast %cst_144 : f32 to vector<4x128xf32>
    %134 = arith.maximumf %132, %133 : vector<4x128xf32>
    %c8_145 = arith.constant 8 : index
    %c0_146 = arith.constant 0 : index
    %135 = vector.load %arg14[%c8_145, %c0_146] : memref<13x128xf32, #tpu.memory_space<vmem>>, vector<4x128xf32>
    tpu.vector_store %arg14[%c8_145, %c0_146], %134 {strides = array<i32>} : memref<13x128xf32, #tpu.memory_space<vmem>>, vector<4x128xf32>,
    %c0_147 = arith.constant 0 : index
    %c0_148 = arith.constant 0 : index
    %136 = vector.load %arg7[%c0_147, %c0_148] : memref<1x128xf32, #tpu.memory_space<vmem>>, vector<1x128xf32>
    %c7_149 = arith.constant 7 : index
    %c0_150 = arith.constant 0 : index
    %137 = vector.load %arg14[%c7_149, %c0_150] : memref<13x128xf32, #tpu.memory_space<vmem>>, vector<4x128xf32>
    %138 = arith.truncf %137 : vector<4x128xf32> to vector<4x128xbf16>
    %c0_151 = arith.constant 0 : index
    %c0_152 = arith.constant 0 : index
    %c0_153 = arith.constant 0 : index
    %c0_154 = arith.constant 0 : index
    %139 = vector.load %arg6[%c0_151, %c0_152, %c0_153, %c0_154] : memref<2x2x128x128xbf16, #tpu.memory_space<vmem>>, vector<1x1x128x128xbf16>
    %140 = vector.shape_cast %139 : vector<1x1x128x128xbf16> to vector<128x128xbf16>
    %cst_155 = arith.constant dense<0.000000e+00> : vector<4x128xf32>
    %141 = tpu.matmul %138, %140, %cst_155 {dimension_numbers = #tpu.dot_dimension_numbers<[1], [0], [0], [1], [0, 0, 1, 1], [], []>} : vector<4x128xbf16>, vector<128x128xbf16>, vector<4x128xf32> -> vector<4x128xf32>
    %c8_156 = arith.constant 8 : index
    %c0_157 = arith.constant 0 : index
    %142 = vector.load %arg14[%c8_156, %c0_157] : memref<13x128xf32, #tpu.memory_space<vmem>>, vector<4x128xf32>
    %143 = arith.truncf %142 : vector<4x128xf32> to vector<4x128xbf16>
    %c0_158 = arith.constant 0 : index
    %c1_159 = arith.constant 1 : index
    %c0_160 = arith.constant 0 : index
    %c0_161 = arith.constant 0 : index
    %144 = vector.load %arg6[%c0_158, %c1_159, %c0_160, %c0_161] : memref<2x2x128x128xbf16, #tpu.memory_space<vmem>>, vector<1x1x128x128xbf16>
    %145 = vector.shape_cast %144 : vector<1x1x128x128xbf16> to vector<128x128xbf16>
    %cst_162 = arith.constant dense<0.000000e+00> : vector<4x128xf32>
    %146 = tpu.matmul %143, %145, %cst_162 {dimension_numbers = #tpu.dot_dimension_numbers<[1], [0], [0], [1], [0, 0, 1, 1], [], []>} : vector<4x128xbf16>, vector<128x128xbf16>, vector<4x128xf32> -> vector<4x128xf32>
    %147 = arith.addf %141, %146 : vector<4x128xf32>
    %148 = vector.broadcast %136 : vector<1x128xf32> to vector<4x128xf32>
    %149 = arith.addf %147, %148 : vector<4x128xf32>
    %c8_163 = arith.constant 8 : index
    %c0_164 = arith.constant 0 : index
    %150 = vector.load %arg14[%c8_163, %c0_164] : memref<13x128xf32, #tpu.memory_space<vmem>>, vector<4x128xf32>
    %151 = arith.truncf %150 : vector<4x128xf32> to vector<4x128xbf16>
    %c1_165 = arith.constant 1 : index
    %c0_166 = arith.constant 0 : index
    %c0_167 = arith.constant 0 : index
    %c0_168 = arith.constant 0 : index
    %152 = vector.load %arg6[%c1_165, %c0_166, %c0_167, %c0_168] : memref<2x2x128x128xbf16, #tpu.memory_space<vmem>>, vector<1x1x128x128xbf16>
    %153 = vector.shape_cast %152 : vector<1x1x128x128xbf16> to vector<128x128xbf16>
    %cst_169 = arith.constant dense<0.000000e+00> : vector<4x128xf32>
    %154 = tpu.matmul %151, %153, %cst_169 {dimension_numbers = #tpu.dot_dimension_numbers<[1], [0], [0], [1], [0, 0, 1, 1], [], []>} : vector<4x128xbf16>, vector<128x128xbf16>, vector<4x128xf32> -> vector<4x128xf32>
    %c9_170 = arith.constant 9 : index
    %c0_171 = arith.constant 0 : index
    %155 = vector.load %arg14[%c9_170, %c0_171] : memref<13x128xf32, #tpu.memory_space<vmem>>, vector<4x128xf32>
    %156 = arith.truncf %155 : vector<4x128xf32> to vector<4x128xbf16>
    %c1_172 = arith.constant 1 : index
    %c1_173 = arith.constant 1 : index
    %c0_174 = arith.constant 0 : index
    %c0_175 = arith.constant 0 : index
    %157 = vector.load %arg6[%c1_172, %c1_173, %c0_174, %c0_175] : memref<2x2x128x128xbf16, #tpu.memory_space<vmem>>, vector<1x1x128x128xbf16>
    %158 = vector.shape_cast %157 : vector<1x1x128x128xbf16> to vector<128x128xbf16>
    %cst_176 = arith.constant dense<0.000000e+00> : vector<4x128xf32>
    %159 = tpu.matmul %156, %158, %cst_176 {dimension_numbers = #tpu.dot_dimension_numbers<[1], [0], [0], [1], [0, 0, 1, 1], [], []>} : vector<4x128xbf16>, vector<128x128xbf16>, vector<4x128xf32> -> vector<4x128xf32>
    %160 = arith.addf %154, %159 : vector<4x128xf32>
    %161 = vector.broadcast %136 : vector<1x128xf32> to vector<4x128xf32>
    %162 = arith.addf %160, %161 : vector<4x128xf32>
    %163 = tpu.iota {dimensions = array<i32: 0>} : vector<8x4xi32>
    %164 = tpu.iota {dimensions = array<i32: 1>} : vector<8x4xi32>
    %c2_i32 = arith.constant 2 : i32
    %165 = vector.broadcast %c2_i32 : i32 to vector<8x4xi32>
    %166 = arith.muli %165, %164 : vector<8x4xi32>
    %167 = arith.cmpi eq, %163, %166 : vector<8x4xi32>
    %168 = arith.extui %167 : vector<8x4xi1> to vector<8x4xi32>
    %169 = arith.sitofp %168 : vector<8x4xi32> to vector<8x4xf32>
    %c2_i32_177 = arith.constant 2 : i32
    %170 = vector.broadcast %c2_i32_177 : i32 to vector<8x4xi32>
    %171 = arith.muli %170, %164 : vector<8x4xi32>
    %c1_i32 = arith.constant 1 : i32
    %172 = vector.broadcast %c1_i32 : i32 to vector<8x4xi32>
    %173 = arith.addi %171, %172 : vector<8x4xi32>
    %174 = arith.cmpi eq, %163, %173 : vector<8x4xi32>
    %175 = arith.extui %174 : vector<8x4xi1> to vector<8x4xi32>
    %176 = arith.sitofp %175 : vector<8x4xi32> to vector<8x4xf32>
    %cst_178 = arith.constant dense<0.000000e+00> : vector<8x128xf32>
    %177 = tpu.matmul %169, %149, %cst_178 {dimension_numbers = #tpu.dot_dimension_numbers<[1], [0], [0], [1], [0, 0, 1, 1], [], []>} : vector<8x4xf32>, vector<4x128xf32>, vector<8x128xf32> -> vector<8x128xf32>
    %cst_179 = arith.constant dense<0.000000e+00> : vector<8x128xf32>
    %178 = tpu.matmul %176, %162, %cst_179 {dimension_numbers = #tpu.dot_dimension_numbers<[1], [0], [0], [1], [0, 0, 1, 1], [], []>} : vector<8x4xf32>, vector<4x128xf32>, vector<8x128xf32> -> vector<8x128xf32>
    %179 = arith.addf %177, %178 : vector<8x128xf32>
    %cst_180 = arith.constant 0.000000e+00 : f32
    %180 = vector.broadcast %cst_180 : f32 to vector<8x128xf32>
    %181 = arith.maximumf %179, %180 : vector<8x128xf32>
    %c8_181 = arith.constant 8 : index
    %c0_182 = arith.constant 0 : index
    %182 = vector.load %arg16[%c8_181, %c0_182] : memref<17x128xf32, #tpu.memory_space<vmem>>, vector<8x128xf32>
    tpu.vector_store %arg16[%c8_181, %c0_182], %181 {strides = array<i32>} : memref<17x128xf32, #tpu.memory_space<vmem>>, vector<8x128xf32>,
    %c0_183 = arith.constant 0 : index
    %c0_184 = arith.constant 0 : index
    %183 = vector.load %arg9[%c0_183, %c0_184] : memref<1x256xf32, #tpu.memory_space<vmem>>, vector<1x256xf32>
    %c7_185 = arith.constant 7 : index
    %c0_186 = arith.constant 0 : index
    %184 = vector.load %arg16[%c7_185, %c0_186] : memref<17x128xf32, #tpu.memory_space<vmem>>, vector<8x128xf32>
    %185 = arith.truncf %184 : vector<8x128xf32> to vector<8x128xbf16>
    %c0_187 = arith.constant 0 : index
    %c0_188 = arith.constant 0 : index
    %c0_189 = arith.constant 0 : index
    %c0_190 = arith.constant 0 : index
    %186 = vector.load %arg8[%c0_187, %c0_188, %c0_189, %c0_190] : memref<2x2x128x256xbf16, #tpu.memory_space<vmem>>, vector<1x1x128x256xbf16>
    %187 = vector.shape_cast %186 : vector<1x1x128x256xbf16> to vector<128x256xbf16>
    %cst_191 = arith.constant dense<0.000000e+00> : vector<8x256xf32>
    %188 = tpu.matmul %185, %187, %cst_191 {dimension_numbers = #tpu.dot_dimension_numbers<[1], [0], [0], [1], [0, 0, 1, 1], [], []>} : vector<8x128xbf16>, vector<128x256xbf16>, vector<8x256xf32> -> vector<8x256xf32>
    %c8_192 = arith.constant 8 : index
    %c0_193 = arith.constant 0 : index
    %189 = vector.load %arg16[%c8_192, %c0_193] : memref<17x128xf32, #tpu.memory_space<vmem>>, vector<8x128xf32>
    %190 = arith.truncf %189 : vector<8x128xf32> to vector<8x128xbf16>
    %c0_194 = arith.constant 0 : index
    %c1_195 = arith.constant 1 : index
    %c0_196 = arith.constant 0 : index
    %c0_197 = arith.constant 0 : index
    %191 = vector.load %arg8[%c0_194, %c1_195, %c0_196, %c0_197] : memref<2x2x128x256xbf16, #tpu.memory_space<vmem>>, vector<1x1x128x256xbf16>
    %192 = vector.shape_cast %191 : vector<1x1x128x256xbf16> to vector<128x256xbf16>
    %cst_198 = arith.constant dense<0.000000e+00> : vector<8x256xf32>
    %193 = tpu.matmul %190, %192, %cst_198 {dimension_numbers = #tpu.dot_dimension_numbers<[1], [0], [0], [1], [0, 0, 1, 1], [], []>} : vector<8x128xbf16>, vector<128x256xbf16>, vector<8x256xf32> -> vector<8x256xf32>
    %194 = arith.addf %188, %193 : vector<8x256xf32>
    %195 = vector.broadcast %183 : vector<1x256xf32> to vector<8x256xf32>
    %196 = arith.addf %194, %195 : vector<8x256xf32>
    %c8_199 = arith.constant 8 : index
    %c0_200 = arith.constant 0 : index
    %197 = vector.load %arg16[%c8_199, %c0_200] : memref<17x128xf32, #tpu.memory_space<vmem>>, vector<8x128xf32>
    %198 = arith.truncf %197 : vector<8x128xf32> to vector<8x128xbf16>
    %c1_201 = arith.constant 1 : index
    %c0_202 = arith.constant 0 : index
    %c0_203 = arith.constant 0 : index
    %c0_204 = arith.constant 0 : index
    %199 = vector.load %arg8[%c1_201, %c0_202, %c0_203, %c0_204] : memref<2x2x128x256xbf16, #tpu.memory_space<vmem>>, vector<1x1x128x256xbf16>
    %200 = vector.shape_cast %199 : vector<1x1x128x256xbf16> to vector<128x256xbf16>
    %cst_205 = arith.constant dense<0.000000e+00> : vector<8x256xf32>
    %201 = tpu.matmul %198, %200, %cst_205 {dimension_numbers = #tpu.dot_dimension_numbers<[1], [0], [0], [1], [0, 0, 1, 1], [], []>} : vector<8x128xbf16>, vector<128x256xbf16>, vector<8x256xf32> -> vector<8x256xf32>
    %c9_206 = arith.constant 9 : index
    %c0_207 = arith.constant 0 : index
    %202 = vector.load %arg16[%c9_206, %c0_207] : memref<17x128xf32, #tpu.memory_space<vmem>>, vector<8x128xf32>
    %203 = arith.truncf %202 : vector<8x128xf32> to vector<8x128xbf16>
    %c1_208 = arith.constant 1 : index
    %c1_209 = arith.constant 1 : index
    %c0_210 = arith.constant 0 : index
    %c0_211 = arith.constant 0 : index
    %204 = vector.load %arg8[%c1_208, %c1_209, %c0_210, %c0_211] : memref<2x2x128x256xbf16, #tpu.memory_space<vmem>>, vector<1x1x128x256xbf16>
    %205 = vector.shape_cast %204 : vector<1x1x128x256xbf16> to vector<128x256xbf16>
    %cst_212 = arith.constant dense<0.000000e+00> : vector<8x256xf32>
    %206 = tpu.matmul %203, %205, %cst_212 {dimension_numbers = #tpu.dot_dimension_numbers<[1], [0], [0], [1], [0, 0, 1, 1], [], []>} : vector<8x128xbf16>, vector<128x256xbf16>, vector<8x256xf32> -> vector<8x256xf32>
    %207 = arith.addf %201, %206 : vector<8x256xf32>
    %208 = vector.broadcast %183 : vector<1x256xf32> to vector<8x256xf32>
    %209 = arith.addf %207, %208 : vector<8x256xf32>
    %210 = tpu.iota {dimensions = array<i32: 0>} : vector<16x8xi32>
    %211 = tpu.iota {dimensions = array<i32: 1>} : vector<16x8xi32>
    %c2_i32_213 = arith.constant 2 : i32
    %212 = vector.broadcast %c2_i32_213 : i32 to vector<16x8xi32>
    %213 = arith.muli %212, %211 : vector<16x8xi32>
    %214 = arith.cmpi eq, %210, %213 : vector<16x8xi32>
    %215 = arith.extui %214 : vector<16x8xi1> to vector<16x8xi32>
    %216 = arith.sitofp %215 : vector<16x8xi32> to vector<16x8xf32>
    %c2_i32_214 = arith.constant 2 : i32
    %217 = vector.broadcast %c2_i32_214 : i32 to vector<16x8xi32>
    %218 = arith.muli %217, %211 : vector<16x8xi32>
    %c1_i32_215 = arith.constant 1 : i32
    %219 = vector.broadcast %c1_i32_215 : i32 to vector<16x8xi32>
    %220 = arith.addi %218, %219 : vector<16x8xi32>
    %221 = arith.cmpi eq, %210, %220 : vector<16x8xi32>
    %222 = arith.extui %221 : vector<16x8xi1> to vector<16x8xi32>
    %223 = arith.sitofp %222 : vector<16x8xi32> to vector<16x8xf32>
    %cst_216 = arith.constant dense<0.000000e+00> : vector<16x256xf32>
    %224 = tpu.matmul %216, %196, %cst_216 {dimension_numbers = #tpu.dot_dimension_numbers<[1], [0], [0], [1], [0, 0, 1, 1], [], []>} : vector<16x8xf32>, vector<8x256xf32>, vector<16x256xf32> -> vector<16x256xf32>
    %cst_217 = arith.constant dense<0.000000e+00> : vector<16x256xf32>
    %225 = tpu.matmul %223, %209, %cst_217 {dimension_numbers = #tpu.dot_dimension_numbers<[1], [0], [0], [1], [0, 0, 1, 1], [], []>} : vector<16x8xf32>, vector<8x256xf32>, vector<16x256xf32> -> vector<16x256xf32>
    %226 = arith.addf %224, %225 : vector<16x256xf32>
    %cst_218 = arith.constant 0.000000e+00 : f32
    %227 = vector.broadcast %cst_218 : f32 to vector<16x256xf32>
    %228 = arith.maximumf %226, %227 : vector<16x256xf32>
    %c8_219 = arith.constant 8 : index
    %c0_220 = arith.constant 0 : index
    %229 = vector.load %arg17[%c8_219, %c0_220] : memref<25x256xf32, #tpu.memory_space<vmem>>, vector<16x256xf32>
    tpu.vector_store %arg17[%c8_219, %c0_220], %228 {strides = array<i32>} : memref<25x256xf32, #tpu.memory_space<vmem>>, vector<16x256xf32>,
    %c0_221 = arith.constant 0 : index
    %c0_222 = arith.constant 0 : index
    %230 = vector.load %arg11[%c0_221, %c0_222] : memref<1x96xf32, #tpu.memory_space<vmem>>, vector<1x96xf32>
    %c7_223 = arith.constant 7 : index
    %c0_224 = arith.constant 0 : index
    %231 = vector.load %arg17[%c7_223, %c0_224] : memref<25x256xf32, #tpu.memory_space<vmem>>, vector<16x256xf32>
    %232 = arith.truncf %231 : vector<16x256xf32> to vector<16x256xbf16>
    %c0_225 = arith.constant 0 : index
    %c0_226 = arith.constant 0 : index
    %c0_227 = arith.constant 0 : index
    %c0_228 = arith.constant 0 : index
    %233 = vector.load %arg10[%c0_225, %c0_226, %c0_227, %c0_228] : memref<2x2x256x96xbf16, #tpu.memory_space<vmem>>, vector<1x1x256x96xbf16>
    %234 = vector.shape_cast %233 : vector<1x1x256x96xbf16> to vector<256x96xbf16>
    %cst_229 = arith.constant dense<0.000000e+00> : vector<16x96xf32>
    %235 = tpu.matmul %232, %234, %cst_229 {dimension_numbers = #tpu.dot_dimension_numbers<[1], [0], [0], [1], [0, 0, 1, 1], [], []>} : vector<16x256xbf16>, vector<256x96xbf16>, vector<16x96xf32> -> vector<16x96xf32>
    %c8_230 = arith.constant 8 : index
    %c0_231 = arith.constant 0 : index
    %236 = vector.load %arg17[%c8_230, %c0_231] : memref<25x256xf32, #tpu.memory_space<vmem>>, vector<16x256xf32>
    %237 = arith.truncf %236 : vector<16x256xf32> to vector<16x256xbf16>
    %c0_232 = arith.constant 0 : index
    %c1_233 = arith.constant 1 : index
    %c0_234 = arith.constant 0 : index
    %c0_235 = arith.constant 0 : index
    %238 = vector.load %arg10[%c0_232, %c1_233, %c0_234, %c0_235] : memref<2x2x256x96xbf16, #tpu.memory_space<vmem>>, vector<1x1x256x96xbf16>
    %239 = vector.shape_cast %238 : vector<1x1x256x96xbf16> to vector<256x96xbf16>
    %cst_236 = arith.constant dense<0.000000e+00> : vector<16x96xf32>
    %240 = tpu.matmul %237, %239, %cst_236 {dimension_numbers = #tpu.dot_dimension_numbers<[1], [0], [0], [1], [0, 0, 1, 1], [], []>} : vector<16x256xbf16>, vector<256x96xbf16>, vector<16x96xf32> -> vector<16x96xf32>
    %241 = arith.addf %235, %240 : vector<16x96xf32>
    %242 = vector.broadcast %230 : vector<1x96xf32> to vector<16x96xf32>
    %243 = arith.addf %241, %242 : vector<16x96xf32>
    %c8_237 = arith.constant 8 : index
    %c0_238 = arith.constant 0 : index
    %244 = vector.load %arg17[%c8_237, %c0_238] : memref<25x256xf32, #tpu.memory_space<vmem>>, vector<16x256xf32>
    %245 = arith.truncf %244 : vector<16x256xf32> to vector<16x256xbf16>
    %c1_239 = arith.constant 1 : index
    %c0_240 = arith.constant 0 : index
    %c0_241 = arith.constant 0 : index
    %c0_242 = arith.constant 0 : index
    %246 = vector.load %arg10[%c1_239, %c0_240, %c0_241, %c0_242] : memref<2x2x256x96xbf16, #tpu.memory_space<vmem>>, vector<1x1x256x96xbf16>
    %247 = vector.shape_cast %246 : vector<1x1x256x96xbf16> to vector<256x96xbf16>
    %cst_243 = arith.constant dense<0.000000e+00> : vector<16x96xf32>
    %248 = tpu.matmul %245, %247, %cst_243 {dimension_numbers = #tpu.dot_dimension_numbers<[1], [0], [0], [1], [0, 0, 1, 1], [], []>} : vector<16x256xbf16>, vector<256x96xbf16>, vector<16x96xf32> -> vector<16x96xf32>
    %c9_244 = arith.constant 9 : index
    %c0_245 = arith.constant 0 : index
    %249 = vector.load %arg17[%c9_244, %c0_245] : memref<25x256xf32, #tpu.memory_space<vmem>>, vector<16x256xf32>
    %250 = arith.truncf %249 : vector<16x256xf32> to vector<16x256xbf16>
    %c1_246 = arith.constant 1 : index
    %c1_247 = arith.constant 1 : index
    %c0_248 = arith.constant 0 : index
    %c0_249 = arith.constant 0 : index
    %251 = vector.load %arg10[%c1_246, %c1_247, %c0_248, %c0_249] : memref<2x2x256x96xbf16, #tpu.memory_space<vmem>>, vector<1x1x256x96xbf16>
    %252 = vector.shape_cast %251 : vector<1x1x256x96xbf16> to vector<256x96xbf16>
    %cst_250 = arith.constant dense<0.000000e+00> : vector<16x96xf32>
    %253 = tpu.matmul %250, %252, %cst_250 {dimension_numbers = #tpu.dot_dimension_numbers<[1], [0], [0], [1], [0, 0, 1, 1], [], []>} : vector<16x256xbf16>, vector<256x96xbf16>, vector<16x96xf32> -> vector<16x96xf32>
    %254 = arith.addf %248, %253 : vector<16x96xf32>
    %255 = vector.broadcast %230 : vector<1x96xf32> to vector<16x96xf32>
    %256 = arith.addf %254, %255 : vector<16x96xf32>
    %257 = tpu.iota {dimensions = array<i32: 0>} : vector<32x16xi32>
    %258 = tpu.iota {dimensions = array<i32: 1>} : vector<32x16xi32>
    %c2_i32_251 = arith.constant 2 : i32
    %259 = vector.broadcast %c2_i32_251 : i32 to vector<32x16xi32>
    %260 = arith.muli %259, %258 : vector<32x16xi32>
    %261 = arith.cmpi eq, %257, %260 : vector<32x16xi32>
    %262 = arith.extui %261 : vector<32x16xi1> to vector<32x16xi32>
    %263 = arith.sitofp %262 : vector<32x16xi32> to vector<32x16xf32>
    %c2_i32_252 = arith.constant 2 : i32
    %264 = vector.broadcast %c2_i32_252 : i32 to vector<32x16xi32>
    %265 = arith.muli %264, %258 : vector<32x16xi32>
    %c1_i32_253 = arith.constant 1 : i32
    %266 = vector.broadcast %c1_i32_253 : i32 to vector<32x16xi32>
    %267 = arith.addi %265, %266 : vector<32x16xi32>
    %268 = arith.cmpi eq, %257, %267 : vector<32x16xi32>
    %269 = arith.extui %268 : vector<32x16xi1> to vector<32x16xi32>
    %270 = arith.sitofp %269 : vector<32x16xi32> to vector<32x16xf32>
    %cst_254 = arith.constant dense<0.000000e+00> : vector<32x96xf32>
    %271 = tpu.matmul %263, %243, %cst_254 {dimension_numbers = #tpu.dot_dimension_numbers<[1], [0], [0], [1], [0, 0, 1, 1], [], []>} : vector<32x16xf32>, vector<16x96xf32>, vector<32x96xf32> -> vector<32x96xf32>
    %cst_255 = arith.constant dense<0.000000e+00> : vector<32x96xf32>
    %272 = tpu.matmul %270, %256, %cst_255 {dimension_numbers = #tpu.dot_dimension_numbers<[1], [0], [0], [1], [0, 0, 1, 1], [], []>} : vector<32x16xf32>, vector<16x96xf32>, vector<32x96xf32> -> vector<32x96xf32>
    %273 = arith.addf %271, %272 : vector<32x96xf32>
    %c0_256 = arith.constant 0 : index
    %c0_257 = arith.constant 0 : index
    %c0_258 = arith.constant 0 : index
    %274 = vector.load %arg12[%c0_256, %c0_257, %c0_258] : memref<1x32x96xf32, #tpu.memory_space<vmem>>, vector<1x32x96xf32>
    %275 = vector.shape_cast %274 : vector<1x32x96xf32> to vector<32x96xf32>
    %276 = vector.shape_cast %273 : vector<32x96xf32> to vector<1x32x96xf32>
    tpu.vector_store %arg12[%c0_256, %c0_257, %c0_258], %276 {strides = array<i32>} : memref<1x32x96xf32, #tpu.memory_space<vmem>>, vector<1x32x96xf32>,
    return
  }
  func.func @transform_0(%arg0: i32) -> (i32, i32, i32) {
    %c0_i32 = arith.constant 0 : i32
    %c0_i32_0 = arith.constant 0 : i32
    %c0_i32_1 = arith.constant 0 : i32
    return %arg0, %c0_i32, %c0_i32_0 : i32, i32, i32
  }
  func.func @transform_1(%arg0: i32) -> (i32, i32, i32) {
    %c0_i32 = arith.constant 0 : i32
    %c0_i32_0 = arith.constant 0 : i32
    %c0_i32_1 = arith.constant 0 : i32
    %c0_i32_2 = arith.constant 0 : i32
    return %c0_i32, %c0_i32_0, %c0_i32_1 : i32, i32, i32
  }
  func.func @transform_2(%arg0: i32) -> (i32, i32) {
    %c0_i32 = arith.constant 0 : i32
    %c0_i32_0 = arith.constant 0 : i32
    %c0_i32_1 = arith.constant 0 : i32
    return %c0_i32, %c0_i32_0 : i32, i32
  }
  func.func @transform_3(%arg0: i32) -> (i32, i32, i32, i32) {
    %c0_i32 = arith.constant 0 : i32
    %c0_i32_0 = arith.constant 0 : i32
    %c0_i32_1 = arith.constant 0 : i32
    %c0_i32_2 = arith.constant 0 : i32
    %c0_i32_3 = arith.constant 0 : i32
    return %c0_i32, %c0_i32_0, %c0_i32_1, %c0_i32_2 : i32, i32, i32, i32
  }
  func.func @transform_4(%arg0: i32) -> (i32, i32, i32) {
    %c0_i32 = arith.constant 0 : i32
    %c0_i32_0 = arith.constant 0 : i32
    %c0_i32_1 = arith.constant 0 : i32
    %c0_i32_2 = arith.constant 0 : i32
    return %c0_i32, %c0_i32_0, %c0_i32_1 : i32, i32, i32
  }
  func.func @transform_5(%arg0: i32) -> (i32, i32, i32, i32) {
    %c0_i32 = arith.constant 0 : i32
    %c0_i32_0 = arith.constant 0 : i32
    %c0_i32_1 = arith.constant 0 : i32
    %c0_i32_2 = arith.constant 0 : i32
    %c0_i32_3 = arith.constant 0 : i32
    return %c0_i32, %c0_i32_0, %c0_i32_1, %c0_i32_2 : i32, i32, i32, i32
  }
  func.func @transform_6(%arg0: i32) -> (i32, i32) {
    %c0_i32 = arith.constant 0 : i32
    %c0_i32_0 = arith.constant 0 : i32
    %c0_i32_1 = arith.constant 0 : i32
    return %c0_i32, %c0_i32_0 : i32, i32
  }
  func.func @transform_7(%arg0: i32) -> (i32, i32, i32, i32) {
    %c0_i32 = arith.constant 0 : i32
    %c0_i32_0 = arith.constant 0 : i32
    %c0_i32_1 = arith.constant 0 : i32
    %c0_i32_2 = arith.constant 0 : i32
    %c0_i32_3 = arith.constant 0 : i32
    return %c0_i32, %c0_i32_0, %c0_i32_1, %c0_i32_2 : i32, i32, i32, i32
  }
  func.func @transform_8(%arg0: i32) -> (i32, i32) {
    %c0_i32 = arith.constant 0 : i32
    %c0_i32_0 = arith.constant 0 : i32
    %c0_i32_1 = arith.constant 0 : i32
    return %c0_i32, %c0_i32_0 : i32, i32
  }
  func.func @transform_9(%arg0: i32) -> (i32, i32, i32, i32) {
    %c0_i32 = arith.constant 0 : i32
    %c0_i32_0 = arith.constant 0 : i32
    %c0_i32_1 = arith.constant 0 : i32
    %c0_i32_2 = arith.constant 0 : i32
    %c0_i32_3 = arith.constant 0 : i32
    return %c0_i32, %c0_i32_0, %c0_i32_1, %c0_i32_2 : i32, i32, i32, i32
  }
  func.func @transform_10(%arg0: i32) -> (i32, i32) {
    %c0_i32 = arith.constant 0 : i32
    %c0_i32_0 = arith.constant 0 : i32
    %c0_i32_1 = arith.constant 0 : i32
    return %c0_i32, %c0_i32_0 : i32, i32
  }
  func.func @transform_11(%arg0: i32) -> (i32, i32, i32) {
    %c0_i32 = arith.constant 0 : i32
    %c0_i32_0 = arith.constant 0 : i32
    %c0_i32_1 = arith.constant 0 : i32
    return %arg0, %c0_i32, %c0_i32_0 : i32, i32, i32
  }
}

</mosaic_0001>

<llo_original>
// kernel: decoder_forward.1
$region0: #{decoder_forward.1}
  #allocation0 [shape = 'u32[]', space=smem, size = 0x4, offset = 0x4, fixed_abs, tag = 'smem constant byte address 0x4 - core index']
  #allocation1 [shape = 'u32[72,128]{1,0:T(1,128)}', space=vmem, size = 0x9000, scoped, tag = 'internal scratch']
  #allocation2 [shape = 'f32[13,32]{1,0:T(8,128)}', space=vmem, size = 0x2000, scoped, tag = 'scratch operand']
  #allocation3 [shape = 'f32[13,128]{1,0:T(8,128)}', space=vmem, size = 0x2000, scoped, tag = 'scratch operand']
  #allocation4 [shape = 'f32[13,128]{1,0:T(8,128)}', space=vmem, size = 0x2000, scoped, tag = 'scratch operand']
  #allocation5 [shape = 'f32[17,128]{1,0:T(8,128)}', space=vmem, size = 0x3000, scoped, tag = 'scratch operand']
  #allocation6 [shape = 'f32[25,256]{1,0:T(8,128)}', space=vmem, size = 0x8000, scoped, tag = 'scratch operand']
  %s0 = inlined_call_operand.vmem [shape: f32[2,4,32], index: 0, kind: input, shape index: {}]
  %s1 = inlined_call_operand.vmem [shape: bf16[3,32,128], index: 1, kind: input, shape index: {}]
  %s2 = inlined_call_operand.vmem [shape: f32[1,128], index: 2, kind: input, shape index: {}]
  %s3 = inlined_call_operand.vmem [shape: bf16[4,3,128,128], index: 3, kind: input, shape index: {}]
  %s4 = inlined_call_operand.vmem [shape: f32[4,1,128], index: 4, kind: input, shape index: {}]
  %s5 = inlined_call_operand.hbm [shape: bf16[2,2,128,128], index: 5, kind: input, shape index: {}]
  %s6 = inlined_call_operand.vmem [shape: f32[1,128], index: 6, kind: input, shape index: {}]
  %s7 = inlined_call_operand.hbm [shape: bf16[2,2,128,256], index: 7, kind: input, shape index: {}]
  %s8 = inlined_call_operand.vmem [shape: f32[1,256], index: 8, kind: input, shape index: {}]
  %s9 = inlined_call_operand.vmem [shape: bf16[2,2,256,96], index: 9, kind: input, shape index: {}]
  %s10 = inlined_call_operand.vmem [shape: f32[1,96], index: 10, kind: input, shape index: {}]
  %s11 = inlined_call_operand.vmem [shape: f32[2,32,96], index: 11, kind: output, shape index: {}]
  %s12 = sld [smem:[#allocation0]]
  $region85: #{decoder_forward.1} parent=0
    _
  %s14 = ssub.s32 1, %s12
  %s15 = scalar_select 0, %s14, %s12
  $region1: #{decoder_forward.1} parent=0
    #allocation7 [shape = 'u8[131072]{0}', space=vmem, size = 0x20000, scoped, tag = 'input window, operand 5, single buffered']
    #allocation8 [shape = 's32[2]{0}', space=sflag, size = 0x8, scoped, tag = 'scoped memory for decoder_forward.1']
    #allocation9 [shape = 'u8[262144]{0}', space=vmem, size = 0x40000, scoped, tag = 'input window, operand 7, single buffered']
    #allocation10 [shape = 's32[1]{0}', space=sflag, size = 0x4, scoped, tag = 'scoped memory for decoder_forward.1']
    %16 = vsyncpa [#allocation8], 0
    %17 = vsyncpa [#allocation10], 0
    loop: start=0, step=1, limit=4
    $region2: #{decoder_forward.1} parent=1 // loop_pre_header
      _
    $region3: #{decoder_forward.1} parent=1 // loop_header
      %s19 = sphi 0, %s23
      %p20 = scmp.ge.s32.totalorder %s19, 4
      %s29 = sphi 0, %s31
      %s32 = sphi 0, %s29
      %s33 = sphi 0, %s32
      %s49 = sphi 0, %s33
      %s53 = sphi 0, %s53
      %s55 = sphi 0, %s53
      %s56 = sphi 0, %s55
      %s70 = sphi 0, %s56
      %s74 = sphi 0, %s74
      %s76 = sphi 0, %s74
      %s77 = sphi 0, %s76
      %s91 = sphi 0, %s77
      %s95 = sphi 0, %s95
      %s97 = sphi 0, %s95
      %s98 = sphi 0, %s97
      %s112 = sphi 0, %s98
      %s116 = sphi 0, %s116
      %s118 = sphi 0, %s116
      %s119 = sphi 0, %s118
      %s133 = sphi 0, %s119
      %s137 = sphi 0, %s137
      %s139 = sphi 0, %s137
      %s140 = sphi 0, %s139
      %s154 = sphi 0, %s140
      %s158 = sphi 0, %s158
      %s160 = sphi 0, %s158
      %s161 = sphi 0, %s160
      %s175 = sphi 0, %s161
      %s179 = sphi 0, %s179
      %s181 = sphi 0, %s179
      %s182 = sphi 0, %s181
      %s196 = sphi 0, %s182
      %s200 = sphi 0, %s200
      %s202 = sphi 0, %s200
      %s203 = sphi 0, %s202
      %s217 = sphi 0, %s203
      %s221 = sphi 0, %s221
      %s223 = sphi 0, %s221
      %s224 = sphi 0, %s223
      %s238 = sphi 0, %s224
      %s242 = sphi 0, %s242
      %s244 = sphi 0, %s242
      %s245 = sphi 0, %s244
      %s259 = sphi 0, %s245
      %s265 = sphi 0, %s267
      %s268 = sphi 0, %s265
      %s269 = sphi 0, %s268
      %s285 = sphi 0, %s269
    $region4: #{decoder_forward.1} parent=1 // loop_header_branch
      %22 = sbr.rel (%p20) target = $region8
    $region5: #{decoder_forward.1} parent=1 // loop_body
      %s24 = ssub.s32 %s19, 1
      %s25 = ssub.s32 %s19, 2
      %s26 = sadd.s32 %s19, 1
      %s27 = ssub.s32 %s19, %s26
      %p28 = scmp.eq.s32.totalorder %s27, 0
      %s30 = sadd.s32 %s29, 1
      %s31 = scalar_select %p28, %s29, %s30
      %p34 = pneg %p28
      %p35 = scmp.eq.s32.totalorder %s19, 1
      %p36 = por %p34, %p35
      %p37 = scmp.ne.s32.totalorder %s29, %s32
      %p38 = scmp.eq.s32.totalorder %s19, 0
      %p39 = por %p37, %p38
      %p40 = scmp.ne.s32.totalorder %s29, %s32
      %p41 = scmp.eq.s32.totalorder %s24, 1
      %p42 = por %p40, %p41
      %p43 = scmp.ne.s32.totalorder %s32, %s33
      %p44 = scmp.eq.s32.totalorder %s24, 0
      %p45 = por %p43, %p44
      %p46 = scmp.ne.s32.totalorder %s32, %s33
      %p47 = scmp.eq.s32.totalorder %s25, 1
      %p48 = por %p46, %p47
      %p50 = scmp.ne.s32.totalorder %s33, %s49
      %p51 = scmp.eq.s32.totalorder %s25, 0
      %p52 = por %p50, %p51
      %s54 = sadd.s32 %s53, 1
      %p57 = scmp.eq.s32.totalorder %s19, 1
      %p58 = scmp.ne.s32.totalorder %s53, %s55
      %p59 = scmp.eq.s32.totalorder %s19, 0
      %p60 = por %p58, %p59
      %p61 = scmp.ne.s32.totalorder %s53, %s55
      %p62 = scmp.eq.s32.totalorder %s24, 1
      %p63 = por %p61, %p62
      %p64 = scmp.ne.s32.totalorder %s55, %s56
      %p65 = scmp.eq.s32.totalorder %s24, 0
      %p66 = por %p64, %p65
      %p67 = scmp.ne.s32.totalorder %s55, %s56
      %p68 = scmp.eq.s32.totalorder %s25, 1
      %p69 = por %p67, %p68
      %p71 = scmp.ne.s32.totalorder %s56, %s70
      %p72 = scmp.eq.s32.totalorder %s25, 0
      %p73 = por %p71, %p72
      %s75 = sadd.s32 %s74, 1
      %p78 = scmp.eq.s32.totalorder %s19, 1
      %p79 = scmp.ne.s32.totalorder %s74, %s76
      %p80 = scmp.eq.s32.totalorder %s19, 0
      %p81 = por %p79, %p80
      %p82 = scmp.ne.s32.totalorder %s74, %s76
      %p83 = scmp.eq.s32.totalorder %s24, 1
      %p84 = por %p82, %p83
      %p85 = scmp.ne.s32.totalorder %s76, %s77
      %p86 = scmp.eq.s32.totalorder %s24, 0
      %p87 = por %p85, %p86
      %p88 = scmp.ne.s32.totalorder %s76, %s77
      %p89 = scmp.eq.s32.totalorder %s25, 1
      %p90 = por %p88, %p89
      %p92 = scmp.ne.s32.totalorder %s77, %s91
      %p93 = scmp.eq.s32.totalorder %s25, 0
      %p94 = por %p92, %p93
      %s96 = sadd.s32 %s95, 1
      %p99 = scmp.eq.s32.totalorder %s19, 1
      %p100 = scmp.ne.s32.totalorder %s95, %s97
      %p101 = scmp.eq.s32.totalorder %s19, 0
      %p102 = por %p100, %p101
      %p103 = scmp.ne.s32.totalorder %s95, %s97
      %p104 = scmp.eq.s32.totalorder %s24, 1
      %p105 = por %p103, %p104
      %p106 = scmp.ne.s32.totalorder %s97, %s98
      %p107 = scmp.eq.s32.totalorder %s24, 0
      %p108 = por %p106, %p107
      %p109 = scmp.ne.s32.totalorder %s97, %s98
      %p110 = scmp.eq.s32.totalorder %s25, 1
      %p111 = por %p109, %p110
      %p113 = scmp.ne.s32.totalorder %s98, %s112
      %p114 = scmp.eq.s32.totalorder %s25, 0
      %p115 = por %p113, %p114
      %s117 = sadd.s32 %s116, 1
      %p120 = scmp.eq.s32.totalorder %s19, 1
      %p121 = scmp.ne.s32.totalorder %s116, %s118
      %p122 = scmp.eq.s32.totalorder %s19, 0
      %p123 = por %p121, %p122
      %p124 = scmp.ne.s32.totalorder %s116, %s118
      %p125 = scmp.eq.s32.totalorder %s24, 1
      %p126 = por %p124, %p125
      %p127 = scmp.ne.s32.totalorder %s118, %s119
      %p128 = scmp.eq.s32.totalorder %s24, 0
      %p129 = por %p127, %p128
      %p130 = scmp.ne.s32.totalorder %s118, %s119
      %p131 = scmp.eq.s32.totalorder %s25, 1
      %p132 = por %p130, %p131
      %p134 = scmp.ne.s32.totalorder %s119, %s133
      %p135 = scmp.eq.s32.totalorder %s25, 0
      %p136 = por %p134, %p135
      %s138 = sadd.s32 %s137, 1
      %p141 = scmp.eq.s32.totalorder %s19, 1
      %p142 = scmp.ne.s32.totalorder %s137, %s139
      %p143 = scmp.eq.s32.totalorder %s19, 0
      %p144 = por %p142, %p143
      %p145 = scmp.ne.s32.totalorder %s137, %s139
      %p146 = scmp.eq.s32.totalorder %s24, 1
      %p147 = por %p145, %p146
      %p148 = scmp.ne.s32.totalorder %s139, %s140
      %p149 = scmp.eq.s32.totalorder %s24, 0
      %p150 = por %p148, %p149
      %p151 = scmp.ne.s32.totalorder %s139, %s140
      %p152 = scmp.eq.s32.totalorder %s25, 1
      %p153 = por %p151, %p152
      %p155 = scmp.ne.s32.totalorder %s140, %s154
      %p156 = scmp.eq.s32.totalorder %s25, 0
      %p157 = por %p155, %p156
      %s159 = sadd.s32 %s158, 1
      %p162 = scmp.eq.s32.totalorder %s19, 1
      %p163 = scmp.ne.s32.totalorder %s158, %s160
      %p164 = scmp.eq.s32.totalorder %s19, 0
      %p165 = por %p163, %p164
      %p166 = scmp.ne.s32.totalorder %s158, %s160
      %p167 = scmp.eq.s32.totalorder %s24, 1
      %p168 = por %p166, %p167
      %p169 = scmp.ne.s32.totalorder %s160, %s161
      %p170 = scmp.eq.s32.totalorder %s24, 0
      %p171 = por %p169, %p170
      %p172 = scmp.ne.s32.totalorder %s160, %s161
      %p173 = scmp.eq.s32.totalorder %s25, 1
      %p174 = por %p172, %p173
      %p176 = scmp.ne.s32.totalorder %s161, %s175
      %p177 = scmp.eq.s32.totalorder %s25, 0
      %p178 = por %p176, %p177
      %s180 = sadd.s32 %s179, 1
      %p183 = scmp.eq.s32.totalorder %s19, 1
      %p184 = scmp.ne.s32.totalorder %s179, %s181
      %p185 = scmp.eq.s32.totalorder %s19, 0
      %p186 = por %p184, %p185
      %p187 = scmp.ne.s32.totalorder %s179, %s181
      %p188 = scmp.eq.s32.totalorder %s24, 1
      %p189 = por %p187, %p188
      %p190 = scmp.ne.s32.totalorder %s181, %s182
      %p191 = scmp.eq.s32.totalorder %s24, 0
      %p192 = por %p190, %p191
      %p193 = scmp.ne.s32.totalorder %s181, %s182
      %p194 = scmp.eq.s32.totalorder %s25, 1
      %p195 = por %p193, %p194
      %p197 = scmp.ne.s32.totalorder %s182, %s196
      %p198 = scmp.eq.s32.totalorder %s25, 0
      %p199 = por %p197, %p198
      %s201 = sadd.s32 %s200, 1
      %p204 = scmp.eq.s32.totalorder %s19, 1
      %p205 = scmp.ne.s32.totalorder %s200, %s202
      %p206 = scmp.eq.s32.totalorder %s19, 0
      %p207 = por %p205, %p206
      %p208 = scmp.ne.s32.totalorder %s200, %s202
      %p209 = scmp.eq.s32.totalorder %s24, 1
      %p210 = por %p208, %p209
      %p211 = scmp.ne.s32.totalorder %s202, %s203
      %p212 = scmp.eq.s32.totalorder %s24, 0
      %p213 = por %p211, %p212
      %p214 = scmp.ne.s32.totalorder %s202, %s203
      %p215 = scmp.eq.s32.totalorder %s25, 1
      %p216 = por %p214, %p215
      %p218 = scmp.ne.s32.totalorder %s203, %s217
      %p219 = scmp.eq.s32.totalorder %s25, 0
      %p220 = por %p218, %p219
      %s222 = sadd.s32 %s221, 1
      %p225 = scmp.eq.s32.totalorder %s19, 1
      %p226 = scmp.ne.s32.totalorder %s221, %s223
      %p227 = scmp.eq.s32.totalorder %s19, 0
      %p228 = por %p226, %p227
      %p229 = scmp.ne.s32.totalorder %s221, %s223
      %p230 = scmp.eq.s32.totalorder %s24, 1
      %p231 = por %p229, %p230
      %p232 = scmp.ne.s32.totalorder %s223, %s224
      %p233 = scmp.eq.s32.totalorder %s24, 0
      %p234 = por %p232, %p233
      %p235 = scmp.ne.s32.totalorder %s223, %s224
      %p236 = scmp.eq.s32.totalorder %s25, 1
      %p237 = por %p235, %p236
      %p239 = scmp.ne.s32.totalorder %s224, %s238
      %p240 = scmp.eq.s32.totalorder %s25, 0
      %p241 = por %p239, %p240
      %s243 = sadd.s32 %s242, 1
      %p246 = scmp.eq.s32.totalorder %s19, 1
      %p247 = scmp.ne.s32.totalorder %s242, %s244
      %p248 = scmp.eq.s32.totalorder %s19, 0
      %p249 = por %p247, %p248
      %p250 = scmp.ne.s32.totalorder %s242, %s244
      %p251 = scmp.eq.s32.totalorder %s24, 1
      %p252 = por %p250, %p251
      %p253 = scmp.ne.s32.totalorder %s244, %s245
      %p254 = scmp.eq.s32.totalorder %s24, 0
      %p255 = por %p253, %p254
      %p256 = scmp.ne.s32.totalorder %s244, %s245
      %p257 = scmp.eq.s32.totalorder %s25, 1
      %p258 = por %p256, %p257
      %p260 = scmp.ne.s32.totalorder %s245, %s259
      %p261 = scmp.eq.s32.totalorder %s25, 0
      %p262 = por %p260, %p261
      %s263 = ssub.s32 %s19, %s26
      %p264 = scmp.eq.s32.totalorder %s263, 0
      %s266 = sadd.s32 %s265, 1
      %s267 = scalar_select %p264, %s265, %s266
      %p270 = pneg %p264
      %p271 = scmp.eq.s32.totalorder %s19, 1
      %p272 = por %p270, %p271
      %p273 = scmp.ne.s32.totalorder %s265, %s268
      %p274 = scmp.eq.s32.totalorder %s19, 0
      %p275 = por %p273, %p274
      %p276 = scmp.ne.s32.totalorder %s265, %s268
      %p277 = scmp.eq.s32.totalorder %s24, 1
      %p278 = por %p276, %p277
      %p279 = scmp.ne.s32.totalorder %s268, %s269
      %p280 = scmp.eq.s32.totalorder %s24, 0
      %p281 = por %p279, %p280
      %p282 = scmp.ne.s32.totalorder %s268, %s269
      %p283 = scmp.eq.s32.totalorder %s25, 1
      %p284 = por %p282, %p283
      %p286 = scmp.ne.s32.totalorder %s269, %s285
      %p287 = scmp.eq.s32.totalorder %s25, 0
      %p288 = por %p286, %p287
      %p289 = scmp.le.s32.totalorder 1, %s19
      %p290 = scmp.lt.s32.totalorder %s19, 3
      %p291 = pnand %p289, %p290
      %p292 = pneg %p291
      // Predicated region
      $region9: #{decoder_forward.1} parent=5 // pred_check
        _
      $region10: #{decoder_forward.1} parent=5 // pred_check_branch
        %294 = sbr.rel (%p291) target = $region12
      $region11: #{decoder_forward.1} parent=5 // pred_region
        %s295 = ssub.s32 %s19, 1
        // Predicated region
        $region13: #{decoder_forward.1} parent=11 // pred_check
          %p296 = pneg %p66
        $region14: #{decoder_forward.1} parent=11 // pred_check_branch
          %298 = sbr.rel (%p296) target = $region16
        $region15: #{decoder_forward.1} parent=11 // pred_region
          _
        $region16: #{decoder_forward.1} parent=11 // pred_fallthru
          _
        // Predicated region
        $region17: #{decoder_forward.1} parent=11 // pred_check
          %p299 = pneg %p87
        $region18: #{decoder_forward.1} parent=11 // pred_check_branch
          %301 = sbr.rel (%p299) target = $region20
        $region19: #{decoder_forward.1} parent=11 // pred_region
          _
        $region20: #{decoder_forward.1} parent=11 // pred_fallthru
          _
        // Predicated region
        $region21: #{decoder_forward.1} parent=11 // pred_check
          %p302 = pneg %p108
        $region22: #{decoder_forward.1} parent=11 // pred_check_branch
          %304 = sbr.rel (%p302) target = $region24
        $region23: #{decoder_forward.1} parent=11 // pred_region
          _
        $region24: #{decoder_forward.1} parent=11 // pred_fallthru
          _
        // Predicated region
        $region25: #{decoder_forward.1} parent=11 // pred_check
          %p305 = pneg %p129
        $region26: #{decoder_forward.1} parent=11 // pred_check_branch
          %307 = sbr.rel (%p305) target = $region28
        $region27: #{decoder_forward.1} parent=11 // pred_region
          _
        $region28: #{decoder_forward.1} parent=11 // pred_fallthru
          _
        // Predicated region
        $region29: #{decoder_forward.1} parent=11 // pred_check
          %p308 = pneg %p150
        $region30: #{decoder_forward.1} parent=11 // pred_check_branch
          %310 = sbr.rel (%p308) target = $region32
        $region31: #{decoder_forward.1} parent=11 // pred_region
          %312 = vsyncadd [#allocation8], 0
          %s313 = sshll.u32 %s5, 4
          %s314 = int_to_ptr.hbm [resolvable:$true] %s313
          %s315 = sshll.u32 [#allocation7], 4
          %s316 = int_to_ptr.vmem [resolvable:$true] %s315
          %321 = dma.hbm_to_vmem [thread:$0]  %s314, 4096, %s316, [#allocation8], 64, 64, 4
        $region32: #{decoder_forward.1} parent=11 // pred_fallthru
          _
        // Predicated region
        $region33: #{decoder_forward.1} parent=11 // pred_check
          %p322 = pneg %p171
        $region34: #{decoder_forward.1} parent=11 // pred_check_branch
          %324 = sbr.rel (%p322) target = $region36
        $region35: #{decoder_forward.1} parent=11 // pred_region
          _
        $region36: #{decoder_forward.1} parent=11 // pred_fallthru
          _
        // Predicated region
        $region37: #{decoder_forward.1} parent=11 // pred_check
          %p325 = pneg %p192
        $region38: #{decoder_forward.1} parent=11 // pred_check_branch
          %327 = sbr.rel (%p325) target = $region40
        $region39: #{decoder_forward.1} parent=11 // pred_region
          %329 = vsyncadd [#allocation10], 0
          %s330 = sshll.u32 %s7, 4
          %s331 = int_to_ptr.hbm [resolvable:$true] %s330
          %s332 = sshll.u32 [#allocation9], 4
          %s333 = int_to_ptr.vmem [resolvable:$true] %s332
          %338 = dma.hbm_to_vmem [thread:$0]  %s331, 8192, %s333, [#allocation10], 128, 128, 8
        $region40: #{decoder_forward.1} parent=11 // pred_fallthru
          _
        // Predicated region
        $region41: #{decoder_forward.1} parent=11 // pred_check
          %p339 = pneg %p213
        $region42: #{decoder_forward.1} parent=11 // pred_check_branch
          %341 = sbr.rel (%p339) target = $region44
        $region43: #{decoder_forward.1} parent=11 // pred_region
          _
        $region44: #{decoder_forward.1} parent=11 // pred_fallthru
          _
        // Predicated region
        $region45: #{decoder_forward.1} parent=11 // pred_check
          %p342 = pneg %p234
        $region46: #{decoder_forward.1} parent=11 // pred_check_branch
          %344 = sbr.rel (%p342) target = $region48
        $region47: #{decoder_forward.1} parent=11 // pred_region
          _
        $region48: #{decoder_forward.1} parent=11 // pred_fallthru
          _
        // Predicated region
        $region49: #{decoder_forward.1} parent=11 // pred_check
          %p345 = pneg %p255
        $region50: #{decoder_forward.1} parent=11 // pred_check_branch
          %347 = sbr.rel (%p345) target = $region52
        $region51: #{decoder_forward.1} parent=11 // pred_region
          _
        $region52: #{decoder_forward.1} parent=11 // pred_fallthru
          _
      $region12: #{decoder_forward.1} parent=5 // pred_fallthru
        _
      %p348 = scmp.lt.s32.totalorder %s19, 2
      // Predicated region
      $region53: #{decoder_forward.1} parent=5 // pred_check
        %p349 = pneg %p348
      $region54: #{decoder_forward.1} parent=5 // pred_check_branch
        %351 = sbr.rel (%p349) target = $region56
      $region55: #{decoder_forward.1} parent=5 // pred_region
        // Predicated region
        $region57: #{decoder_forward.1} parent=55 // pred_check
          %p352 = pneg %p39
        $region58: #{decoder_forward.1} parent=55 // pred_check_branch
          %354 = sbr.rel (%p352) target = $region60
        $region59: #{decoder_forward.1} parent=55 // pred_region
          %p355 = scmp.lt.s32.totalorder %s19, 1
          %s356 = scalar_select %p355, %s19, 1
          %s357 = smul.addr %s356, 4
          %s358 = scalar_lea.vmem %s0, %s357
        $region60: #{decoder_forward.1} parent=55 // pred_fallthru
          _
      $region56: #{decoder_forward.1} parent=5 // pred_fallthru
        _
      %p359 = scmp.le.s32.totalorder 1, %s19
      %p360 = scmp.lt.s32.totalorder %s19, 3
      %p361 = pnand %p359, %p360
      %p362 = pneg %p361
      // Predicated region
      $region61: #{decoder_forward.1} parent=5 // pred_check
        _
      $region62: #{decoder_forward.1} parent=5 // pred_check_branch
        %364 = sbr.rel (%p361) target = $region64
      $region63: #{decoder_forward.1} parent=5 // pred_region
        %s365 = ssub.s32 %s19, 1
        // Predicated region
        $region65: #{decoder_forward.1} parent=63 // pred_check
          %p366 = pneg %p150
        $region66: #{decoder_forward.1} parent=63 // pred_check_branch
          %368 = sbr.rel (%p366) target = $region68
        $region67: #{decoder_forward.1} parent=63 // pred_region
          %370 = dma.done [#allocation8], 4096
        $region68: #{decoder_forward.1} parent=63 // pred_fallthru
          _
        // Predicated region
        $region69: #{decoder_forward.1} parent=63 // pred_check
          %p371 = pneg %p192
        $region70: #{decoder_forward.1} parent=63 // pred_check_branch
          %373 = sbr.rel (%p371) target = $region72
        $region71: #{decoder_forward.1} parent=63 // pred_region
          %375 = dma.done [#allocation10], 8192
        $region72: #{decoder_forward.1} parent=63 // pred_fallthru
          _
        %p376 = scmp.lt.s32.totalorder %s24, 1
        %s377 = scalar_select %p376, %s24, 1
        %s378 = smul.addr %s377, 4
        %s379 = scalar_lea.vmem %s0, %s378
        %p380 = pneg %p45
        %p381 = pneg %p42
        %p382 = pneg %p66
        %p383 = pneg %p63
        %p384 = pneg %p87
        %p385 = pneg %p84
        %p386 = pneg %p108
        %p387 = pneg %p105
        %p388 = pneg %p129
        %p389 = pneg %p126
        %p390 = pneg %p150
        %p391 = pneg %p147
        %p392 = pneg %p171
        %p393 = pneg %p168
        %p394 = pneg %p192
        %p395 = pneg %p189
        %p396 = pneg %p213
        %p397 = pneg %p210
        %p398 = pneg %p234
        %p399 = pneg %p231
        %p400 = pneg %p255
        %p401 = pneg %p252
        %p402 = pneg %p281
        %p403 = pneg %p278
        %p404 = scmp.lt.s32.totalorder %s24, 1
        %s405 = scalar_select %p404, %s24, 1
        %s406 = smul.addr %s405, 4
        %s407 = smul.addr %s406, 8
        %s408 = scalar_lea.vmem %s11, %s407
        %p409 = scmp.lt.s32.totalorder %s24, 1
        %s410 = scalar_select %p409, %s24, 1
        %s411 = smul.addr %s410, 4
        %s412 = scalar_lea.vmem %s0, %s411
        %p413 = scmp.lt.s32.totalorder %s24, 1
        %s414 = scalar_select %p413, %s24, 1
        %s415 = smul.addr %s414, 4
        %s416 = smul.addr %s415, 8
        %s417 = scalar_lea.vmem %s11, %s416
        %vm419 = vcmask 261120
        %420 = vst.msk [vmem:[#allocation2] sm:$0xff] %vm419, 0.0
        %vm421 = vcmask 258048
        %422 = vst.msk [vmem:[#allocation2 + $0x8] sm:$0x1f] %vm421, 0.0
        %423 = vst [vmem:[#allocation3] sm:$0xff] 0.0
        %424 = vst [vmem:[#allocation3 + $0x8] sm:$0x1f] 0.0
        %425 = vst [vmem:[#allocation4] sm:$0xff] 0.0
        %426 = vst [vmem:[#allocation4 + $0x8] sm:$0x1f] 0.0
        %427 = vst [vmem:[#allocation5] sm:$0xff] 0.0
        %428 = vst [vmem:[#allocation5 + $0x8] sm:$0xff] 0.0
        %429 = vst [vmem:[#allocation5 + $0x10] sm:$0x1] 0.0
        %430 = vst [vmem:[#allocation6] sm:$0xff] 0.0
        %431 = vst [vmem:[#allocation6 + $0x8] sm:$0xff] 0.0
        %432 = vst [vmem:[#allocation6 + $0x10] sm:$0xff] 0.0
        %433 = vst [vmem:[#allocation6 + $0x18] sm:$0xff] 0.0
        %434 = vst [vmem:[#allocation6 + $0x20] sm:$0xff] 0.0
        %435 = vst [vmem:[#allocation6 + $0x28] sm:$0xff] 0.0
        %436 = vst [vmem:[#allocation6 + $0x30] sm:$0x1] 0.0
        %437 = vst [vmem:[#allocation6 + $0x38] sm:$0x1] 0.0
        %v438 = vld [vmem:[%s412] sm:$0xf]
        %vm439 = vcmask 257024
        %440 = vst.msk [vmem:[#allocation2 + $0x8] sm:$0xf] %vm439, %v438
        %v441 = vld [vmem:[%s2] sm:$0x1]
        %v442 = vld [vmem:[#allocation2 + $0x7] sm:$0xf]
        %v443 = vpack.c.bf16 %v442, %v442
        %v444 = vld [vmem:[%s1] sm:$0xf]
        %v445 = vld [vmem:[%s1 + $0x4] sm:$0xf]
        %v446 = vld [vmem:[%s1 + $0x8] sm:$0xf]
        %v447 = vld [vmem:[%s1 + $0xc] sm:$0xf]
        %v448 = vld [vmem:[#allocation2 + $0x8] sm:$0xf]
        %v449 = vpack.c.bf16 %v448, %v448
        %s450 = scalar_lea.vmem %s1, 16
        %v451 = vld [vmem:[%s450] sm:$0xf]
        %v452 = vld [vmem:[%s450 + $0x4] sm:$0xf]
        %v453 = vld [vmem:[%s450 + $0x8] sm:$0xf]
        %v454 = vld [vmem:[%s450 + $0xc] sm:$0xf]
        %v459 = vunpack.c.l.b16 %v451
        %v460 = vunpack.c.l.b16 %v452
        %v461 = vunpack.c.l.b16 %v453
        %v462 = vunpack.c.l.b16 %v454
        %v463 = vpack.c.b16 %v460, %v459
        %v464 = vpack.c.b16 %v462, %v461
        %v468 = vsel %vm419, %v449, 0
        %470 = vmatpush.bf16.msra.mxu0 0
        %471 = vmatpush.bf16.msra.mxu0 0
        %472 = vmatpush.bf16.msra.mxu0 0
        %473 = vmatpush.bf16.msra.mxu0 0
        %474 = vmatpush.bf16.msra.mxu0 0
        %475 = vmatpush.bf16.msra.mxu0 0
        %476 = vmatpush.bf16.msra.mxu0 %v464
        %477 = vmatpush.bf16.msra.mxu0 %v463
        %478 = vmatmul.bf16.gmra.mxu0 %v468
        %v479 = vpop.f32.mrf.mxu0
        %v480 = vadd.f32 0.0, %v479
        %v481 = vpop.f32.mrf.mxu0
        %482 = vdwg.mxu0
        %v487 = vunpack.c.l.b16 %v444
        %v488 = vunpack.c.l.b16 %v445
        %v489 = vunpack.c.l.b16 %v446
        %v490 = vunpack.c.l.b16 %v447
        %v491 = vpack.c.b16 %v488, %v487
        %v492 = vpack.c.b16 %v490, %v489
        %v496 = vsel %vm419, %v443, 0
        %498 = vmatpush.bf16.msra.mxu0 0
        %499 = vmatpush.bf16.msra.mxu0 0
        %500 = vmatpush.bf16.msra.mxu0 0
        %501 = vmatpush.bf16.msra.mxu0 0
        %502 = vmatpush.bf16.msra.mxu0 0
        %503 = vmatpush.bf16.msra.mxu0 0
        %504 = vmatpush.bf16.msra.mxu0 %v492
        %505 = vmatpush.bf16.msra.mxu0 %v491
        %506 = vmatmul.bf16.gmra.mxu0 %v496
        %v507 = vpop.f32.mrf.mxu0
        %v508 = vadd.f32 %v480, %v507
        %v509 = vpop.f32.mrf.mxu0
        %510 = vdwg.mxu0
        %v511 = vld [vmem:[#allocation2 + $0x9] sm:$0xf]
        %v512 = vpack.c.bf16 %v511, %v511
        %s513 = scalar_lea.vmem %s1, 32
        %v514 = vld [vmem:[%s513] sm:$0xf]
        %v515 = vld [vmem:[%s513 + $0x4] sm:$0xf]
        %v516 = vld [vmem:[%s513 + $0x8] sm:$0xf]
        %v517 = vld [vmem:[%s513 + $0xc] sm:$0xf]
        %v522 = vunpack.c.l.b16 %v514
        %v523 = vunpack.c.l.b16 %v515
        %v524 = vunpack.c.l.b16 %v516
        %v525 = vunpack.c.l.b16 %v517
        %v526 = vpack.c.b16 %v523, %v522
        %v527 = vpack.c.b16 %v525, %v524
        %v531 = vsel %vm419, %v512, 0
        %533 = vmatpush.bf16.msra.mxu0 0
        %534 = vmatpush.bf16.msra.mxu0 0
        %535 = vmatpush.bf16.msra.mxu0 0
        %536 = vmatpush.bf16.msra.mxu0 0
        %537 = vmatpush.bf16.msra.mxu0 0
        %538 = vmatpush.bf16.msra.mxu0 0
        %539 = vmatpush.bf16.msra.mxu0 %v527
        %540 = vmatpush.bf16.msra.mxu0 %v526
        %541 = vmatmul.bf16.gmra.mxu0 %v531
        %v542 = vpop.f32.mrf.mxu0
        %v543 = vadd.f32 0.0, %v542
        %v544 = vpop.f32.mrf.mxu0
        %545 = vdwg.mxu0
        %v546 = vadd.f32 %v508, %v543
        %v548 = vperm.slane %v441, 0
        %v550 = vadd.f32 %v546, %v548
        %v551 = vmax.f32 %v550, 0.0
        %552 = vst [vmem:[#allocation3 + $0x8] sm:$0xf] %v551
        %v553 = vld [vmem:[#allocation3 + $0x8] sm:$0xf]
        %v554 = vld [vmem:[%s4] sm:$0x1]
        %v555 = vld [vmem:[#allocation3 + $0x7] sm:$0xf]
        %v556 = vpack.c.bf16 %v555, %v555
        %v557 = vld [vmem:[%s3] sm:$0xf]
        %v558 = vld [vmem:[%s3 + $0x4] sm:$0xf]
        %v559 = vld [vmem:[%s3 + $0x8] sm:$0xf]
        %v560 = vld [vmem:[%s3 + $0xc] sm:$0xf]
        %v561 = vld [vmem:[%s3 + $0x10] sm:$0xf]
        %v562 = vld [vmem:[%s3 + $0x14] sm:$0xf]
        %v563 = vld [vmem:[%s3 + $0x18] sm:$0xf]
        %v564 = vld [vmem:[%s3 + $0x1c] sm:$0xf]
        %v565 = vld [vmem:[%s3 + $0x20] sm:$0xf]
        %v566 = vld [vmem:[%s3 + $0x24] sm:$0xf]
        %v567 = vld [vmem:[%s3 + $0x28] sm:$0xf]
        %v568 = vld [vmem:[%s3 + $0x2c] sm:$0xf]
        %v569 = vld [vmem:[%s3 + $0x30] sm:$0xf]
        %v570 = vld [vmem:[%s3 + $0x34] sm:$0xf]
        %v571 = vld [vmem:[%s3 + $0x38] sm:$0xf]
        %v572 = vld [vmem:[%s3 + $0x3c] sm:$0xf]
        %v573 = vpack.c.bf16 %v553, %v553
        %s574 = scalar_lea.vmem %s3, 64
        %v575 = vld [vmem:[%s574] sm:$0xf]
        %v576 = vld [vmem:[%s574 + $0x4] sm:$0xf]
        %v577 = vld [vmem:[%s574 + $0x8] sm:$0xf]
        %v578 = vld [vmem:[%s574 + $0xc] sm:$0xf]
        %v579 = vld [vmem:[%s574 + $0x10] sm:$0xf]
        %v580 = vld [vmem:[%s574 + $0x14] sm:$0xf]
        %v581 = vld [vmem:[%s574 + $0x18] sm:$0xf]
        %v582 = vld [vmem:[%s574 + $0x1c] sm:$0xf]
        %v583 = vld [vmem:[%s574 + $0x20] sm:$0xf]
        %v584 = vld [vmem:[%s574 + $0x24] sm:$0xf]
        %v585 = vld [vmem:[%s574 + $0x28] sm:$0xf]
        %v586 = vld [vmem:[%s574 + $0x2c] sm:$0xf]
        %v587 = vld [vmem:[%s574 + $0x30] sm:$0xf]
        %v588 = vld [vmem:[%s574 + $0x34] sm:$0xf]
        %v589 = vld [vmem:[%s574 + $0x38] sm:$0xf]
        %v590 = vld [vmem:[%s574 + $0x3c] sm:$0xf]
        %v607 = vunpack.c.l.b16 %v575
        %v608 = vunpack.c.l.b16 %v576
        %v609 = vunpack.c.l.b16 %v577
        %v610 = vunpack.c.l.b16 %v578
        %v611 = vunpack.c.l.b16 %v579
        %v612 = vunpack.c.l.b16 %v580
        %v613 = vunpack.c.l.b16 %v581
        %v614 = vunpack.c.l.b16 %v582
        %v615 = vunpack.c.l.b16 %v583
        %v616 = vunpack.c.l.b16 %v584
        %v617 = vunpack.c.l.b16 %v585
        %v618 = vunpack.c.l.b16 %v586
        %v619 = vunpack.c.l.b16 %v587
        %v620 = vunpack.c.l.b16 %v588
        %v621 = vunpack.c.l.b16 %v589
        %v622 = vunpack.c.l.b16 %v590
        %v623 = vpack.c.b16 %v608, %v607
        %v624 = vpack.c.b16 %v610, %v609
        %v625 = vpack.c.b16 %v612, %v611
        %v626 = vpack.c.b16 %v614, %v613
        %v627 = vpack.c.b16 %v616, %v615
        %v628 = vpack.c.b16 %v618, %v617
        %v629 = vpack.c.b16 %v620, %v619
        %v630 = vpack.c.b16 %v622, %v621
        %639 = vmatpush.bf16.msra.mxu0 %v630
        %640 = vmatpush.bf16.msra.mxu0 %v629
        %641 = vmatpush.bf16.msra.mxu0 %v628
        %642 = vmatpush.bf16.msra.mxu0 %v627
        %643 = vmatpush.bf16.msra.mxu0 %v626
        %644 = vmatpush.bf16.msra.mxu0 %v625
        %645 = vmatpush.bf16.msra.mxu0 %v624
        %646 = vmatpush.bf16.msra.mxu0 %v623
        %647 = vmatmul.bf16.gmra.mxu0 %v573
        %v648 = vpop.f32.mrf.mxu0
        %v649 = vadd.f32 0.0, %v648
        %v650 = vpop.f32.mrf.mxu0
        %651 = vdwg.mxu0
        %v668 = vunpack.c.l.b16 %v557
        %v669 = vunpack.c.l.b16 %v558
        %v670 = vunpack.c.l.b16 %v559
        %v671 = vunpack.c.l.b16 %v560
        %v672 = vunpack.c.l.b16 %v561
        %v673 = vunpack.c.l.b16 %v562
        %v674 = vunpack.c.l.b16 %v563
        %v675 = vunpack.c.l.b16 %v564
        %v676 = vunpack.c.l.b16 %v565
        %v677 = vunpack.c.l.b16 %v566
        %v678 = vunpack.c.l.b16 %v567
        %v679 = vunpack.c.l.b16 %v568
        %v680 = vunpack.c.l.b16 %v569
        %v681 = vunpack.c.l.b16 %v570
        %v682 = vunpack.c.l.b16 %v571
        %v683 = vunpack.c.l.b16 %v572
        %v684 = vpack.c.b16 %v669, %v668
        %v685 = vpack.c.b16 %v671, %v670
        %v686 = vpack.c.b16 %v673, %v672
        %v687 = vpack.c.b16 %v675, %v674
        %v688 = vpack.c.b16 %v677, %v676
        %v689 = vpack.c.b16 %v679, %v678
        %v690 = vpack.c.b16 %v681, %v680
        %v691 = vpack.c.b16 %v683, %v682
        %700 = vmatpush.bf16.msra.mxu0 %v691
        %701 = vmatpush.bf16.msra.mxu0 %v690
        %702 = vmatpush.bf16.msra.mxu0 %v689
        %703 = vmatpush.bf16.msra.mxu0 %v688
        %704 = vmatpush.bf16.msra.mxu0 %v687
        %705 = vmatpush.bf16.msra.mxu0 %v686
        %706 = vmatpush.bf16.msra.mxu0 %v685
        %707 = vmatpush.bf16.msra.mxu0 %v684
        %708 = vmatmul.bf16.gmra.mxu0 %v556
        %v709 = vpop.f32.mrf.mxu0
        %v710 = vadd.f32 %v649, %v709
        %v711 = vpop.f32.mrf.mxu0
        %712 = vdwg.mxu0
        %v713 = vld [vmem:[#allocation3 + $0x9] sm:$0xf]
        %v714 = vpack.c.bf16 %v713, %v713
        %s715 = scalar_lea.vmem %s3, 128
        %v716 = vld [vmem:[%s715] sm:$0xf]
        %v717 = vld [vmem:[%s715 + $0x4] sm:$0xf]
        %v718 = vld [vmem:[%s715 + $0x8] sm:$0xf]
        %v719 = vld [vmem:[%s715 + $0xc] sm:$0xf]
        %v720 = vld [vmem:[%s715 + $0x10] sm:$0xf]
        %v721 = vld [vmem:[%s715 + $0x14] sm:$0xf]
        %v722 = vld [vmem:[%s715 + $0x18] sm:$0xf]
        %v723 = vld [vmem:[%s715 + $0x1c] sm:$0xf]
        %v724 = vld [vmem:[%s715 + $0x20] sm:$0xf]
        %v725 = vld [vmem:[%s715 + $0x24] sm:$0xf]
        %v726 = vld [vmem:[%s715 + $0x28] sm:$0xf]
        %v727 = vld [vmem:[%s715 + $0x2c] sm:$0xf]
        %v728 = vld [vmem:[%s715 + $0x30] sm:$0xf]
        %v729 = vld [vmem:[%s715 + $0x34] sm:$0xf]
        %v730 = vld [vmem:[%s715 + $0x38] sm:$0xf]
        %v731 = vld [vmem:[%s715 + $0x3c] sm:$0xf]
        %v748 = vunpack.c.l.b16 %v716
        %v749 = vunpack.c.l.b16 %v717
        %v750 = vunpack.c.l.b16 %v718
        %v751 = vunpack.c.l.b16 %v719
        %v752 = vunpack.c.l.b16 %v720
        %v753 = vunpack.c.l.b16 %v721
        %v754 = vunpack.c.l.b16 %v722
        %v755 = vunpack.c.l.b16 %v723
        %v756 = vunpack.c.l.b16 %v724
        %v757 = vunpack.c.l.b16 %v725
        %v758 = vunpack.c.l.b16 %v726
        %v759 = vunpack.c.l.b16 %v727
        %v760 = vunpack.c.l.b16 %v728
        %v761 = vunpack.c.l.b16 %v729
        %v762 = vunpack.c.l.b16 %v730
        %v763 = vunpack.c.l.b16 %v731
        %v764 = vpack.c.b16 %v749, %v748
        %v765 = vpack.c.b16 %v751, %v750
        %v766 = vpack.c.b16 %v753, %v752
        %v767 = vpack.c.b16 %v755, %v754
        %v768 = vpack.c.b16 %v757, %v756
        %v769 = vpack.c.b16 %v759, %v758
        %v770 = vpack.c.b16 %v761, %v760
        %v771 = vpack.c.b16 %v763, %v762
        %780 = vmatpush.bf16.msra.mxu0 %v771
        %781 = vmatpush.bf16.msra.mxu0 %v770
        %782 = vmatpush.bf16.msra.mxu0 %v769
        %783 = vmatpush.bf16.msra.mxu0 %v768
        %784 = vmatpush.bf16.msra.mxu0 %v767
        %785 = vmatpush.bf16.msra.mxu0 %v766
        %786 = vmatpush.bf16.msra.mxu0 %v765
        %787 = vmatpush.bf16.msra.mxu0 %v764
        %788 = vmatmul.bf16.gmra.mxu0 %v714
        %v789 = vpop.f32.mrf.mxu0
        %v790 = vadd.f32 0.0, %v789
        %v791 = vpop.f32.mrf.mxu0
        %792 = vdwg.mxu0
        %v793 = vadd.f32 %v710, %v790
        %v795 = vperm.slane %v554, 0
        %v797 = vadd.f32 %v793, %v795
        %v798 = vmax.f32 %v797, 0.0
        %799 = vst [vmem:[#allocation4 + $0x8] sm:$0xf] %v798
        %s800 = scalar_lea.vmem %s4, 1
        %v801 = vld [vmem:[%s800] sm:$0x1]
        %v802 = vld [vmem:[#allocation4 + $0x7] sm:$0xf]
        %v803 = vpack.c.bf16 %v802, %v802
        %s804 = scalar_lea.vmem %s3, 192
        %v805 = vld [vmem:[%s804] sm:$0xf]
        %v806 = vld [vmem:[%s804 + $0x4] sm:$0xf]
        %v807 = vld [vmem:[%s804 + $0x8] sm:$0xf]
        %v808 = vld [vmem:[%s804 + $0xc] sm:$0xf]
        %v809 = vld [vmem:[%s804 + $0x10] sm:$0xf]
        %v810 = vld [vmem:[%s804 + $0x14] sm:$0xf]
        %v811 = vld [vmem:[%s804 + $0x18] sm:$0xf]
        %v812 = vld [vmem:[%s804 + $0x1c] sm:$0xf]
        %v813 = vld [vmem:[%s804 + $0x20] sm:$0xf]
        %v814 = vld [vmem:[%s804 + $0x24] sm:$0xf]
        %v815 = vld [vmem:[%s804 + $0x28] sm:$0xf]
        %v816 = vld [vmem:[%s804 + $0x2c] sm:$0xf]
        %v817 = vld [vmem:[%s804 + $0x30] sm:$0xf]
        %v818 = vld [vmem:[%s804 + $0x34] sm:$0xf]
        %v819 = vld [vmem:[%s804 + $0x38] sm:$0xf]
        %v820 = vld [vmem:[%s804 + $0x3c] sm:$0xf]
        %v821 = vld [vmem:[#allocation4 + $0x8] sm:$0xf]
        %v822 = vpack.c.bf16 %v821, %v821
        %s823 = scalar_lea.vmem %s3, 256
        %v824 = vld [vmem:[%s823] sm:$0xf]
        %v825 = vld [vmem:[%s823 + $0x4] sm:$0xf]
        %v826 = vld [vmem:[%s823 + $0x8] sm:$0xf]
        %v827 = vld [vmem:[%s823 + $0xc] sm:$0xf]
        %v828 = vld [vmem:[%s823 + $0x10] sm:$0xf]
        %v829 = vld [vmem:[%s823 + $0x14] sm:$0xf]
        %v830 = vld [vmem:[%s823 + $0x18] sm:$0xf]
        %v831 = vld [vmem:[%s823 + $0x1c] sm:$0xf]
        %v832 = vld [vmem:[%s823 + $0x20] sm:$0xf]
        %v833 = vld [vmem:[%s823 + $0x24] sm:$0xf]
        %v834 = vld [vmem:[%s823 + $0x28] sm:$0xf]
        %v835 = vld [vmem:[%s823 + $0x2c] sm:$0xf]
        %v836 = vld [vmem:[%s823 + $0x30] sm:$0xf]
        %v837 = vld [vmem:[%s823 + $0x34] sm:$0xf]
        %v838 = vld [vmem:[%s823 + $0x38] sm:$0xf]
        %v839 = vld [vmem:[%s823 + $0x3c] sm:$0xf]
        %v856 = vunpack.c.l.b16 %v824
        %v857 = vunpack.c.l.b16 %v825
        %v858 = vunpack.c.l.b16 %v826
        %v859 = vunpack.c.l.b16 %v827
        %v860 = vunpack.c.l.b16 %v828
        %v861 = vunpack.c.l.b16 %v829
        %v862 = vunpack.c.l.b16 %v830
        %v863 = vunpack.c.l.b16 %v831
        %v864 = vunpack.c.l.b16 %v832
        %v865 = vunpack.c.l.b16 %v833
        %v866 = vunpack.c.l.b16 %v834
        %v867 = vunpack.c.l.b16 %v835
        %v868 = vunpack.c.l.b16 %v836
        %v869 = vunpack.c.l.b16 %v837
        %v870 = vunpack.c.l.b16 %v838
        %v871 = vunpack.c.l.b16 %v839
        %v872 = vpack.c.b16 %v857, %v856
        %v873 = vpack.c.b16 %v859, %v858
        %v874 = vpack.c.b16 %v861, %v860
        %v875 = vpack.c.b16 %v863, %v862
        %v876 = vpack.c.b16 %v865, %v864
        %v877 = vpack.c.b16 %v867, %v866
        %v878 = vpack.c.b16 %v869, %v868
        %v879 = vpack.c.b16 %v871, %v870
        %888 = vmatpush.bf16.msra.mxu0 %v879
        %889 = vmatpush.bf16.msra.mxu0 %v878
        %890 = vmatpush.bf16.msra.mxu0 %v877
        %891 = vmatpush.bf16.msra.mxu0 %v876
        %892 = vmatpush.bf16.msra.mxu0 %v875
        %893 = vmatpush.bf16.msra.mxu0 %v874
        %894 = vmatpush.bf16.msra.mxu0 %v873
        %895 = vmatpush.bf16.msra.mxu0 %v872
        %896 = vmatmul.bf16.gmra.mxu0 %v822
        %v897 = vpop.f32.mrf.mxu0
        %v898 = vadd.f32 0.0, %v897
        %v899 = vpop.f32.mrf.mxu0
        %900 = vdwg.mxu0
        %v917 = vunpack.c.l.b16 %v805
        %v918 = vunpack.c.l.b16 %v806
        %v919 = vunpack.c.l.b16 %v807
        %v920 = vunpack.c.l.b16 %v808
        %v921 = vunpack.c.l.b16 %v809
        %v922 = vunpack.c.l.b16 %v810
        %v923 = vunpack.c.l.b16 %v811
        %v924 = vunpack.c.l.b16 %v812
        %v925 = vunpack.c.l.b16 %v813
        %v926 = vunpack.c.l.b16 %v814
        %v927 = vunpack.c.l.b16 %v815
        %v928 = vunpack.c.l.b16 %v816
        %v929 = vunpack.c.l.b16 %v817
        %v930 = vunpack.c.l.b16 %v818
        %v931 = vunpack.c.l.b16 %v819
        %v932 = vunpack.c.l.b16 %v820
        %v933 = vpack.c.b16 %v918, %v917
        %v934 = vpack.c.b16 %v920, %v919
        %v935 = vpack.c.b16 %v922, %v921
        %v936 = vpack.c.b16 %v924, %v923
        %v937 = vpack.c.b16 %v926, %v925
        %v938 = vpack.c.b16 %v928, %v927
        %v939 = vpack.c.b16 %v930, %v929
        %v940 = vpack.c.b16 %v932, %v931
        %949 = vmatpush.bf16.msra.mxu0 %v940
        %950 = vmatpush.bf16.msra.mxu0 %v939
        %951 = vmatpush.bf16.msra.mxu0 %v938
        %952 = vmatpush.bf16.msra.mxu0 %v937
        %953 = vmatpush.bf16.msra.mxu0 %v936
        %954 = vmatpush.bf16.msra.mxu0 %v935
        %955 = vmatpush.bf16.msra.mxu0 %v934
        %956 = vmatpush.bf16.msra.mxu0 %v933
        %957 = vmatmul.bf16.gmra.mxu0 %v803
        %v958 = vpop.f32.mrf.mxu0
        %v959 = vadd.f32 %v898, %v958
        %v960 = vpop.f32.mrf.mxu0
        %961 = vdwg.mxu0
        %v962 = vld [vmem:[#allocation4 + $0x9] sm:$0xf]
        %v963 = vpack.c.bf16 %v962, %v962
        %s964 = scalar_lea.vmem %s3, 320
        %v965 = vld [vmem:[%s964] sm:$0xf]
        %v966 = vld [vmem:[%s964 + $0x4] sm:$0xf]
        %v967 = vld [vmem:[%s964 + $0x8] sm:$0xf]
        %v968 = vld [vmem:[%s964 + $0xc] sm:$0xf]
        %v969 = vld [vmem:[%s964 + $0x10] sm:$0xf]
        %v970 = vld [vmem:[%s964 + $0x14] sm:$0xf]
        %v971 = vld [vmem:[%s964 + $0x18] sm:$0xf]
        %v972 = vld [vmem:[%s964 + $0x1c] sm:$0xf]
        %v973 = vld [vmem:[%s964 + $0x20] sm:$0xf]
        %v974 = vld [vmem:[%s964 + $0x24] sm:$0xf]
        %v975 = vld [vmem:[%s964 + $0x28] sm:$0xf]
        %v976 = vld [vmem:[%s964 + $0x2c] sm:$0xf]
        %v977 = vld [vmem:[%s964 + $0x30] sm:$0xf]
        %v978 = vld [vmem:[%s964 + $0x34] sm:$0xf]
        %v979 = vld [vmem:[%s964 + $0x38] sm:$0xf]
        %v980 = vld [vmem:[%s964 + $0x3c] sm:$0xf]
        %v997 = vunpack.c.l.b16 %v965
        %v998 = vunpack.c.l.b16 %v966
        %v999 = vunpack.c.l.b16 %v967
        %v1000 = vunpack.c.l.b16 %v968
        %v1001 = vunpack.c.l.b16 %v969
        %v1002 = vunpack.c.l.b16 %v970
        %v1003 = vunpack.c.l.b16 %v971
        %v1004 = vunpack.c.l.b16 %v972
        %v1005 = vunpack.c.l.b16 %v973
        %v1006 = vunpack.c.l.b16 %v974
        %v1007 = vunpack.c.l.b16 %v975
        %v1008 = vunpack.c.l.b16 %v976
        %v1009 = vunpack.c.l.b16 %v977
        %v1010 = vunpack.c.l.b16 %v978
        %v1011 = vunpack.c.l.b16 %v979
        %v1012 = vunpack.c.l.b16 %v980
        %v1013 = vpack.c.b16 %v998, %v997
        %v1014 = vpack.c.b16 %v1000, %v999
        %v1015 = vpack.c.b16 %v1002, %v1001
        %v1016 = vpack.c.b16 %v1004, %v1003
        %v1017 = vpack.c.b16 %v1006, %v1005
        %v1018 = vpack.c.b16 %v1008, %v1007
        %v1019 = vpack.c.b16 %v1010, %v1009
        %v1020 = vpack.c.b16 %v1012, %v1011
        %1029 = vmatpush.bf16.msra.mxu0 %v1020
        %1030 = vmatpush.bf16.msra.mxu0 %v1019
        %1031 = vmatpush.bf16.msra.mxu0 %v1018
        %1032 = vmatpush.bf16.msra.mxu0 %v1017
        %1033 = vmatpush.bf16.msra.mxu0 %v1016
        %1034 = vmatpush.bf16.msra.mxu0 %v1015
        %1035 = vmatpush.bf16.msra.mxu0 %v1014
        %1036 = vmatpush.bf16.msra.mxu0 %v1013
        %1037 = vmatmul.bf16.gmra.mxu0 %v963
        %v1038 = vpop.f32.mrf.mxu0
        %v1039 = vadd.f32 0.0, %v1038
        %v1040 = vpop.f32.mrf.mxu0
        %1041 = vdwg.mxu0
        %v1042 = vadd.f32 %v959, %v1039
        %v1044 = vperm.slane %v801, 0
        %v1046 = vadd.f32 %v1042, %v1044
        %v1047 = vadd.f32 %v1046, %v553
        %v1048 = vmax.f32 %v1047, 0.0
        %1049 = vst [vmem:[#allocation3 + $0x8] sm:$0xf] %v1048
        %v1050 = vld [vmem:[#allocation3 + $0x8] sm:$0xf]
        %s1051 = scalar_lea.vmem %s4, 2
        %v1052 = vld [vmem:[%s1051] sm:$0x1]
        %v1053 = vld [vmem:[#allocation3 + $0x7] sm:$0xf]
        %v1054 = vpack.c.bf16 %v1053, %v1053
        %s1055 = scalar_lea.vmem %s3, 384
        %v1056 = vld [vmem:[%s1055] sm:$0xf]
        %v1057 = vld [vmem:[%s1055 + $0x4] sm:$0xf]
        %v1058 = vld [vmem:[%s1055 + $0x8] sm:$0xf]
        %v1059 = vld [vmem:[%s1055 + $0xc] sm:$0xf]
        %v1060 = vld [vmem:[%s1055 + $0x10] sm:$0xf]
        %v1061 = vld [vmem:[%s1055 + $0x14] sm:$0xf]
        %v1062 = vld [vmem:[%s1055 + $0x18] sm:$0xf]
        %v1063 = vld [vmem:[%s1055 + $0x1c] sm:$0xf]
        %v1064 = vld [vmem:[%s1055 + $0x20] sm:$0xf]
        %v1065 = vld [vmem:[%s1055 + $0x24] sm:$0xf]
        %v1066 = vld [vmem:[%s1055 + $0x28] sm:$0xf]
        %v1067 = vld [vmem:[%s1055 + $0x2c] sm:$0xf]
        %v1068 = vld [vmem:[%s1055 + $0x30] sm:$0xf]
        %v1069 = vld [vmem:[%s1055 + $0x34] sm:$0xf]
        %v1070 = vld [vmem:[%s1055 + $0x38] sm:$0xf]
        %v1071 = vld [vmem:[%s1055 + $0x3c] sm:$0xf]
        %v1072 = vpack.c.bf16 %v1050, %v1050
        %s1073 = scalar_lea.vmem %s3, 448
        %v1074 = vld [vmem:[%s1073] sm:$0xf]
        %v1075 = vld [vmem:[%s1073 + $0x4] sm:$0xf]
        %v1076 = vld [vmem:[%s1073 + $0x8] sm:$0xf]
        %v1077 = vld [vmem:[%s1073 + $0xc] sm:$0xf]
        %v1078 = vld [vmem:[%s1073 + $0x10] sm:$0xf]
        %v1079 = vld [vmem:[%s1073 + $0x14] sm:$0xf]
        %v1080 = vld [vmem:[%s1073 + $0x18] sm:$0xf]
        %v1081 = vld [vmem:[%s1073 + $0x1c] sm:$0xf]
        %v1082 = vld [vmem:[%s1073 + $0x20] sm:$0xf]
        %v1083 = vld [vmem:[%s1073 + $0x24] sm:$0xf]
        %v1084 = vld [vmem:[%s1073 + $0x28] sm:$0xf]
        %v1085 = vld [vmem:[%s1073 + $0x2c] sm:$0xf]
        %v1086 = vld [vmem:[%s1073 + $0x30] sm:$0xf]
        %v1087 = vld [vmem:[%s1073 + $0x34] sm:$0xf]
        %v1088 = vld [vmem:[%s1073 + $0x38] sm:$0xf]
        %v1089 = vld [vmem:[%s1073 + $0x3c] sm:$0xf]
        %v1106 = vunpack.c.l.b16 %v1074
        %v1107 = vunpack.c.l.b16 %v1075
        %v1108 = vunpack.c.l.b16 %v1076
        %v1109 = vunpack.c.l.b16 %v1077
        %v1110 = vunpack.c.l.b16 %v1078
        %v1111 = vunpack.c.l.b16 %v1079
        %v1112 = vunpack.c.l.b16 %v1080
        %v1113 = vunpack.c.l.b16 %v1081
        %v1114 = vunpack.c.l.b16 %v1082
        %v1115 = vunpack.c.l.b16 %v1083
        %v1116 = vunpack.c.l.b16 %v1084
        %v1117 = vunpack.c.l.b16 %v1085
        %v1118 = vunpack.c.l.b16 %v1086
        %v1119 = vunpack.c.l.b16 %v1087
        %v1120 = vunpack.c.l.b16 %v1088
        %v1121 = vunpack.c.l.b16 %v1089
        %v1122 = vpack.c.b16 %v1107, %v1106
        %v1123 = vpack.c.b16 %v1109, %v1108
        %v1124 = vpack.c.b16 %v1111, %v1110
        %v1125 = vpack.c.b16 %v1113, %v1112
        %v1126 = vpack.c.b16 %v1115, %v1114
        %v1127 = vpack.c.b16 %v1117, %v1116
        %v1128 = vpack.c.b16 %v1119, %v1118
        %v1129 = vpack.c.b16 %v1121, %v1120
        %1138 = vmatpush.bf16.msra.mxu0 %v1129
        %1139 = vmatpush.bf16.msra.mxu0 %v1128
        %1140 = vmatpush.bf16.msra.mxu0 %v1127
        %1141 = vmatpush.bf16.msra.mxu0 %v1126
        %1142 = vmatpush.bf16.msra.mxu0 %v1125
        %1143 = vmatpush.bf16.msra.mxu0 %v1124
        %1144 = vmatpush.bf16.msra.mxu0 %v1123
        %1145 = vmatpush.bf16.msra.mxu0 %v1122
        %1146 = vmatmul.bf16.gmra.mxu0 %v1072
        %v1147 = vpop.f32.mrf.mxu0
        %v1148 = vadd.f32 0.0, %v1147
        %v1149 = vpop.f32.mrf.mxu0
        %1150 = vdwg.mxu0
        %v1167 = vunpack.c.l.b16 %v1056
        %v1168 = vunpack.c.l.b16 %v1057
        %v1169 = vunpack.c.l.b16 %v1058
        %v1170 = vunpack.c.l.b16 %v1059
        %v1171 = vunpack.c.l.b16 %v1060
        %v1172 = vunpack.c.l.b16 %v1061
        %v1173 = vunpack.c.l.b16 %v1062
        %v1174 = vunpack.c.l.b16 %v1063
        %v1175 = vunpack.c.l.b16 %v1064
        %v1176 = vunpack.c.l.b16 %v1065
        %v1177 = vunpack.c.l.b16 %v1066
        %v1178 = vunpack.c.l.b16 %v1067
        %v1179 = vunpack.c.l.b16 %v1068
        %v1180 = vunpack.c.l.b16 %v1069
        %v1181 = vunpack.c.l.b16 %v1070
        %v1182 = vunpack.c.l.b16 %v1071
        %v1183 = vpack.c.b16 %v1168, %v1167
        %v1184 = vpack.c.b16 %v1170, %v1169
        %v1185 = vpack.c.b16 %v1172, %v1171
        %v1186 = vpack.c.b16 %v1174, %v1173
        %v1187 = vpack.c.b16 %v1176, %v1175
        %v1188 = vpack.c.b16 %v1178, %v1177
        %v1189 = vpack.c.b16 %v1180, %v1179
        %v1190 = vpack.c.b16 %v1182, %v1181
        %1199 = vmatpush.bf16.msra.mxu0 %v1190
        %1200 = vmatpush.bf16.msra.mxu0 %v1189
        %1201 = vmatpush.bf16.msra.mxu0 %v1188
        %1202 = vmatpush.bf16.msra.mxu0 %v1187
        %1203 = vmatpush.bf16.msra.mxu0 %v1186
        %1204 = vmatpush.bf16.msra.mxu0 %v1185
        %1205 = vmatpush.bf16.msra.mxu0 %v1184
        %1206 = vmatpush.bf16.msra.mxu0 %v1183
        %1207 = vmatmul.bf16.gmra.mxu0 %v1054
        %v1208 = vpop.f32.mrf.mxu0
        %v1209 = vadd.f32 %v1148, %v1208
        %v1210 = vpop.f32.mrf.mxu0
        %1211 = vdwg.mxu0
        %v1212 = vld [vmem:[#allocation3 + $0x9] sm:$0xf]
        %v1213 = vpack.c.bf16 %v1212, %v1212
        %s1214 = scalar_lea.vmem %s3, 512
        %v1215 = vld [vmem:[%s1214] sm:$0xf]
        %v1216 = vld [vmem:[%s1214 + $0x4] sm:$0xf]
        %v1217 = vld [vmem:[%s1214 + $0x8] sm:$0xf]
        %v1218 = vld [vmem:[%s1214 + $0xc] sm:$0xf]
        %v1219 = vld [vmem:[%s1214 + $0x10] sm:$0xf]
        %v1220 = vld [vmem:[%s1214 + $0x14] sm:$0xf]
        %v1221 = vld [vmem:[%s1214 + $0x18] sm:$0xf]
        %v1222 = vld [vmem:[%s1214 + $0x1c] sm:$0xf]
        %v1223 = vld [vmem:[%s1214 + $0x20] sm:$0xf]
        %v1224 = vld [vmem:[%s1214 + $0x24] sm:$0xf]
        %v1225 = vld [vmem:[%s1214 + $0x28] sm:$0xf]
        %v1226 = vld [vmem:[%s1214 + $0x2c] sm:$0xf]
        %v1227 = vld [vmem:[%s1214 + $0x30] sm:$0xf]
        %v1228 = vld [vmem:[%s1214 + $0x34] sm:$0xf]
        %v1229 = vld [vmem:[%s1214 + $0x38] sm:$0xf]
        %v1230 = vld [vmem:[%s1214 + $0x3c] sm:$0xf]
        %v1247 = vunpack.c.l.b16 %v1215
        %v1248 = vunpack.c.l.b16 %v1216
        %v1249 = vunpack.c.l.b16 %v1217
        %v1250 = vunpack.c.l.b16 %v1218
        %v1251 = vunpack.c.l.b16 %v1219
        %v1252 = vunpack.c.l.b16 %v1220
        %v1253 = vunpack.c.l.b16 %v1221
        %v1254 = vunpack.c.l.b16 %v1222
        %v1255 = vunpack.c.l.b16 %v1223
        %v1256 = vunpack.c.l.b16 %v1224
        %v1257 = vunpack.c.l.b16 %v1225
        %v1258 = vunpack.c.l.b16 %v1226
        %v1259 = vunpack.c.l.b16 %v1227
        %v1260 = vunpack.c.l.b16 %v1228
        %v1261 = vunpack.c.l.b16 %v1229
        %v1262 = vunpack.c.l.b16 %v1230
        %v1263 = vpack.c.b16 %v1248, %v1247
        %v1264 = vpack.c.b16 %v1250, %v1249
        %v1265 = vpack.c.b16 %v1252, %v1251
        %v1266 = vpack.c.b16 %v1254, %v1253
        %v1267 = vpack.c.b16 %v1256, %v1255
        %v1268 = vpack.c.b16 %v1258, %v1257
        %v1269 = vpack.c.b16 %v1260, %v1259
        %v1270 = vpack.c.b16 %v1262, %v1261
        %1279 = vmatpush.bf16.msra.mxu0 %v1270
        %1280 = vmatpush.bf16.msra.mxu0 %v1269
        %1281 = vmatpush.bf16.msra.mxu0 %v1268
        %1282 = vmatpush.bf16.msra.mxu0 %v1267
        %1283 = vmatpush.bf16.msra.mxu0 %v1266
        %1284 = vmatpush.bf16.msra.mxu0 %v1265
        %1285 = vmatpush.bf16.msra.mxu0 %v1264
        %1286 = vmatpush.bf16.msra.mxu0 %v1263
        %1287 = vmatmul.bf16.gmra.mxu0 %v1213
        %v1288 = vpop.f32.mrf.mxu0
        %v1289 = vadd.f32 0.0, %v1288
        %v1290 = vpop.f32.mrf.mxu0
        %1291 = vdwg.mxu0
        %v1292 = vadd.f32 %v1209, %v1289
        %v1294 = vperm.slane %v1052, 0
        %v1296 = vadd.f32 %v1292, %v1294
        %v1297 = vmax.f32 %v1296, 0.0
        %1298 = vst [vmem:[#allocation4 + $0x8] sm:$0xf] %v1297
        %s1299 = scalar_lea.vmem %s4, 3
        %v1300 = vld [vmem:[%s1299] sm:$0x1]
        %v1301 = vld [vmem:[#allocation4 + $0x7] sm:$0xf]
        %v1302 = vpack.c.bf16 %v1301, %v1301
        %s1303 = scalar_lea.vmem %s3, 576
        %v1304 = vld [vmem:[%s1303] sm:$0xf]
        %v1305 = vld [vmem:[%s1303 + $0x4] sm:$0xf]
        %v1306 = vld [vmem:[%s1303 + $0x8] sm:$0xf]
        %v1307 = vld [vmem:[%s1303 + $0xc] sm:$0xf]
        %v1308 = vld [vmem:[%s1303 + $0x10] sm:$0xf]
        %v1309 = vld [vmem:[%s1303 + $0x14] sm:$0xf]
        %v1310 = vld [vmem:[%s1303 + $0x18] sm:$0xf]
        %v1311 = vld [vmem:[%s1303 + $0x1c] sm:$0xf]
        %v1312 = vld [vmem:[%s1303 + $0x20] sm:$0xf]
        %v1313 = vld [vmem:[%s1303 + $0x24] sm:$0xf]
        %v1314 = vld [vmem:[%s1303 + $0x28] sm:$0xf]
        %v1315 = vld [vmem:[%s1303 + $0x2c] sm:$0xf]
        %v1316 = vld [vmem:[%s1303 + $0x30] sm:$0xf]
        %v1317 = vld [vmem:[%s1303 + $0x34] sm:$0xf]
        %v1318 = vld [vmem:[%s1303 + $0x38] sm:$0xf]
        %v1319 = vld [vmem:[%s1303 + $0x3c] sm:$0xf]
        %v1320 = vld [vmem:[#allocation4 + $0x8] sm:$0xf]
        %v1321 = vpack.c.bf16 %v1320, %v1320
        %s1322 = scalar_lea.vmem %s3, 640
        %v1323 = vld [vmem:[%s1322] sm:$0xf]
        %v1324 = vld [vmem:[%s1322 + $0x4] sm:$0xf]
        %v1325 = vld [vmem:[%s1322 + $0x8] sm:$0xf]
        %v1326 = vld [vmem:[%s1322 + $0xc] sm:$0xf]
        %v1327 = vld [vmem:[%s1322 + $0x10] sm:$0xf]
        %v1328 = vld [vmem:[%s1322 + $0x14] sm:$0xf]
        %v1329 = vld [vmem:[%s1322 + $0x18] sm:$0xf]
        %v1330 = vld [vmem:[%s1322 + $0x1c] sm:$0xf]
        %v1331 = vld [vmem:[%s1322 + $0x20] sm:$0xf]
        %v1332 = vld [vmem:[%s1322 + $0x24] sm:$0xf]
        %v1333 = vld [vmem:[%s1322 + $0x28] sm:$0xf]
        %v1334 = vld [vmem:[%s1322 + $0x2c] sm:$0xf]
        %v1335 = vld [vmem:[%s1322 + $0x30] sm:$0xf]
        %v1336 = vld [vmem:[%s1322 + $0x34] sm:$0xf]
        %v1337 = vld [vmem:[%s1322 + $0x38] sm:$0xf]
        %v1338 = vld [vmem:[%s1322 + $0x3c] sm:$0xf]
        %v1355 = vunpack.c.l.b16 %v1323
        %v1356 = vunpack.c.l.b16 %v1324
        %v1357 = vunpack.c.l.b16 %v1325
        %v1358 = vunpack.c.l.b16 %v1326
        %v1359 = vunpack.c.l.b16 %v1327
        %v1360 = vunpack.c.l.b16 %v1328
        %v1361 = vunpack.c.l.b16 %v1329
        %v1362 = vunpack.c.l.b16 %v1330
        %v1363 = vunpack.c.l.b16 %v1331
        %v1364 = vunpack.c.l.b16 %v1332
        %v1365 = vunpack.c.l.b16 %v1333
        %v1366 = vunpack.c.l.b16 %v1334
        %v1367 = vunpack.c.l.b16 %v1335
        %v1368 = vunpack.c.l.b16 %v1336
        %v1369 = vunpack.c.l.b16 %v1337
        %v1370 = vunpack.c.l.b16 %v1338
        %v1371 = vpack.c.b16 %v1356, %v1355
        %v1372 = vpack.c.b16 %v1358, %v1357
        %v1373 = vpack.c.b16 %v1360, %v1359
        %v1374 = vpack.c.b16 %v1362, %v1361
        %v1375 = vpack.c.b16 %v1364, %v1363
        %v1376 = vpack.c.b16 %v1366, %v1365
        %v1377 = vpack.c.b16 %v1368, %v1367
        %v1378 = vpack.c.b16 %v1370, %v1369
        %1387 = vmatpush.bf16.msra.mxu0 %v1378
        %1388 = vmatpush.bf16.msra.mxu0 %v1377
        %1389 = vmatpush.bf16.msra.mxu0 %v1376
        %1390 = vmatpush.bf16.msra.mxu0 %v1375
        %1391 = vmatpush.bf16.msra.mxu0 %v1374
        %1392 = vmatpush.bf16.msra.mxu0 %v1373
        %1393 = vmatpush.bf16.msra.mxu0 %v1372
        %1394 = vmatpush.bf16.msra.mxu0 %v1371
        %1395 = vmatmul.bf16.gmra.mxu0 %v1321
        %v1396 = vpop.f32.mrf.mxu0
        %v1397 = vadd.f32 0.0, %v1396
        %v1398 = vpop.f32.mrf.mxu0
        %1399 = vdwg.mxu0
        %v1416 = vunpack.c.l.b16 %v1304
        %v1417 = vunpack.c.l.b16 %v1305
        %v1418 = vunpack.c.l.b16 %v1306
        %v1419 = vunpack.c.l.b16 %v1307
        %v1420 = vunpack.c.l.b16 %v1308
        %v1421 = vunpack.c.l.b16 %v1309
        %v1422 = vunpack.c.l.b16 %v1310
        %v1423 = vunpack.c.l.b16 %v1311
        %v1424 = vunpack.c.l.b16 %v1312
        %v1425 = vunpack.c.l.b16 %v1313
        %v1426 = vunpack.c.l.b16 %v1314
        %v1427 = vunpack.c.l.b16 %v1315
        %v1428 = vunpack.c.l.b16 %v1316
        %v1429 = vunpack.c.l.b16 %v1317
        %v1430 = vunpack.c.l.b16 %v1318
        %v1431 = vunpack.c.l.b16 %v1319
        %v1432 = vpack.c.b16 %v1417, %v1416
        %v1433 = vpack.c.b16 %v1419, %v1418
        %v1434 = vpack.c.b16 %v1421, %v1420
        %v1435 = vpack.c.b16 %v1423, %v1422
        %v1436 = vpack.c.b16 %v1425, %v1424
        %v1437 = vpack.c.b16 %v1427, %v1426
        %v1438 = vpack.c.b16 %v1429, %v1428
        %v1439 = vpack.c.b16 %v1431, %v1430
        %1448 = vmatpush.bf16.msra.mxu0 %v1439
        %1449 = vmatpush.bf16.msra.mxu0 %v1438
        %1450 = vmatpush.bf16.msra.mxu0 %v1437
        %1451 = vmatpush.bf16.msra.mxu0 %v1436
        %1452 = vmatpush.bf16.msra.mxu0 %v1435
        %1453 = vmatpush.bf16.msra.mxu0 %v1434
        %1454 = vmatpush.bf16.msra.mxu0 %v1433
        %1455 = vmatpush.bf16.msra.mxu0 %v1432
        %1456 = vmatmul.bf16.gmra.mxu0 %v1302
        %v1457 = vpop.f32.mrf.mxu0
        %v1458 = vadd.f32 %v1397, %v1457
        %v1459 = vpop.f32.mrf.mxu0
        %1460 = vdwg.mxu0
        %v1461 = vld [vmem:[#allocation4 + $0x9] sm:$0xf]
        %v1462 = vpack.c.bf16 %v1461, %v1461
        %s1463 = scalar_lea.vmem %s3, 704
        %v1464 = vld [vmem:[%s1463] sm:$0xf]
        %v1465 = vld [vmem:[%s1463 + $0x4] sm:$0xf]
        %v1466 = vld [vmem:[%s1463 + $0x8] sm:$0xf]
        %v1467 = vld [vmem:[%s1463 + $0xc] sm:$0xf]
        %v1468 = vld [vmem:[%s1463 + $0x10] sm:$0xf]
        %v1469 = vld [vmem:[%s1463 + $0x14] sm:$0xf]
        %v1470 = vld [vmem:[%s1463 + $0x18] sm:$0xf]
        %v1471 = vld [vmem:[%s1463 + $0x1c] sm:$0xf]
        %v1472 = vld [vmem:[%s1463 + $0x20] sm:$0xf]
        %v1473 = vld [vmem:[%s1463 + $0x24] sm:$0xf]
        %v1474 = vld [vmem:[%s1463 + $0x28] sm:$0xf]
        %v1475 = vld [vmem:[%s1463 + $0x2c] sm:$0xf]
        %v1476 = vld [vmem:[%s1463 + $0x30] sm:$0xf]
        %v1477 = vld [vmem:[%s1463 + $0x34] sm:$0xf]
        %v1478 = vld [vmem:[%s1463 + $0x38] sm:$0xf]
        %v1479 = vld [vmem:[%s1463 + $0x3c] sm:$0xf]
        %v1496 = vunpack.c.l.b16 %v1464
        %v1497 = vunpack.c.l.b16 %v1465
        %v1498 = vunpack.c.l.b16 %v1466
        %v1499 = vunpack.c.l.b16 %v1467
        %v1500 = vunpack.c.l.b16 %v1468
        %v1501 = vunpack.c.l.b16 %v1469
        %v1502 = vunpack.c.l.b16 %v1470
        %v1503 = vunpack.c.l.b16 %v1471
        %v1504 = vunpack.c.l.b16 %v1472
        %v1505 = vunpack.c.l.b16 %v1473
        %v1506 = vunpack.c.l.b16 %v1474
        %v1507 = vunpack.c.l.b16 %v1475
        %v1508 = vunpack.c.l.b16 %v1476
        %v1509 = vunpack.c.l.b16 %v1477
        %v1510 = vunpack.c.l.b16 %v1478
        %v1511 = vunpack.c.l.b16 %v1479
        %v1512 = vpack.c.b16 %v1497, %v1496
        %v1513 = vpack.c.b16 %v1499, %v1498
        %v1514 = vpack.c.b16 %v1501, %v1500
        %v1515 = vpack.c.b16 %v1503, %v1502
        %v1516 = vpack.c.b16 %v1505, %v1504
        %v1517 = vpack.c.b16 %v1507, %v1506
        %v1518 = vpack.c.b16 %v1509, %v1508
        %v1519 = vpack.c.b16 %v1511, %v1510
        %1528 = vmatpush.bf16.msra.mxu0 %v1519
        %1529 = vmatpush.bf16.msra.mxu0 %v1518
        %1530 = vmatpush.bf16.msra.mxu0 %v1517
        %1531 = vmatpush.bf16.msra.mxu0 %v1516
        %1532 = vmatpush.bf16.msra.mxu0 %v1515
        %1533 = vmatpush.bf16.msra.mxu0 %v1514
        %1534 = vmatpush.bf16.msra.mxu0 %v1513
        %1535 = vmatpush.bf16.msra.mxu0 %v1512
        %1536 = vmatmul.bf16.gmra.mxu0 %v1462
        %v1537 = vpop.f32.mrf.mxu0
        %v1538 = vadd.f32 0.0, %v1537
        %v1539 = vpop.f32.mrf.mxu0
        %1540 = vdwg.mxu0
        %v1541 = vadd.f32 %v1458, %v1538
        %v1543 = vperm.slane %v1300, 0
        %v1545 = vadd.f32 %v1541, %v1543
        %v1546 = vadd.f32 %v1545, %v1050
        %v1547 = vmax.f32 %v1546, 0.0
        %1548 = vst [vmem:[#allocation3 + $0x8] sm:$0xf] %v1547
        %v1549 = vld [vmem:[%s6] sm:$0x1]
        %v1550 = vld [vmem:[#allocation3 + $0x7] sm:$0xf]
        %v1551 = vpack.c.bf16 %v1550, %v1550
        %v1552 = vld [vmem:[#allocation7] sm:$0xf]
        %v1553 = vld [vmem:[#allocation7 + $0x4] sm:$0xf]
        %v1554 = vld [vmem:[#allocation7 + $0x8] sm:$0xf]
        %v1555 = vld [vmem:[#allocation7 + $0xc] sm:$0xf]
        %v1556 = vld [vmem:[#allocation7 + $0x10] sm:$0xf]
        %v1557 = vld [vmem:[#allocation7 + $0x14] sm:$0xf]
        %v1558 = vld [vmem:[#allocation7 + $0x18] sm:$0xf]
        %v1559 = vld [vmem:[#allocation7 + $0x1c] sm:$0xf]
        %v1560 = vld [vmem:[#allocation7 + $0x20] sm:$0xf]
        %v1561 = vld [vmem:[#allocation7 + $0x24] sm:$0xf]
        %v1562 = vld [vmem:[#allocation7 + $0x28] sm:$0xf]
        %v1563 = vld [vmem:[#allocation7 + $0x2c] sm:$0xf]
        %v1564 = vld [vmem:[#allocation7 + $0x30] sm:$0xf]
        %v1565 = vld [vmem:[#allocation7 + $0x34] sm:$0xf]
        %v1566 = vld [vmem:[#allocation7 + $0x38] sm:$0xf]
        %v1567 = vld [vmem:[#allocation7 + $0x3c] sm:$0xf]
        %v1568 = vld [vmem:[#allocation3 + $0x8] sm:$0xf]
        %v1569 = vpack.c.bf16 %v1568, %v1568
        %s1570 = scalar_lea.vmem [#allocation7], 64
        %v1571 = vld [vmem:[%s1570] sm:$0xf]
        %v1572 = vld [vmem:[%s1570 + $0x4] sm:$0xf]
        %v1573 = vld [vmem:[%s1570 + $0x8] sm:$0xf]
        %v1574 = vld [vmem:[%s1570 + $0xc] sm:$0xf]
        %v1575 = vld [vmem:[%s1570 + $0x10] sm:$0xf]
        %v1576 = vld [vmem:[%s1570 + $0x14] sm:$0xf]
        %v1577 = vld [vmem:[%s1570 + $0x18] sm:$0xf]
        %v1578 = vld [vmem:[%s1570 + $0x1c] sm:$0xf]
        %v1579 = vld [vmem:[%s1570 + $0x20] sm:$0xf]
        %v1580 = vld [vmem:[%s1570 + $0x24] sm:$0xf]
        %v1581 = vld [vmem:[%s1570 + $0x28] sm:$0xf]
        %v1582 = vld [vmem:[%s1570 + $0x2c] sm:$0xf]
        %v1583 = vld [vmem:[%s1570 + $0x30] sm:$0xf]
        %v1584 = vld [vmem:[%s1570 + $0x34] sm:$0xf]
        %v1585 = vld [vmem:[%s1570 + $0x38] sm:$0xf]
        %v1586 = vld [vmem:[%s1570 + $0x3c] sm:$0xf]
        %v1603 = vunpack.c.l.b16 %v1571
        %v1604 = vunpack.c.l.b16 %v1572
        %v1605 = vunpack.c.l.b16 %v1573
        %v1606 = vunpack.c.l.b16 %v1574
        %v1607 = vunpack.c.l.b16 %v1575
        %v1608 = vunpack.c.l.b16 %v1576
        %v1609 = vunpack.c.l.b16 %v1577
        %v1610 = vunpack.c.l.b16 %v1578
        %v1611 = vunpack.c.l.b16 %v1579
        %v1612 = vunpack.c.l.b16 %v1580
        %v1613 = vunpack.c.l.b16 %v1581
        %v1614 = vunpack.c.l.b16 %v1582
        %v1615 = vunpack.c.l.b16 %v1583
        %v1616 = vunpack.c.l.b16 %v1584
        %v1617 = vunpack.c.l.b16 %v1585
        %v1618 = vunpack.c.l.b16 %v1586
        %v1619 = vpack.c.b16 %v1604, %v1603
        %v1620 = vpack.c.b16 %v1606, %v1605
        %v1621 = vpack.c.b16 %v1608, %v1607
        %v1622 = vpack.c.b16 %v1610, %v1609
        %v1623 = vpack.c.b16 %v1612, %v1611
        %v1624 = vpack.c.b16 %v1614, %v1613
        %v1625 = vpack.c.b16 %v1616, %v1615
        %v1626 = vpack.c.b16 %v1618, %v1617
        %1635 = vmatpush.bf16.msra.mxu0 %v1626
        %1636 = vmatpush.bf16.msra.mxu0 %v1625
        %1637 = vmatpush.bf16.msra.mxu0 %v1624
        %1638 = vmatpush.bf16.msra.mxu0 %v1623
        %1639 = vmatpush.bf16.msra.mxu0 %v1622
        %1640 = vmatpush.bf16.msra.mxu0 %v1621
        %1641 = vmatpush.bf16.msra.mxu0 %v1620
        %1642 = vmatpush.bf16.msra.mxu0 %v1619
        %1643 = vmatmul.bf16.gmra.mxu0 %v1569
        %v1644 = vpop.f32.mrf.mxu0
        %v1645 = vadd.f32 0.0, %v1644
        %v1646 = vpop.f32.mrf.mxu0
        %1647 = vdwg.mxu0
        %v1664 = vunpack.c.l.b16 %v1552
        %v1665 = vunpack.c.l.b16 %v1553
        %v1666 = vunpack.c.l.b16 %v1554
        %v1667 = vunpack.c.l.b16 %v1555
        %v1668 = vunpack.c.l.b16 %v1556
        %v1669 = vunpack.c.l.b16 %v1557
        %v1670 = vunpack.c.l.b16 %v1558
        %v1671 = vunpack.c.l.b16 %v1559
        %v1672 = vunpack.c.l.b16 %v1560
        %v1673 = vunpack.c.l.b16 %v1561
        %v1674 = vunpack.c.l.b16 %v1562
        %v1675 = vunpack.c.l.b16 %v1563
        %v1676 = vunpack.c.l.b16 %v1564
        %v1677 = vunpack.c.l.b16 %v1565
        %v1678 = vunpack.c.l.b16 %v1566
        %v1679 = vunpack.c.l.b16 %v1567
        %v1680 = vpack.c.b16 %v1665, %v1664
        %v1681 = vpack.c.b16 %v1667, %v1666
        %v1682 = vpack.c.b16 %v1669, %v1668
        %v1683 = vpack.c.b16 %v1671, %v1670
        %v1684 = vpack.c.b16 %v1673, %v1672
        %v1685 = vpack.c.b16 %v1675, %v1674
        %v1686 = vpack.c.b16 %v1677, %v1676
        %v1687 = vpack.c.b16 %v1679, %v1678
        %1696 = vmatpush.bf16.msra.mxu0 %v1687
        %1697 = vmatpush.bf16.msra.mxu0 %v1686
        %1698 = vmatpush.bf16.msra.mxu0 %v1685
        %1699 = vmatpush.bf16.msra.mxu0 %v1684
        %1700 = vmatpush.bf16.msra.mxu0 %v1683
        %1701 = vmatpush.bf16.msra.mxu0 %v1682
        %1702 = vmatpush.bf16.msra.mxu0 %v1681
        %1703 = vmatpush.bf16.msra.mxu0 %v1680
        %1704 = vmatmul.bf16.gmra.mxu0 %v1551
        %v1705 = vpop.f32.mrf.mxu0
        %v1706 = vadd.f32 %v1645, %v1705
        %v1707 = vpop.f32.mrf.mxu0
        %1708 = vdwg.mxu0
        %v1710 = vperm.slane %v1549, 0
        %v1712 = vadd.f32 %v1706, %v1710
        %s1713 = scalar_lea.vmem [#allocation7], 128
        %v1714 = vld [vmem:[%s1713] sm:$0xf]
        %v1715 = vld [vmem:[%s1713 + $0x4] sm:$0xf]
        %v1716 = vld [vmem:[%s1713 + $0x8] sm:$0xf]
        %v1717 = vld [vmem:[%s1713 + $0xc] sm:$0xf]
        %v1718 = vld [vmem:[%s1713 + $0x10] sm:$0xf]
        %v1719 = vld [vmem:[%s1713 + $0x14] sm:$0xf]
        %v1720 = vld [vmem:[%s1713 + $0x18] sm:$0xf]
        %v1721 = vld [vmem:[%s1713 + $0x1c] sm:$0xf]
        %v1722 = vld [vmem:[%s1713 + $0x20] sm:$0xf]
        %v1723 = vld [vmem:[%s1713 + $0x24] sm:$0xf]
        %v1724 = vld [vmem:[%s1713 + $0x28] sm:$0xf]
        %v1725 = vld [vmem:[%s1713 + $0x2c] sm:$0xf]
        %v1726 = vld [vmem:[%s1713 + $0x30] sm:$0xf]
        %v1727 = vld [vmem:[%s1713 + $0x34] sm:$0xf]
        %v1728 = vld [vmem:[%s1713 + $0x38] sm:$0xf]
        %v1729 = vld [vmem:[%s1713 + $0x3c] sm:$0xf]
        %v1730 = vld [vmem:[#allocation3 + $0x9] sm:$0xf]
        %v1731 = vpack.c.bf16 %v1730, %v1730
        %s1732 = scalar_lea.vmem [#allocation7], 192
        %v1733 = vld [vmem:[%s1732] sm:$0xf]
        %v1734 = vld [vmem:[%s1732 + $0x4] sm:$0xf]
        %v1735 = vld [vmem:[%s1732 + $0x8] sm:$0xf]
        %v1736 = vld [vmem:[%s1732 + $0xc] sm:$0xf]
        %v1737 = vld [vmem:[%s1732 + $0x10] sm:$0xf]
        %v1738 = vld [vmem:[%s1732 + $0x14] sm:$0xf]
        %v1739 = vld [vmem:[%s1732 + $0x18] sm:$0xf]
        %v1740 = vld [vmem:[%s1732 + $0x1c] sm:$0xf]
        %v1741 = vld [vmem:[%s1732 + $0x20] sm:$0xf]
        %v1742 = vld [vmem:[%s1732 + $0x24] sm:$0xf]
        %v1743 = vld [vmem:[%s1732 + $0x28] sm:$0xf]
        %v1744 = vld [vmem:[%s1732 + $0x2c] sm:$0xf]
        %v1745 = vld [vmem:[%s1732 + $0x30] sm:$0xf]
        %v1746 = vld [vmem:[%s1732 + $0x34] sm:$0xf]
        %v1747 = vld [vmem:[%s1732 + $0x38] sm:$0xf]
        %v1748 = vld [vmem:[%s1732 + $0x3c] sm:$0xf]
        %v1765 = vunpack.c.l.b16 %v1733
        %v1766 = vunpack.c.l.b16 %v1734
        %v1767 = vunpack.c.l.b16 %v1735
        %v1768 = vunpack.c.l.b16 %v1736
        %v1769 = vunpack.c.l.b16 %v1737
        %v1770 = vunpack.c.l.b16 %v1738
        %v1771 = vunpack.c.l.b16 %v1739
        %v1772 = vunpack.c.l.b16 %v1740
        %v1773 = vunpack.c.l.b16 %v1741
        %v1774 = vunpack.c.l.b16 %v1742
        %v1775 = vunpack.c.l.b16 %v1743
        %v1776 = vunpack.c.l.b16 %v1744
        %v1777 = vunpack.c.l.b16 %v1745
        %v1778 = vunpack.c.l.b16 %v1746
        %v1779 = vunpack.c.l.b16 %v1747
        %v1780 = vunpack.c.l.b16 %v1748
        %v1781 = vpack.c.b16 %v1766, %v1765
        %v1782 = vpack.c.b16 %v1768, %v1767
        %v1783 = vpack.c.b16 %v1770, %v1769
        %v1784 = vpack.c.b16 %v1772, %v1771
        %v1785 = vpack.c.b16 %v1774, %v1773
        %v1786 = vpack.c.b16 %v1776, %v1775
        %v1787 = vpack.c.b16 %v1778, %v1777
        %v1788 = vpack.c.b16 %v1780, %v1779
        %1797 = vmatpush.bf16.msra.mxu0 %v1788
        %1798 = vmatpush.bf16.msra.mxu0 %v1787
        %1799 = vmatpush.bf16.msra.mxu0 %v1786
        %1800 = vmatpush.bf16.msra.mxu0 %v1785
        %1801 = vmatpush.bf16.msra.mxu0 %v1784
        %1802 = vmatpush.bf16.msra.mxu0 %v1783
        %1803 = vmatpush.bf16.msra.mxu0 %v1782
        %1804 = vmatpush.bf16.msra.mxu0 %v1781
        %1805 = vmatmul.bf16.gmra.mxu0 %v1731
        %v1806 = vpop.f32.mrf.mxu0
        %v1807 = vadd.f32 0.0, %v1806
        %v1808 = vpop.f32.mrf.mxu0
        %1809 = vdwg.mxu0
        %v1826 = vunpack.c.l.b16 %v1714
        %v1827 = vunpack.c.l.b16 %v1715
        %v1828 = vunpack.c.l.b16 %v1716
        %v1829 = vunpack.c.l.b16 %v1717
        %v1830 = vunpack.c.l.b16 %v1718
        %v1831 = vunpack.c.l.b16 %v1719
        %v1832 = vunpack.c.l.b16 %v1720
        %v1833 = vunpack.c.l.b16 %v1721
        %v1834 = vunpack.c.l.b16 %v1722
        %v1835 = vunpack.c.l.b16 %v1723
        %v1836 = vunpack.c.l.b16 %v1724
        %v1837 = vunpack.c.l.b16 %v1725
        %v1838 = vunpack.c.l.b16 %v1726
        %v1839 = vunpack.c.l.b16 %v1727
        %v1840 = vunpack.c.l.b16 %v1728
        %v1841 = vunpack.c.l.b16 %v1729
        %v1842 = vpack.c.b16 %v1827, %v1826
        %v1843 = vpack.c.b16 %v1829, %v1828
        %v1844 = vpack.c.b16 %v1831, %v1830
        %v1845 = vpack.c.b16 %v1833, %v1832
        %v1846 = vpack.c.b16 %v1835, %v1834
        %v1847 = vpack.c.b16 %v1837, %v1836
        %v1848 = vpack.c.b16 %v1839, %v1838
        %v1849 = vpack.c.b16 %v1841, %v1840
        %1858 = vmatpush.bf16.msra.mxu0 %v1849
        %1859 = vmatpush.bf16.msra.mxu0 %v1848
        %1860 = vmatpush.bf16.msra.mxu0 %v1847
        %1861 = vmatpush.bf16.msra.mxu0 %v1846
        %1862 = vmatpush.bf16.msra.mxu0 %v1845
        %1863 = vmatpush.bf16.msra.mxu0 %v1844
        %1864 = vmatpush.bf16.msra.mxu0 %v1843
        %1865 = vmatpush.bf16.msra.mxu0 %v1842
        %1866 = vmatmul.bf16.gmra.mxu0 %v1569
        %v1867 = vpop.f32.mrf.mxu0
        %v1868 = vadd.f32 %v1807, %v1867
        %v1869 = vpop.f32.mrf.mxu0
        %1870 = vdwg.mxu0
        %v1871 = vadd.f32 %v1868, %v1710
        %v1872 = vlaneseq
        %v1873 = vshrl.u32 %v1872, 7
        %v1874 = vlaneseq
        %v1875 = vand.u32 %v1874, 127
        %v1876 = vmul.u32 %v1875, 2
        %vm1877 = vcmp.eq.s32.totalorder %v1873, %v1876
        %v1878 = vsel %vm1877, 1, 0
        %v1879 = vcvt.s32.f32 %v1878
        %v1880 = vadd.s32 %v1876, 1
        %vm1881 = vcmp.eq.s32.totalorder %v1873, %v1880
        %v1882 = vsel %vm1881, 1, 0
        %v1883 = vcvt.s32.f32 %v1882
        %vm1884 = vcmask 31744
        %v1886 = vsel %vm1884, %v1883, 0
        %vm1888 = vcmask 1043456
        %v1890 = vsel %vm1888, %v1871, 0
        %1892 = vmatpush.msra.mxu0 0.0
        %1893 = vmatpush.msra.mxu0 0.0
        %1894 = vmatpush.msra.mxu0 0.0
        %1895 = vmatpush.msra.mxu0 0.0
        %1896 = vmatpush.msra.mxu0 0.0
        %1897 = vmatpush.msra.mxu0 0.0
        %1898 = vmatpush.msra.mxu0 0.0
        %1899 = vmatpush.msra.mxu0 0.0
        %1900 = vmatpush.msra.mxu0 0.0
        %1901 = vmatpush.msra.mxu0 0.0
        %1902 = vmatpush.msra.mxu0 0.0
        %1903 = vmatpush.msra.mxu0 0.0
        %1904 = vmatpush.msra.mxu0 0.0
        %1905 = vmatpush.msra.mxu0 0.0
        %1906 = vmatpush.msra.mxu0 0.0
        %1907 = vmatpush.msra.mxu0 %v1890
        %1908 = vmatmul.f32.gmra.mxu0 %v1886
        %v1909 = vpop.f32.mrf.mxu0
        %v1910 = vadd.f32 0.0, %v1909
        %1911 = vdwg.mxu0
        %v1913 = vsel %vm1884, %v1879, 0
        %v1916 = vsel %vm1888, %v1712, 0
        %1918 = vmatpush.msra.mxu0 0.0
        %1919 = vmatpush.msra.mxu0 0.0
        %1920 = vmatpush.msra.mxu0 0.0
        %1921 = vmatpush.msra.mxu0 0.0
        %1922 = vmatpush.msra.mxu0 0.0
        %1923 = vmatpush.msra.mxu0 0.0
        %1924 = vmatpush.msra.mxu0 0.0
        %1925 = vmatpush.msra.mxu0 0.0
        %1926 = vmatpush.msra.mxu0 0.0
        %1927 = vmatpush.msra.mxu0 0.0
        %1928 = vmatpush.msra.mxu0 0.0
        %1929 = vmatpush.msra.mxu0 0.0
        %1930 = vmatpush.msra.mxu0 0.0
        %1931 = vmatpush.msra.mxu0 0.0
        %1932 = vmatpush.msra.mxu0 0.0
        %1933 = vmatpush.msra.mxu0 %v1916
        %1934 = vmatmul.f32.gmra.mxu0 %v1913
        %v1935 = vpop.f32.mrf.mxu0
        %v1936 = vadd.f32 %v1910, %v1935
        %1937 = vdwg.mxu0
        %v1938 = vmax.f32 %v1936, 0.0
        %1939 = vst [vmem:[#allocation5 + $0x8] sm:$0xff] %v1938
        %v1940 = vld [vmem:[%s8] sm:$0x3]
        %v1941 = vld [vmem:[#allocation5 + $0x7] sm:$0xff]
        %v1942 = vpack.c.bf16 %v1941, %v1941
        %v1943 = vld [vmem:[#allocation9] sm:$0xff]
        %v1944 = vld [vmem:[#allocation9 + $0x8] sm:$0xff]
        %v1945 = vld [vmem:[#allocation9 + $0x10] sm:$0xff]
        %v1946 = vld [vmem:[#allocation9 + $0x18] sm:$0xff]
        %v1947 = vld [vmem:[#allocation9 + $0x20] sm:$0xff]
        %v1948 = vld [vmem:[#allocation9 + $0x28] sm:$0xff]
        %v1949 = vld [vmem:[#allocation9 + $0x30] sm:$0xff]
        %v1950 = vld [vmem:[#allocation9 + $0x38] sm:$0xff]
        %v1951 = vld [vmem:[#allocation9 + $0x40] sm:$0xff]
        %v1952 = vld [vmem:[#allocation9 + $0x48] sm:$0xff]
        %v1953 = vld [vmem:[#allocation9 + $0x50] sm:$0xff]
        %v1954 = vld [vmem:[#allocation9 + $0x58] sm:$0xff]
        %v1955 = vld [vmem:[#allocation9 + $0x60] sm:$0xff]
        %v1956 = vld [vmem:[#allocation9 + $0x68] sm:$0xff]
        %v1957 = vld [vmem:[#allocation9 + $0x70] sm:$0xff]
        %v1958 = vld [vmem:[#allocation9 + $0x78] sm:$0xff]
        %v1959 = vld [vmem:[#allocation5 + $0x8] sm:$0xff]
        %v1960 = vpack.c.bf16 %v1959, %v1959
        %s1961 = scalar_lea.vmem [#allocation9], 128
        %v1962 = vld [vmem:[%s1961] sm:$0xff]
        %v1963 = vld [vmem:[%s1961 + $0x8] sm:$0xff]
        %v1964 = vld [vmem:[%s1961 + $0x10] sm:$0xff]
        %v1965 = vld [vmem:[%s1961 + $0x18] sm:$0xff]
        %v1966 = vld [vmem:[%s1961 + $0x20] sm:$0xff]
        %v1967 = vld [vmem:[%s1961 + $0x28] sm:$0xff]
        %v1968 = vld [vmem:[%s1961 + $0x30] sm:$0xff]
        %v1969 = vld [vmem:[%s1961 + $0x38] sm:$0xff]
        %v1970 = vld [vmem:[%s1961 + $0x40] sm:$0xff]
        %v1971 = vld [vmem:[%s1961 + $0x48] sm:$0xff]
        %v1972 = vld [vmem:[%s1961 + $0x50] sm:$0xff]
        %v1973 = vld [vmem:[%s1961 + $0x58] sm:$0xff]
        %v1974 = vld [vmem:[%s1961 + $0x60] sm:$0xff]
        %v1975 = vld [vmem:[%s1961 + $0x68] sm:$0xff]
        %v1976 = vld [vmem:[%s1961 + $0x70] sm:$0xff]
        %v1977 = vld [vmem:[%s1961 + $0x78] sm:$0xff]
        %v1994 = vunpack.c.l.b16 %v1962
        %v1995 = vunpack.c.h.b16 %v1962
        %v1996 = vunpack.c.l.b16 %v1963
        %v1997 = vunpack.c.h.b16 %v1963
        %v1998 = vunpack.c.l.b16 %v1964
        %v1999 = vunpack.c.h.b16 %v1964
        %v2000 = vunpack.c.l.b16 %v1965
        %v2001 = vunpack.c.h.b16 %v1965
        %v2002 = vunpack.c.l.b16 %v1966
        %v2003 = vunpack.c.h.b16 %v1966
        %v2004 = vunpack.c.l.b16 %v1967
        %v2005 = vunpack.c.h.b16 %v1967
        %v2006 = vunpack.c.l.b16 %v1968
        %v2007 = vunpack.c.h.b16 %v1968
        %v2008 = vunpack.c.l.b16 %v1969
        %v2009 = vunpack.c.h.b16 %v1969
        %v2010 = vunpack.c.l.b16 %v1970
        %v2011 = vunpack.c.h.b16 %v1970
        %v2012 = vunpack.c.l.b16 %v1971
        %v2013 = vunpack.c.h.b16 %v1971
        %v2014 = vunpack.c.l.b16 %v1972
        %v2015 = vunpack.c.h.b16 %v1972
        %v2016 = vunpack.c.l.b16 %v1973
        %v2017 = vunpack.c.h.b16 %v1973
        %v2018 = vunpack.c.l.b16 %v1974
        %v2019 = vunpack.c.h.b16 %v1974
        %v2020 = vunpack.c.l.b16 %v1975
        %v2021 = vunpack.c.h.b16 %v1975
        %v2022 = vunpack.c.l.b16 %v1976
        %v2023 = vunpack.c.h.b16 %v1976
        %v2024 = vunpack.c.l.b16 %v1977
        %v2025 = vunpack.c.h.b16 %v1977
        %v2026 = vpack.c.b16 %v1996, %v1994
        %v2027 = vpack.c.b16 %v1997, %v1995
        %v2028 = vpack.c.b16 %v2000, %v1998
        %v2029 = vpack.c.b16 %v2001, %v1999
        %v2030 = vpack.c.b16 %v2004, %v2002
        %v2031 = vpack.c.b16 %v2005, %v2003
        %v2032 = vpack.c.b16 %v2008, %v2006
        %v2033 = vpack.c.b16 %v2009, %v2007
        %v2034 = vpack.c.b16 %v2012, %v2010
        %v2035 = vpack.c.b16 %v2013, %v2011
        %v2036 = vpack.c.b16 %v2016, %v2014
        %v2037 = vpack.c.b16 %v2017, %v2015
        %v2038 = vpack.c.b16 %v2020, %v2018
        %v2039 = vpack.c.b16 %v2021, %v2019
        %v2040 = vpack.c.b16 %v2024, %v2022
        %v2041 = vpack.c.b16 %v2025, %v2023
        %2058 = vmatpush.bf16.msra.mxu0 %v2040
        %2059 = vmatpush.bf16.msra.mxu0 %v2038
        %2060 = vmatpush.bf16.msra.mxu0 %v2036
        %2061 = vmatpush.bf16.msra.mxu0 %v2034
        %2062 = vmatpush.bf16.msra.mxu0 %v2032
        %2063 = vmatpush.bf16.msra.mxu0 %v2030
        %2064 = vmatpush.bf16.msra.mxu0 %v2028
        %2065 = vmatpush.bf16.msra.mxu0 %v2026
        %2066 = vmatmul.bf16.gmra.mxu0 %v1960
        %v2067 = vpop.f32.mrf.mxu0
        %v2068 = vadd.f32 0.0, %v2067
        %v2069 = vpop.f32.mrf.mxu0
        %2070 = vdwg.mxu0
        %2071 = vmatpush.bf16.msra.mxu0 %v2041
        %2072 = vmatpush.bf16.msra.mxu0 %v2039
        %2073 = vmatpush.bf16.msra.mxu0 %v2037
        %2074 = vmatpush.bf16.msra.mxu0 %v2035
        %2075 = vmatpush.bf16.msra.mxu0 %v2033
        %2076 = vmatpush.bf16.msra.mxu0 %v2031
        %2077 = vmatpush.bf16.msra.mxu0 %v2029
        %2078 = vmatpush.bf16.msra.mxu0 %v2027
        %2079 = vmatmul.bf16.gmra.mxu0 %v1960
        %v2080 = vpop.f32.mrf.mxu0
        %v2081 = vadd.f32 0.0, %v2080
        %v2082 = vpop.f32.mrf.mxu0
        %2083 = vdwg.mxu0
        %v2100 = vunpack.c.l.b16 %v1943
        %v2101 = vunpack.c.h.b16 %v1943
        %v2102 = vunpack.c.l.b16 %v1944
        %v2103 = vunpack.c.h.b16 %v1944
        %v2104 = vunpack.c.l.b16 %v1945
        %v2105 = vunpack.c.h.b16 %v1945
        %v2106 = vunpack.c.l.b16 %v1946
        %v2107 = vunpack.c.h.b16 %v1946
        %v2108 = vunpack.c.l.b16 %v1947
        %v2109 = vunpack.c.h.b16 %v1947
        %v2110 = vunpack.c.l.b16 %v1948
        %v2111 = vunpack.c.h.b16 %v1948
        %v2112 = vunpack.c.l.b16 %v1949
        %v2113 = vunpack.c.h.b16 %v1949
        %v2114 = vunpack.c.l.b16 %v1950
        %v2115 = vunpack.c.h.b16 %v1950
        %v2116 = vunpack.c.l.b16 %v1951
        %v2117 = vunpack.c.h.b16 %v1951
        %v2118 = vunpack.c.l.b16 %v1952
        %v2119 = vunpack.c.h.b16 %v1952
        %v2120 = vunpack.c.l.b16 %v1953
        %v2121 = vunpack.c.h.b16 %v1953
        %v2122 = vunpack.c.l.b16 %v1954
        %v2123 = vunpack.c.h.b16 %v1954
        %v2124 = vunpack.c.l.b16 %v1955
        %v2125 = vunpack.c.h.b16 %v1955
        %v2126 = vunpack.c.l.b16 %v1956
        %v2127 = vunpack.c.h.b16 %v1956
        %v2128 = vunpack.c.l.b16 %v1957
        %v2129 = vunpack.c.h.b16 %v1957
        %v2130 = vunpack.c.l.b16 %v1958
        %v2131 = vunpack.c.h.b16 %v1958
        %v2132 = vpack.c.b16 %v2102, %v2100
        %v2133 = vpack.c.b16 %v2103, %v2101
        %v2134 = vpack.c.b16 %v2106, %v2104
        %v2135 = vpack.c.b16 %v2107, %v2105
        %v2136 = vpack.c.b16 %v2110, %v2108
        %v2137 = vpack.c.b16 %v2111, %v2109
        %v2138 = vpack.c.b16 %v2114, %v2112
        %v2139 = vpack.c.b16 %v2115, %v2113
        %v2140 = vpack.c.b16 %v2118, %v2116
        %v2141 = vpack.c.b16 %v2119, %v2117
        %v2142 = vpack.c.b16 %v2122, %v2120
        %v2143 = vpack.c.b16 %v2123, %v2121
        %v2144 = vpack.c.b16 %v2126, %v2124
        %v2145 = vpack.c.b16 %v2127, %v2125
        %v2146 = vpack.c.b16 %v2130, %v2128
        %v2147 = vpack.c.b16 %v2131, %v2129
        %2164 = vmatpush.bf16.msra.mxu0 %v2146
        %2165 = vmatpush.bf16.msra.mxu0 %v2144
        %2166 = vmatpush.bf16.msra.mxu0 %v2142
        %2167 = vmatpush.bf16.msra.mxu0 %v2140
        %2168 = vmatpush.bf16.msra.mxu0 %v2138
        %2169 = vmatpush.bf16.msra.mxu0 %v2136
        %2170 = vmatpush.bf16.msra.mxu0 %v2134
        %2171 = vmatpush.bf16.msra.mxu0 %v2132
        %2172 = vmatmul.bf16.gmra.mxu0 %v1942
        %v2173 = vpop.f32.mrf.mxu0
        %v2174 = vadd.f32 %v2068, %v2173
        %v2175 = vpop.f32.mrf.mxu0
        %2176 = vdwg.mxu0
        %2177 = vmatpush.bf16.msra.mxu0 %v2147
        %2178 = vmatpush.bf16.msra.mxu0 %v2145
        %2179 = vmatpush.bf16.msra.mxu0 %v2143
        %2180 = vmatpush.bf16.msra.mxu0 %v2141
        %2181 = vmatpush.bf16.msra.mxu0 %v2139
        %2182 = vmatpush.bf16.msra.mxu0 %v2137
        %2183 = vmatpush.bf16.msra.mxu0 %v2135
        %2184 = vmatpush.bf16.msra.mxu0 %v2133
        %2185 = vmatmul.bf16.gmra.mxu0 %v1942
        %v2186 = vpop.f32.mrf.mxu0
        %v2187 = vadd.f32 %v2081, %v2186
        %v2188 = vpop.f32.mrf.mxu0
        %2189 = vdwg.mxu0
        %v2191 = vperm.slane %v1940, 0
        %v2192 = vperm.slane %v1940, 1
        %v2195 = vadd.f32 %v2174, %v2191
        %v2196 = vadd.f32 %v2187, %v2192
        %s2197 = scalar_lea.vmem [#allocation9], 256
        %v2198 = vld [vmem:[%s2197] sm:$0xff]
        %v2199 = vld [vmem:[%s2197 + $0x8] sm:$0xff]
        %v2200 = vld [vmem:[%s2197 + $0x10] sm:$0xff]
        %v2201 = vld [vmem:[%s2197 + $0x18] sm:$0xff]
        %v2202 = vld [vmem:[%s2197 + $0x20] sm:$0xff]
        %v2203 = vld [vmem:[%s2197 + $0x28] sm:$0xff]
        %v2204 = vld [vmem:[%s2197 + $0x30] sm:$0xff]
        %v2205 = vld [vmem:[%s2197 + $0x38] sm:$0xff]
        %v2206 = vld [vmem:[%s2197 + $0x40] sm:$0xff]
        %v2207 = vld [vmem:[%s2197 + $0x48] sm:$0xff]
        %v2208 = vld [vmem:[%s2197 + $0x50] sm:$0xff]
        %v2209 = vld [vmem:[%s2197 + $0x58] sm:$0xff]
        %v2210 = vld [vmem:[%s2197 + $0x60] sm:$0xff]
        %v2211 = vld [vmem:[%s2197 + $0x68] sm:$0xff]
        %v2212 = vld [vmem:[%s2197 + $0x70] sm:$0xff]
        %v2213 = vld [vmem:[%s2197 + $0x78] sm:$0xff]
        %v2214 = vld [vmem:[#allocation5 + $0x9] sm:$0xff]
        %v2215 = vpack.c.bf16 %v2214, %v2214
        %s2216 = scalar_lea.vmem [#allocation9], 384
        %v2217 = vld [vmem:[%s2216] sm:$0xff]
        %v2218 = vld [vmem:[%s2216 + $0x8] sm:$0xff]
        %v2219 = vld [vmem:[%s2216 + $0x10] sm:$0xff]
        %v2220 = vld [vmem:[%s2216 + $0x18] sm:$0xff]
        %v2221 = vld [vmem:[%s2216 + $0x20] sm:$0xff]
        %v2222 = vld [vmem:[%s2216 + $0x28] sm:$0xff]
        %v2223 = vld [vmem:[%s2216 + $0x30] sm:$0xff]
        %v2224 = vld [vmem:[%s2216 + $0x38] sm:$0xff]
        %v2225 = vld [vmem:[%s2216 + $0x40] sm:$0xff]
        %v2226 = vld [vmem:[%s2216 + $0x48] sm:$0xff]
        %v2227 = vld [vmem:[%s2216 + $0x50] sm:$0xff]
        %v2228 = vld [vmem:[%s2216 + $0x58] sm:$0xff]
        %v2229 = vld [vmem:[%s2216 + $0x60] sm:$0xff]
        %v2230 = vld [vmem:[%s2216 + $0x68] sm:$0xff]
        %v2231 = vld [vmem:[%s2216 + $0x70] sm:$0xff]
        %v2232 = vld [vmem:[%s2216 + $0x78] sm:$0xff]
        %v2249 = vunpack.c.l.b16 %v2217
        %v2250 = vunpack.c.h.b16 %v2217
        %v2251 = vunpack.c.l.b16 %v2218
        %v2252 = vunpack.c.h.b16 %v2218
        %v2253 = vunpack.c.l.b16 %v2219
        %v2254 = vunpack.c.h.b16 %v2219
        %v2255 = vunpack.c.l.b16 %v2220
        %v2256 = vunpack.c.h.b16 %v2220
        %v2257 = vunpack.c.l.b16 %v2221
        %v2258 = vunpack.c.h.b16 %v2221
        %v2259 = vunpack.c.l.b16 %v2222
        %v2260 = vunpack.c.h.b16 %v2222
        %v2261 = vunpack.c.l.b16 %v2223
        %v2262 = vunpack.c.h.b16 %v2223
        %v2263 = vunpack.c.l.b16 %v2224
        %v2264 = vunpack.c.h.b16 %v2224
        %v2265 = vunpack.c.l.b16 %v2225
        %v2266 = vunpack.c.h.b16 %v2225
        %v2267 = vunpack.c.l.b16 %v2226
        %v2268 = vunpack.c.h.b16 %v2226
        %v2269 = vunpack.c.l.b16 %v2227
        %v2270 = vunpack.c.h.b16 %v2227
        %v2271 = vunpack.c.l.b16 %v2228
        %v2272 = vunpack.c.h.b16 %v2228
        %v2273 = vunpack.c.l.b16 %v2229
        %v2274 = vunpack.c.h.b16 %v2229
        %v2275 = vunpack.c.l.b16 %v2230
        %v2276 = vunpack.c.h.b16 %v2230
        %v2277 = vunpack.c.l.b16 %v2231
        %v2278 = vunpack.c.h.b16 %v2231
        %v2279 = vunpack.c.l.b16 %v2232
        %v2280 = vunpack.c.h.b16 %v2232
        %v2281 = vpack.c.b16 %v2251, %v2249
        %v2282 = vpack.c.b16 %v2252, %v2250
        %v2283 = vpack.c.b16 %v2255, %v2253
        %v2284 = vpack.c.b16 %v2256, %v2254
        %v2285 = vpack.c.b16 %v2259, %v2257
        %v2286 = vpack.c.b16 %v2260, %v2258
        %v2287 = vpack.c.b16 %v2263, %v2261
        %v2288 = vpack.c.b16 %v2264, %v2262
        %v2289 = vpack.c.b16 %v2267, %v2265
        %v2290 = vpack.c.b16 %v2268, %v2266
        %v2291 = vpack.c.b16 %v2271, %v2269
        %v2292 = vpack.c.b16 %v2272, %v2270
        %v2293 = vpack.c.b16 %v2275, %v2273
        %v2294 = vpack.c.b16 %v2276, %v2274
        %v2295 = vpack.c.b16 %v2279, %v2277
        %v2296 = vpack.c.b16 %v2280, %v2278
        %2313 = vmatpush.bf16.msra.mxu0 %v2295
        %2314 = vmatpush.bf16.msra.mxu0 %v2293
        %2315 = vmatpush.bf16.msra.mxu0 %v2291
        %2316 = vmatpush.bf16.msra.mxu0 %v2289
        %2317 = vmatpush.bf16.msra.mxu0 %v2287
        %2318 = vmatpush.bf16.msra.mxu0 %v2285
        %2319 = vmatpush.bf16.msra.mxu0 %v2283
        %2320 = vmatpush.bf16.msra.mxu0 %v2281
        %2321 = vmatmul.bf16.gmra.mxu0 %v2215
        %v2322 = vpop.f32.mrf.mxu0
        %v2323 = vadd.f32 0.0, %v2322
        %v2324 = vpop.f32.mrf.mxu0
        %2325 = vdwg.mxu0
        %2326 = vmatpush.bf16.msra.mxu0 %v2296
        %2327 = vmatpush.bf16.msra.mxu0 %v2294
        %2328 = vmatpush.bf16.msra.mxu0 %v2292
        %2329 = vmatpush.bf16.msra.mxu0 %v2290
        %2330 = vmatpush.bf16.msra.mxu0 %v2288
        %2331 = vmatpush.bf16.msra.mxu0 %v2286
        %2332 = vmatpush.bf16.msra.mxu0 %v2284
        %2333 = vmatpush.bf16.msra.mxu0 %v2282
        %2334 = vmatmul.bf16.gmra.mxu0 %v2215
        %v2335 = vpop.f32.mrf.mxu0
        %v2336 = vadd.f32 0.0, %v2335
        %v2337 = vpop.f32.mrf.mxu0
        %2338 = vdwg.mxu0
        %v2355 = vunpack.c.l.b16 %v2198
        %v2356 = vunpack.c.h.b16 %v2198
        %v2357 = vunpack.c.l.b16 %v2199
        %v2358 = vunpack.c.h.b16 %v2199
        %v2359 = vunpack.c.l.b16 %v2200
        %v2360 = vunpack.c.h.b16 %v2200
        %v2361 = vunpack.c.l.b16 %v2201
        %v2362 = vunpack.c.h.b16 %v2201
        %v2363 = vunpack.c.l.b16 %v2202
        %v2364 = vunpack.c.h.b16 %v2202
        %v2365 = vunpack.c.l.b16 %v2203
        %v2366 = vunpack.c.h.b16 %v2203
        %v2367 = vunpack.c.l.b16 %v2204
        %v2368 = vunpack.c.h.b16 %v2204
        %v2369 = vunpack.c.l.b16 %v2205
        %v2370 = vunpack.c.h.b16 %v2205
        %v2371 = vunpack.c.l.b16 %v2206
        %v2372 = vunpack.c.h.b16 %v2206
        %v2373 = vunpack.c.l.b16 %v2207
        %v2374 = vunpack.c.h.b16 %v2207
        %v2375 = vunpack.c.l.b16 %v2208
        %v2376 = vunpack.c.h.b16 %v2208
        %v2377 = vunpack.c.l.b16 %v2209
        %v2378 = vunpack.c.h.b16 %v2209
        %v2379 = vunpack.c.l.b16 %v2210
        %v2380 = vunpack.c.h.b16 %v2210
        %v2381 = vunpack.c.l.b16 %v2211
        %v2382 = vunpack.c.h.b16 %v2211
        %v2383 = vunpack.c.l.b16 %v2212
        %v2384 = vunpack.c.h.b16 %v2212
        %v2385 = vunpack.c.l.b16 %v2213
        %v2386 = vunpack.c.h.b16 %v2213
        %v2387 = vpack.c.b16 %v2357, %v2355
        %v2388 = vpack.c.b16 %v2358, %v2356
        %v2389 = vpack.c.b16 %v2361, %v2359
        %v2390 = vpack.c.b16 %v2362, %v2360
        %v2391 = vpack.c.b16 %v2365, %v2363
        %v2392 = vpack.c.b16 %v2366, %v2364
        %v2393 = vpack.c.b16 %v2369, %v2367
        %v2394 = vpack.c.b16 %v2370, %v2368
        %v2395 = vpack.c.b16 %v2373, %v2371
        %v2396 = vpack.c.b16 %v2374, %v2372
        %v2397 = vpack.c.b16 %v2377, %v2375
        %v2398 = vpack.c.b16 %v2378, %v2376
        %v2399 = vpack.c.b16 %v2381, %v2379
        %v2400 = vpack.c.b16 %v2382, %v2380
        %v2401 = vpack.c.b16 %v2385, %v2383
        %v2402 = vpack.c.b16 %v2386, %v2384
        %2419 = vmatpush.bf16.msra.mxu0 %v2401
        %2420 = vmatpush.bf16.msra.mxu0 %v2399
        %2421 = vmatpush.bf16.msra.mxu0 %v2397
        %2422 = vmatpush.bf16.msra.mxu0 %v2395
        %2423 = vmatpush.bf16.msra.mxu0 %v2393
        %2424 = vmatpush.bf16.msra.mxu0 %v2391
        %2425 = vmatpush.bf16.msra.mxu0 %v2389
        %2426 = vmatpush.bf16.msra.mxu0 %v2387
        %2427 = vmatmul.bf16.gmra.mxu0 %v1960
        %v2428 = vpop.f32.mrf.mxu0
        %v2429 = vadd.f32 %v2323, %v2428
        %v2430 = vpop.f32.mrf.mxu0
        %2431 = vdwg.mxu0
        %2432 = vmatpush.bf16.msra.mxu0 %v2402
        %2433 = vmatpush.bf16.msra.mxu0 %v2400
        %2434 = vmatpush.bf16.msra.mxu0 %v2398
        %2435 = vmatpush.bf16.msra.mxu0 %v2396
        %2436 = vmatpush.bf16.msra.mxu0 %v2394
        %2437 = vmatpush.bf16.msra.mxu0 %v2392
        %2438 = vmatpush.bf16.msra.mxu0 %v2390
        %2439 = vmatpush.bf16.msra.mxu0 %v2388
        %2440 = vmatmul.bf16.gmra.mxu0 %v1960
        %v2441 = vpop.f32.mrf.mxu0
        %v2442 = vadd.f32 %v2336, %v2441
        %v2443 = vpop.f32.mrf.mxu0
        %2444 = vdwg.mxu0
        %v2445 = vadd.f32 %v2429, %v2191
        %v2446 = vadd.f32 %v2442, %v2192
        %v2447 = vadd.s32 %v1873, 8
        %vm2448 = vcmp.eq.s32.totalorder %v2447, %v1876
        %v2449 = vsel %vm2448, 1, 0
        %v2450 = vcvt.s32.f32 %v2449
        %vm2451 = vcmp.eq.s32.totalorder %v2447, %v1880
        %v2452 = vsel %vm2451, 1, 0
        %v2453 = vcvt.s32.f32 %v2452
        %vm2454 = vcmask 64512
        %v2455 = vsel %vm2454, %v1883, 0
        %v2458 = vsel %vm2454, %v2453, 0
        %2460 = vmatpush.msra.mxu0 0.0
        %2461 = vmatpush.msra.mxu0 0.0
        %2462 = vmatpush.msra.mxu0 0.0
        %2463 = vmatpush.msra.mxu0 0.0
        %2464 = vmatpush.msra.mxu0 0.0
        %2465 = vmatpush.msra.mxu0 0.0
        %2466 = vmatpush.msra.mxu0 0.0
        %2467 = vmatpush.msra.mxu0 0.0
        %2468 = vmatpush.msra.mxu0 0.0
        %2469 = vmatpush.msra.mxu0 0.0
        %2470 = vmatpush.msra.mxu0 0.0
        %2471 = vmatpush.msra.mxu0 0.0
        %2472 = vmatpush.msra.mxu0 0.0
        %2473 = vmatpush.msra.mxu0 0.0
        %2474 = vmatpush.msra.mxu0 0.0
        %2475 = vmatpush.msra.mxu0 %v2445
        %2476 = vmatmul.f32.gmra.mxu0 %v2455
        %v2477 = vpop.f32.mrf.mxu0
        %v2478 = vadd.f32 0.0, %v2477
        %2479 = vmatmul.f32.gmra.mxu0 %v2458
        %v2480 = vpop.f32.mrf.mxu0
        %v2481 = vadd.f32 0.0, %v2480
        %2482 = vdwg.mxu0
        %2483 = vmatpush.msra.mxu0 0.0
        %2484 = vmatpush.msra.mxu0 0.0
        %2485 = vmatpush.msra.mxu0 0.0
        %2486 = vmatpush.msra.mxu0 0.0
        %2487 = vmatpush.msra.mxu0 0.0
        %2488 = vmatpush.msra.mxu0 0.0
        %2489 = vmatpush.msra.mxu0 0.0
        %2490 = vmatpush.msra.mxu0 0.0
        %2491 = vmatpush.msra.mxu0 0.0
        %2492 = vmatpush.msra.mxu0 0.0
        %2493 = vmatpush.msra.mxu0 0.0
        %2494 = vmatpush.msra.mxu0 0.0
        %2495 = vmatpush.msra.mxu0 0.0
        %2496 = vmatpush.msra.mxu0 0.0
        %2497 = vmatpush.msra.mxu0 0.0
        %2498 = vmatpush.msra.mxu0 %v2446
        %2499 = vmatmul.f32.gmra.mxu0 %v2455
        %v2500 = vpop.f32.mrf.mxu0
        %v2501 = vadd.f32 0.0, %v2500
        %2502 = vmatmul.f32.gmra.mxu0 %v2458
        %v2503 = vpop.f32.mrf.mxu0
        %v2504 = vadd.f32 0.0, %v2503
        %2505 = vdwg.mxu0
        %v2506 = vsel %vm2454, %v1879, 0
        %v2509 = vsel %vm2454, %v2450, 0
        %2511 = vmatpush.msra.mxu0 0.0
        %2512 = vmatpush.msra.mxu0 0.0
        %2513 = vmatpush.msra.mxu0 0.0
        %2514 = vmatpush.msra.mxu0 0.0
        %2515 = vmatpush.msra.mxu0 0.0
        %2516 = vmatpush.msra.mxu0 0.0
        %2517 = vmatpush.msra.mxu0 0.0
        %2518 = vmatpush.msra.mxu0 0.0
        %2519 = vmatpush.msra.mxu0 0.0
        %2520 = vmatpush.msra.mxu0 0.0
        %2521 = vmatpush.msra.mxu0 0.0
        %2522 = vmatpush.msra.mxu0 0.0
        %2523 = vmatpush.msra.mxu0 0.0
        %2524 = vmatpush.msra.mxu0 0.0
        %2525 = vmatpush.msra.mxu0 0.0
        %2526 = vmatpush.msra.mxu0 %v2195
        %2527 = vmatmul.f32.gmra.mxu0 %v2506
        %v2528 = vpop.f32.mrf.mxu0
        %v2529 = vadd.f32 %v2478, %v2528
        %2530 = vmatmul.f32.gmra.mxu0 %v2509
        %v2531 = vpop.f32.mrf.mxu0
        %v2532 = vadd.f32 %v2481, %v2531
        %2533 = vdwg.mxu0
        %2534 = vmatpush.msra.mxu0 0.0
        %2535 = vmatpush.msra.mxu0 0.0
        %2536 = vmatpush.msra.mxu0 0.0
        %2537 = vmatpush.msra.mxu0 0.0
        %2538 = vmatpush.msra.mxu0 0.0
        %2539 = vmatpush.msra.mxu0 0.0
        %2540 = vmatpush.msra.mxu0 0.0
        %2541 = vmatpush.msra.mxu0 0.0
        %2542 = vmatpush.msra.mxu0 0.0
        %2543 = vmatpush.msra.mxu0 0.0
        %2544 = vmatpush.msra.mxu0 0.0
        %2545 = vmatpush.msra.mxu0 0.0
        %2546 = vmatpush.msra.mxu0 0.0
        %2547 = vmatpush.msra.mxu0 0.0
        %2548 = vmatpush.msra.mxu0 0.0
        %2549 = vmatpush.msra.mxu0 %v2196
        %2550 = vmatmul.f32.gmra.mxu0 %v2506
        %v2551 = vpop.f32.mrf.mxu0
        %v2552 = vadd.f32 %v2501, %v2551
        %2553 = vmatmul.f32.gmra.mxu0 %v2509
        %v2554 = vpop.f32.mrf.mxu0
        %v2555 = vadd.f32 %v2504, %v2554
        %2556 = vdwg.mxu0
        %v2557 = vmax.f32 %v2529, 0.0
        %v2558 = vmax.f32 %v2552, 0.0
        %v2559 = vmax.f32 %v2532, 0.0
        %v2560 = vmax.f32 %v2555, 0.0
        %2561 = vst [vmem:[#allocation6 + $0x10] sm:$0xff] %v2557
        %2562 = vst [vmem:[#allocation6 + $0x18] sm:$0xff] %v2558
        %2563 = vst [vmem:[#allocation6 + $0x20] sm:$0xff] %v2559
        %2564 = vst [vmem:[#allocation6 + $0x28] sm:$0xff] %v2560
        %v2565 = vld [vmem:[%s10] sm:$0x1]
        %v2566 = vld [vmem:[#allocation6] sm:$0x80]
        %v2567 = vld [vmem:[#allocation6 + $0x8] sm:$0x80]
        %v2568 = vld [vmem:[#allocation6 + $0x10] sm:$0xff]
        %v2569 = vld [vmem:[#allocation6 + $0x18] sm:$0xff]
        %v2570 = vld [vmem:[#allocation6 + $0x20] sm:$0x7f]
        %v2571 = vld [vmem:[#allocation6 + $0x28] sm:$0x7f]
        %v2572 = vpack.c.bf16 %v2568, %v2566
        %v2573 = vpack.c.bf16 %v2569, %v2567
        %v2574 = vpack.c.bf16 %v2570, %v2570
        %v2575 = vpack.c.bf16 %v2571, %v2571
        %v2576 = vld [vmem:[%s9] sm:$0xf]
        %v2577 = vld [vmem:[%s9 + $0x4] sm:$0xf]
        %v2578 = vld [vmem:[%s9 + $0x8] sm:$0xf]
        %v2579 = vld [vmem:[%s9 + $0xc] sm:$0xf]
        %v2580 = vld [vmem:[%s9 + $0x10] sm:$0xf]
        %v2581 = vld [vmem:[%s9 + $0x14] sm:$0xf]
        %v2582 = vld [vmem:[%s9 + $0x18] sm:$0xf]
        %v2583 = vld [vmem:[%s9 + $0x1c] sm:$0xf]
        %v2584 = vld [vmem:[%s9 + $0x20] sm:$0xf]
        %v2585 = vld [vmem:[%s9 + $0x24] sm:$0xf]
        %v2586 = vld [vmem:[%s9 + $0x28] sm:$0xf]
        %v2587 = vld [vmem:[%s9 + $0x2c] sm:$0xf]
        %v2588 = vld [vmem:[%s9 + $0x30] sm:$0xf]
        %v2589 = vld [vmem:[%s9 + $0x34] sm:$0xf]
        %v2590 = vld [vmem:[%s9 + $0x38] sm:$0xf]
        %v2591 = vld [vmem:[%s9 + $0x3c] sm:$0xf]
        %v2592 = vld [vmem:[%s9 + $0x40] sm:$0xf]
        %v2593 = vld [vmem:[%s9 + $0x44] sm:$0xf]
        %v2594 = vld [vmem:[%s9 + $0x48] sm:$0xf]
        %v2595 = vld [vmem:[%s9 + $0x4c] sm:$0xf]
        %v2596 = vld [vmem:[%s9 + $0x50] sm:$0xf]
        %v2597 = vld [vmem:[%s9 + $0x54] sm:$0xf]
        %v2598 = vld [vmem:[%s9 + $0x58] sm:$0xf]
        %v2599 = vld [vmem:[%s9 + $0x5c] sm:$0xf]
        %v2600 = vld [vmem:[%s9 + $0x60] sm:$0xf]
        %v2601 = vld [vmem:[%s9 + $0x64] sm:$0xf]
        %v2602 = vld [vmem:[%s9 + $0x68] sm:$0xf]
        %v2603 = vld [vmem:[%s9 + $0x6c] sm:$0xf]
        %v2604 = vld [vmem:[%s9 + $0x70] sm:$0xf]
        %v2605 = vld [vmem:[%s9 + $0x74] sm:$0xf]
        %v2606 = vld [vmem:[%s9 + $0x78] sm:$0xf]
        %v2607 = vld [vmem:[%s9 + $0x7c] sm:$0xf]
        %v2608 = vld [vmem:[#allocation6 + $0x20] sm:$0xff]
        %v2609 = vld [vmem:[#allocation6 + $0x28] sm:$0xff]
        %v2610 = vpack.c.bf16 %v2608, %v2568
        %v2611 = vpack.c.bf16 %v2609, %v2569
        %s2612 = scalar_lea.vmem %s9, 128
        %v2613 = vld [vmem:[%s2612] sm:$0xf]
        %v2614 = vld [vmem:[%s2612 + $0x4] sm:$0xf]
        %v2615 = vld [vmem:[%s2612 + $0x8] sm:$0xf]
        %v2616 = vld [vmem:[%s2612 + $0xc] sm:$0xf]
        %v2617 = vld [vmem:[%s2612 + $0x10] sm:$0xf]
        %v2618 = vld [vmem:[%s2612 + $0x14] sm:$0xf]
        %v2619 = vld [vmem:[%s2612 + $0x18] sm:$0xf]
        %v2620 = vld [vmem:[%s2612 + $0x1c] sm:$0xf]
        %v2621 = vld [vmem:[%s2612 + $0x20] sm:$0xf]
        %v2622 = vld [vmem:[%s2612 + $0x24] sm:$0xf]
        %v2623 = vld [vmem:[%s2612 + $0x28] sm:$0xf]
        %v2624 = vld [vmem:[%s2612 + $0x2c] sm:$0xf]
        %v2625 = vld [vmem:[%s2612 + $0x30] sm:$0xf]
        %v2626 = vld [vmem:[%s2612 + $0x34] sm:$0xf]
        %v2627 = vld [vmem:[%s2612 + $0x38] sm:$0xf]
        %v2628 = vld [vmem:[%s2612 + $0x3c] sm:$0xf]
        %v2629 = vld [vmem:[%s2612 + $0x40] sm:$0xf]
        %v2630 = vld [vmem:[%s2612 + $0x44] sm:$0xf]
        %v2631 = vld [vmem:[%s2612 + $0x48] sm:$0xf]
        %v2632 = vld [vmem:[%s2612 + $0x4c] sm:$0xf]
        %v2633 = vld [vmem:[%s2612 + $0x50] sm:$0xf]
        %v2634 = vld [vmem:[%s2612 + $0x54] sm:$0xf]
        %v2635 = vld [vmem:[%s2612 + $0x58] sm:$0xf]
        %v2636 = vld [vmem:[%s2612 + $0x5c] sm:$0xf]
        %v2637 = vld [vmem:[%s2612 + $0x60] sm:$0xf]
        %v2638 = vld [vmem:[%s2612 + $0x64] sm:$0xf]
        %v2639 = vld [vmem:[%s2612 + $0x68] sm:$0xf]
        %v2640 = vld [vmem:[%s2612 + $0x6c] sm:$0xf]
        %v2641 = vld [vmem:[%s2612 + $0x70] sm:$0xf]
        %v2642 = vld [vmem:[%s2612 + $0x74] sm:$0xf]
        %v2643 = vld [vmem:[%s2612 + $0x78] sm:$0xf]
        %v2644 = vld [vmem:[%s2612 + $0x7c] sm:$0xf]
        %v2677 = vunpack.c.l.b16 %v2613
        %v2678 = vunpack.c.l.b16 %v2614
        %v2679 = vunpack.c.l.b16 %v2615
        %v2680 = vunpack.c.l.b16 %v2616
        %v2681 = vunpack.c.l.b16 %v2617
        %v2682 = vunpack.c.l.b16 %v2618
        %v2683 = vunpack.c.l.b16 %v2619
        %v2684 = vunpack.c.l.b16 %v2620
        %v2685 = vunpack.c.l.b16 %v2621
        %v2686 = vunpack.c.l.b16 %v2622
        %v2687 = vunpack.c.l.b16 %v2623
        %v2688 = vunpack.c.l.b16 %v2624
        %v2689 = vunpack.c.l.b16 %v2625
        %v2690 = vunpack.c.l.b16 %v2626
        %v2691 = vunpack.c.l.b16 %v2627
        %v2692 = vunpack.c.l.b16 %v2628
        %v2693 = vunpack.c.l.b16 %v2629
        %v2694 = vunpack.c.l.b16 %v2630
        %v2695 = vunpack.c.l.b16 %v2631
        %v2696 = vunpack.c.l.b16 %v2632
        %v2697 = vunpack.c.l.b16 %v2633
        %v2698 = vunpack.c.l.b16 %v2634
        %v2699 = vunpack.c.l.b16 %v2635
        %v2700 = vunpack.c.l.b16 %v2636
        %v2701 = vunpack.c.l.b16 %v2637
        %v2702 = vunpack.c.l.b16 %v2638
        %v2703 = vunpack.c.l.b16 %v2639
        %v2704 = vunpack.c.l.b16 %v2640
        %v2705 = vunpack.c.l.b16 %v2641
        %v2706 = vunpack.c.l.b16 %v2642
        %v2707 = vunpack.c.l.b16 %v2643
        %v2708 = vunpack.c.l.b16 %v2644
        %v2709 = vpack.c.b16 %v2678, %v2677
        %v2710 = vpack.c.b16 %v2680, %v2679
        %v2711 = vpack.c.b16 %v2682, %v2681
        %v2712 = vpack.c.b16 %v2684, %v2683
        %v2713 = vpack.c.b16 %v2686, %v2685
        %v2714 = vpack.c.b16 %v2688, %v2687
        %v2715 = vpack.c.b16 %v2690, %v2689
        %v2716 = vpack.c.b16 %v2692, %v2691
        %v2717 = vpack.c.b16 %v2694, %v2693
        %v2718 = vpack.c.b16 %v2696, %v2695
        %v2719 = vpack.c.b16 %v2698, %v2697
        %v2720 = vpack.c.b16 %v2700, %v2699
        %v2721 = vpack.c.b16 %v2702, %v2701
        %v2722 = vpack.c.b16 %v2704, %v2703
        %v2723 = vpack.c.b16 %v2706, %v2705
        %v2724 = vpack.c.b16 %v2708, %v2707
        %2741 = vmatpush.bf16.msra.mxu0 %v2716
        %2742 = vmatpush.bf16.msra.mxu0 %v2715
        %2743 = vmatpush.bf16.msra.mxu0 %v2714
        %2744 = vmatpush.bf16.msra.mxu0 %v2713
        %2745 = vmatpush.bf16.msra.mxu0 %v2712
        %2746 = vmatpush.bf16.msra.mxu0 %v2711
        %2747 = vmatpush.bf16.msra.mxu0 %v2710
        %2748 = vmatpush.bf16.msra.mxu0 %v2709
        %2749 = vmatmul.bf16.gmra.mxu0 %v2610
        %v2750 = vpop.f32.mrf.mxu0
        %v2751 = vadd.f32 0.0, %v2750
        %v2752 = vpop.f32.mrf.mxu0
        %v2753 = vadd.f32 0.0, %v2752
        %2754 = vdwg.mxu0
        %2755 = vmatpush.bf16.msra.mxu0 %v2724
        %2756 = vmatpush.bf16.msra.mxu0 %v2723
        %2757 = vmatpush.bf16.msra.mxu0 %v2722
        %2758 = vmatpush.bf16.msra.mxu0 %v2721
        %2759 = vmatpush.bf16.msra.mxu0 %v2720
        %2760 = vmatpush.bf16.msra.mxu0 %v2719
        %2761 = vmatpush.bf16.msra.mxu0 %v2718
        %2762 = vmatpush.bf16.msra.mxu0 %v2717
        %2763 = vmatmul.bf16.gmra.mxu0 %v2611
        %v2764 = vpop.f32.mrf.mxu0
        %v2765 = vadd.f32 %v2751, %v2764
        %v2766 = vpop.f32.mrf.mxu0
        %v2767 = vadd.f32 %v2753, %v2766
        %2768 = vdwg.mxu0
        %vm2769 = vsmask.f32 4352
        %v2771 = vshrl.u32 %v2572, 16
        %v2773 = vrot.slane %v2771, 3
        %v2774 = vshll.u32 %v2572, 16
        %v2776 = vrot.slane %v2774, 4
        %v2777 = vor.u32 %v2773, %v2776
        %v2779 = vshrl.u32 %v2574, 16
        %v2781 = vrot.slane %v2779, 3
        %v2782 = vshll.u32 %v2574, 16
        %v2784 = vrot.slane %v2782, 4
        %v2785 = vor.u32 %v2781, %v2784
        %v2786 = vsel %vm2769, %v2777, %v2785
        %v2788 = vshrl.u32 %v2573, 16
        %v2790 = vrot.slane %v2788, 3
        %v2791 = vshll.u32 %v2573, 16
        %v2793 = vrot.slane %v2791, 4
        %v2794 = vor.u32 %v2790, %v2793
        %v2796 = vshrl.u32 %v2575, 16
        %v2798 = vrot.slane %v2796, 3
        %v2799 = vshll.u32 %v2575, 16
        %v2801 = vrot.slane %v2799, 4
        %v2802 = vor.u32 %v2798, %v2801
        %v2803 = vsel %vm2769, %v2794, %v2802
        %v2838 = vunpack.c.l.b16 %v2576
        %v2839 = vunpack.c.l.b16 %v2577
        %v2840 = vunpack.c.l.b16 %v2578
        %v2841 = vunpack.c.l.b16 %v2579
        %v2842 = vunpack.c.l.b16 %v2580
        %v2843 = vunpack.c.l.b16 %v2581
        %v2844 = vunpack.c.l.b16 %v2582
        %v2845 = vunpack.c.l.b16 %v2583
        %v2846 = vunpack.c.l.b16 %v2584
        %v2847 = vunpack.c.l.b16 %v2585
        %v2848 = vunpack.c.l.b16 %v2586
        %v2849 = vunpack.c.l.b16 %v2587
        %v2850 = vunpack.c.l.b16 %v2588
        %v2851 = vunpack.c.l.b16 %v2589
        %v2852 = vunpack.c.l.b16 %v2590
        %v2853 = vunpack.c.l.b16 %v2591
        %v2854 = vunpack.c.l.b16 %v2592
        %v2855 = vunpack.c.l.b16 %v2593
        %v2856 = vunpack.c.l.b16 %v2594
        %v2857 = vunpack.c.l.b16 %v2595
        %v2858 = vunpack.c.l.b16 %v2596
        %v2859 = vunpack.c.l.b16 %v2597
        %v2860 = vunpack.c.l.b16 %v2598
        %v2861 = vunpack.c.l.b16 %v2599
        %v2862 = vunpack.c.l.b16 %v2600
        %v2863 = vunpack.c.l.b16 %v2601
        %v2864 = vunpack.c.l.b16 %v2602
        %v2865 = vunpack.c.l.b16 %v2603
        %v2866 = vunpack.c.l.b16 %v2604
        %v2867 = vunpack.c.l.b16 %v2605
        %v2868 = vunpack.c.l.b16 %v2606
        %v2869 = vunpack.c.l.b16 %v2607
        %v2870 = vpack.c.b16 %v2839, %v2838
        %v2871 = vpack.c.b16 %v2841, %v2840
        %v2872 = vpack.c.b16 %v2843, %v2842
        %v2873 = vpack.c.b16 %v2845, %v2844
        %v2874 = vpack.c.b16 %v2847, %v2846
        %v2875 = vpack.c.b16 %v2849, %v2848
        %v2876 = vpack.c.b16 %v2851, %v2850
        %v2877 = vpack.c.b16 %v2853, %v2852
        %v2878 = vpack.c.b16 %v2855, %v2854
        %v2879 = vpack.c.b16 %v2857, %v2856
        %v2880 = vpack.c.b16 %v2859, %v2858
        %v2881 = vpack.c.b16 %v2861, %v2860
        %v2882 = vpack.c.b16 %v2863, %v2862
        %v2883 = vpack.c.b16 %v2865, %v2864
        %v2884 = vpack.c.b16 %v2867, %v2866
        %v2885 = vpack.c.b16 %v2869, %v2868
        %2902 = vmatpush.bf16.msra.mxu0 %v2877
        %2903 = vmatpush.bf16.msra.mxu0 %v2876
        %2904 = vmatpush.bf16.msra.mxu0 %v2875
        %2905 = vmatpush.bf16.msra.mxu0 %v2874
        %2906 = vmatpush.bf16.msra.mxu0 %v2873
        %2907 = vmatpush.bf16.msra.mxu0 %v2872
        %2908 = vmatpush.bf16.msra.mxu0 %v2871
        %2909 = vmatpush.bf16.msra.mxu0 %v2870
        %2910 = vmatmul.bf16.gmra.mxu0 %v2786
        %v2911 = vpop.f32.mrf.mxu0
        %v2912 = vadd.f32 %v2765, %v2911
        %v2913 = vpop.f32.mrf.mxu0
        %v2914 = vadd.f32 %v2767, %v2913
        %2915 = vdwg.mxu0
        %2916 = vmatpush.bf16.msra.mxu0 %v2885
        %2917 = vmatpush.bf16.msra.mxu0 %v2884
        %2918 = vmatpush.bf16.msra.mxu0 %v2883
        %2919 = vmatpush.bf16.msra.mxu0 %v2882
        %2920 = vmatpush.bf16.msra.mxu0 %v2881
        %2921 = vmatpush.bf16.msra.mxu0 %v2880
        %2922 = vmatpush.bf16.msra.mxu0 %v2879
        %2923 = vmatpush.bf16.msra.mxu0 %v2878
        %2924 = vmatmul.bf16.gmra.mxu0 %v2803
        %v2925 = vpop.f32.mrf.mxu0
        %v2926 = vadd.f32 %v2912, %v2925
        %v2927 = vpop.f32.mrf.mxu0
        %v2928 = vadd.f32 %v2914, %v2927
        %2929 = vdwg.mxu0
        %v2931 = vperm.slane %v2565, 0
        %v2933 = vadd.f32 %v2926, %v2931
        %v2934 = vadd.f32 %v2928, %v2931
        %s2935 = scalar_lea.vmem %s9, 256
        %v2936 = vld [vmem:[%s2935] sm:$0xf]
        %v2937 = vld [vmem:[%s2935 + $0x4] sm:$0xf]
        %v2938 = vld [vmem:[%s2935 + $0x8] sm:$0xf]
        %v2939 = vld [vmem:[%s2935 + $0xc] sm:$0xf]
        %v2940 = vld [vmem:[%s2935 + $0x10] sm:$0xf]
        %v2941 = vld [vmem:[%s2935 + $0x14] sm:$0xf]
        %v2942 = vld [vmem:[%s2935 + $0x18] sm:$0xf]
        %v2943 = vld [vmem:[%s2935 + $0x1c] sm:$0xf]
        %v2944 = vld [vmem:[%s2935 + $0x20] sm:$0xf]
        %v2945 = vld [vmem:[%s2935 + $0x24] sm:$0xf]
        %v2946 = vld [vmem:[%s2935 + $0x28] sm:$0xf]
        %v2947 = vld [vmem:[%s2935 + $0x2c] sm:$0xf]
        %v2948 = vld [vmem:[%s2935 + $0x30] sm:$0xf]
        %v2949 = vld [vmem:[%s2935 + $0x34] sm:$0xf]
        %v2950 = vld [vmem:[%s2935 + $0x38] sm:$0xf]
        %v2951 = vld [vmem:[%s2935 + $0x3c] sm:$0xf]
        %v2952 = vld [vmem:[%s2935 + $0x40] sm:$0xf]
        %v2953 = vld [vmem:[%s2935 + $0x44] sm:$0xf]
        %v2954 = vld [vmem:[%s2935 + $0x48] sm:$0xf]
        %v2955 = vld [vmem:[%s2935 + $0x4c] sm:$0xf]
        %v2956 = vld [vmem:[%s2935 + $0x50] sm:$0xf]
        %v2957 = vld [vmem:[%s2935 + $0x54] sm:$0xf]
        %v2958 = vld [vmem:[%s2935 + $0x58] sm:$0xf]
        %v2959 = vld [vmem:[%s2935 + $0x5c] sm:$0xf]
        %v2960 = vld [vmem:[%s2935 + $0x60] sm:$0xf]
        %v2961 = vld [vmem:[%s2935 + $0x64] sm:$0xf]
        %v2962 = vld [vmem:[%s2935 + $0x68] sm:$0xf]
        %v2963 = vld [vmem:[%s2935 + $0x6c] sm:$0xf]
        %v2964 = vld [vmem:[%s2935 + $0x70] sm:$0xf]
        %v2965 = vld [vmem:[%s2935 + $0x74] sm:$0xf]
        %v2966 = vld [vmem:[%s2935 + $0x78] sm:$0xf]
        %v2967 = vld [vmem:[%s2935 + $0x7c] sm:$0xf]
        %v2968 = vld [vmem:[#allocation6 + $0x10] sm:$0xfe]
        %v2969 = vld [vmem:[#allocation6 + $0x18] sm:$0xfe]
        %v2970 = vld [vmem:[#allocation6 + $0x20] sm:$0xff]
        %v2971 = vld [vmem:[#allocation6 + $0x28] sm:$0xff]
        %v2972 = vld [vmem:[#allocation6 + $0x30] sm:$0x1]
        %v2973 = vld [vmem:[#allocation6 + $0x38] sm:$0x1]
        %v2974 = vpack.c.bf16 %v2970, %v2968
        %v2975 = vpack.c.bf16 %v2971, %v2969
        %v2976 = vpack.c.bf16 %v2972, %v2972
        %v2977 = vpack.c.bf16 %v2973, %v2973
        %s2978 = scalar_lea.vmem %s9, 384
        %v2979 = vld [vmem:[%s2978] sm:$0xf]
        %v2980 = vld [vmem:[%s2978 + $0x4] sm:$0xf]
        %v2981 = vld [vmem:[%s2978 + $0x8] sm:$0xf]
        %v2982 = vld [vmem:[%s2978 + $0xc] sm:$0xf]
        %v2983 = vld [vmem:[%s2978 + $0x10] sm:$0xf]
        %v2984 = vld [vmem:[%s2978 + $0x14] sm:$0xf]
        %v2985 = vld [vmem:[%s2978 + $0x18] sm:$0xf]
        %v2986 = vld [vmem:[%s2978 + $0x1c] sm:$0xf]
        %v2987 = vld [vmem:[%s2978 + $0x20] sm:$0xf]
        %v2988 = vld [vmem:[%s2978 + $0x24] sm:$0xf]
        %v2989 = vld [vmem:[%s2978 + $0x28] sm:$0xf]
        %v2990 = vld [vmem:[%s2978 + $0x2c] sm:$0xf]
        %v2991 = vld [vmem:[%s2978 + $0x30] sm:$0xf]
        %v2992 = vld [vmem:[%s2978 + $0x34] sm:$0xf]
        %v2993 = vld [vmem:[%s2978 + $0x38] sm:$0xf]
        %v2994 = vld [vmem:[%s2978 + $0x3c] sm:$0xf]
        %v2995 = vld [vmem:[%s2978 + $0x40] sm:$0xf]
        %v2996 = vld [vmem:[%s2978 + $0x44] sm:$0xf]
        %v2997 = vld [vmem:[%s2978 + $0x48] sm:$0xf]
        %v2998 = vld [vmem:[%s2978 + $0x4c] sm:$0xf]
        %v2999 = vld [vmem:[%s2978 + $0x50] sm:$0xf]
        %v3000 = vld [vmem:[%s2978 + $0x54] sm:$0xf]
        %v3001 = vld [vmem:[%s2978 + $0x58] sm:$0xf]
        %v3002 = vld [vmem:[%s2978 + $0x5c] sm:$0xf]
        %v3003 = vld [vmem:[%s2978 + $0x60] sm:$0xf]
        %v3004 = vld [vmem:[%s2978 + $0x64] sm:$0xf]
        %v3005 = vld [vmem:[%s2978 + $0x68] sm:$0xf]
        %v3006 = vld [vmem:[%s2978 + $0x6c] sm:$0xf]
        %v3007 = vld [vmem:[%s2978 + $0x70] sm:$0xf]
        %v3008 = vld [vmem:[%s2978 + $0x74] sm:$0xf]
        %v3009 = vld [vmem:[%s2978 + $0x78] sm:$0xf]
        %v3010 = vld [vmem:[%s2978 + $0x7c] sm:$0xf]
        %vm3011 = vsmask.f32 7424
        %v3013 = vshrl.u32 %v2974, 16
        %v3015 = vshll.u32 %v2974, 16
        %v3017 = vrot.slane %v3015, 1
        %v3018 = vor.u32 %v3013, %v3017
        %v3020 = vshll.u32 %v2976, 16
        %v3022 = vrot.slane %v3020, 1
        %v3023 = vsel %vm3011, %v3018, %v3022
        %v3025 = vshrl.u32 %v2975, 16
        %v3027 = vshll.u32 %v2975, 16
        %v3029 = vrot.slane %v3027, 1
        %v3030 = vor.u32 %v3025, %v3029
        %v3032 = vshll.u32 %v2977, 16
        %v3034 = vrot.slane %v3032, 1
        %v3035 = vsel %vm3011, %v3030, %v3034
        %v3070 = vunpack.c.l.b16 %v2979
        %v3071 = vunpack.c.l.b16 %v2980
        %v3072 = vunpack.c.l.b16 %v2981
        %v3073 = vunpack.c.l.b16 %v2982
        %v3074 = vunpack.c.l.b16 %v2983
        %v3075 = vunpack.c.l.b16 %v2984
        %v3076 = vunpack.c.l.b16 %v2985
        %v3077 = vunpack.c.l.b16 %v2986
        %v3078 = vunpack.c.l.b16 %v2987
        %v3079 = vunpack.c.l.b16 %v2988
        %v3080 = vunpack.c.l.b16 %v2989
        %v3081 = vunpack.c.l.b16 %v2990
        %v3082 = vunpack.c.l.b16 %v2991
        %v3083 = vunpack.c.l.b16 %v2992
        %v3084 = vunpack.c.l.b16 %v2993
        %v3085 = vunpack.c.l.b16 %v2994
        %v3086 = vunpack.c.l.b16 %v2995
        %v3087 = vunpack.c.l.b16 %v2996
        %v3088 = vunpack.c.l.b16 %v2997
        %v3089 = vunpack.c.l.b16 %v2998
        %v3090 = vunpack.c.l.b16 %v2999
        %v3091 = vunpack.c.l.b16 %v3000
        %v3092 = vunpack.c.l.b16 %v3001
        %v3093 = vunpack.c.l.b16 %v3002
        %v3094 = vunpack.c.l.b16 %v3003
        %v3095 = vunpack.c.l.b16 %v3004
        %v3096 = vunpack.c.l.b16 %v3005
        %v3097 = vunpack.c.l.b16 %v3006
        %v3098 = vunpack.c.l.b16 %v3007
        %v3099 = vunpack.c.l.b16 %v3008
        %v3100 = vunpack.c.l.b16 %v3009
        %v3101 = vunpack.c.l.b16 %v3010
        %v3102 = vpack.c.b16 %v3071, %v3070
        %v3103 = vpack.c.b16 %v3073, %v3072
        %v3104 = vpack.c.b16 %v3075, %v3074
        %v3105 = vpack.c.b16 %v3077, %v3076
        %v3106 = vpack.c.b16 %v3079, %v3078
        %v3107 = vpack.c.b16 %v3081, %v3080
        %v3108 = vpack.c.b16 %v3083, %v3082
        %v3109 = vpack.c.b16 %v3085, %v3084
        %v3110 = vpack.c.b16 %v3087, %v3086
        %v3111 = vpack.c.b16 %v3089, %v3088
        %v3112 = vpack.c.b16 %v3091, %v3090
        %v3113 = vpack.c.b16 %v3093, %v3092
        %v3114 = vpack.c.b16 %v3095, %v3094
        %v3115 = vpack.c.b16 %v3097, %v3096
        %v3116 = vpack.c.b16 %v3099, %v3098
        %v3117 = vpack.c.b16 %v3101, %v3100
        %3134 = vmatpush.bf16.msra.mxu0 %v3109
        %3135 = vmatpush.bf16.msra.mxu0 %v3108
        %3136 = vmatpush.bf16.msra.mxu0 %v3107
        %3137 = vmatpush.bf16.msra.mxu0 %v3106
        %3138 = vmatpush.bf16.msra.mxu0 %v3105
        %3139 = vmatpush.bf16.msra.mxu0 %v3104
        %3140 = vmatpush.bf16.msra.mxu0 %v3103
        %3141 = vmatpush.bf16.msra.mxu0 %v3102
        %3142 = vmatmul.bf16.gmra.mxu0 %v3023
        %v3143 = vpop.f32.mrf.mxu0
        %v3144 = vadd.f32 0.0, %v3143
        %v3145 = vpop.f32.mrf.mxu0
        %v3146 = vadd.f32 0.0, %v3145
        %3147 = vdwg.mxu0
        %3148 = vmatpush.bf16.msra.mxu0 %v3117
        %3149 = vmatpush.bf16.msra.mxu0 %v3116
        %3150 = vmatpush.bf16.msra.mxu0 %v3115
        %3151 = vmatpush.bf16.msra.mxu0 %v3114
        %3152 = vmatpush.bf16.msra.mxu0 %v3113
        %3153 = vmatpush.bf16.msra.mxu0 %v3112
        %3154 = vmatpush.bf16.msra.mxu0 %v3111
        %3155 = vmatpush.bf16.msra.mxu0 %v3110
        %3156 = vmatmul.bf16.gmra.mxu0 %v3035
        %v3157 = vpop.f32.mrf.mxu0
        %v3158 = vadd.f32 %v3144, %v3157
        %v3159 = vpop.f32.mrf.mxu0
        %v3160 = vadd.f32 %v3146, %v3159
        %3161 = vdwg.mxu0
        %v3194 = vunpack.c.l.b16 %v2936
        %v3195 = vunpack.c.l.b16 %v2937
        %v3196 = vunpack.c.l.b16 %v2938
        %v3197 = vunpack.c.l.b16 %v2939
        %v3198 = vunpack.c.l.b16 %v2940
        %v3199 = vunpack.c.l.b16 %v2941
        %v3200 = vunpack.c.l.b16 %v2942
        %v3201 = vunpack.c.l.b16 %v2943
        %v3202 = vunpack.c.l.b16 %v2944
        %v3203 = vunpack.c.l.b16 %v2945
        %v3204 = vunpack.c.l.b16 %v2946
        %v3205 = vunpack.c.l.b16 %v2947
        %v3206 = vunpack.c.l.b16 %v2948
        %v3207 = vunpack.c.l.b16 %v2949
        %v3208 = vunpack.c.l.b16 %v2950
        %v3209 = vunpack.c.l.b16 %v2951
        %v3210 = vunpack.c.l.b16 %v2952
        %v3211 = vunpack.c.l.b16 %v2953
        %v3212 = vunpack.c.l.b16 %v2954
        %v3213 = vunpack.c.l.b16 %v2955
        %v3214 = vunpack.c.l.b16 %v2956
        %v3215 = vunpack.c.l.b16 %v2957
        %v3216 = vunpack.c.l.b16 %v2958
        %v3217 = vunpack.c.l.b16 %v2959
        %v3218 = vunpack.c.l.b16 %v2960
        %v3219 = vunpack.c.l.b16 %v2961
        %v3220 = vunpack.c.l.b16 %v2962
        %v3221 = vunpack.c.l.b16 %v2963
        %v3222 = vunpack.c.l.b16 %v2964
        %v3223 = vunpack.c.l.b16 %v2965
        %v3224 = vunpack.c.l.b16 %v2966
        %v3225 = vunpack.c.l.b16 %v2967
        %v3226 = vpack.c.b16 %v3195, %v3194
        %v3227 = vpack.c.b16 %v3197, %v3196
        %v3228 = vpack.c.b16 %v3199, %v3198
        %v3229 = vpack.c.b16 %v3201, %v3200
        %v3230 = vpack.c.b16 %v3203, %v3202
        %v3231 = vpack.c.b16 %v3205, %v3204
        %v3232 = vpack.c.b16 %v3207, %v3206
        %v3233 = vpack.c.b16 %v3209, %v3208
        %v3234 = vpack.c.b16 %v3211, %v3210
        %v3235 = vpack.c.b16 %v3213, %v3212
        %v3236 = vpack.c.b16 %v3215, %v3214
        %v3237 = vpack.c.b16 %v3217, %v3216
        %v3238 = vpack.c.b16 %v3219, %v3218
        %v3239 = vpack.c.b16 %v3221, %v3220
        %v3240 = vpack.c.b16 %v3223, %v3222
        %v3241 = vpack.c.b16 %v3225, %v3224
        %3258 = vmatpush.bf16.msra.mxu0 %v3233
        %3259 = vmatpush.bf16.msra.mxu0 %v3232
        %3260 = vmatpush.bf16.msra.mxu0 %v3231
        %3261 = vmatpush.bf16.msra.mxu0 %v3230
        %3262 = vmatpush.bf16.msra.mxu0 %v3229
        %3263 = vmatpush.bf16.msra.mxu0 %v3228
        %3264 = vmatpush.bf16.msra.mxu0 %v3227
        %3265 = vmatpush.bf16.msra.mxu0 %v3226
        %3266 = vmatmul.bf16.gmra.mxu0 %v2610
        %v3267 = vpop.f32.mrf.mxu0
        %v3268 = vadd.f32 %v3158, %v3267
        %v3269 = vpop.f32.mrf.mxu0
        %v3270 = vadd.f32 %v3160, %v3269
        %3271 = vdwg.mxu0
        %3272 = vmatpush.bf16.msra.mxu0 %v3241
        %3273 = vmatpush.bf16.msra.mxu0 %v3240
        %3274 = vmatpush.bf16.msra.mxu0 %v3239
        %3275 = vmatpush.bf16.msra.mxu0 %v3238
        %3276 = vmatpush.bf16.msra.mxu0 %v3237
        %3277 = vmatpush.bf16.msra.mxu0 %v3236
        %3278 = vmatpush.bf16.msra.mxu0 %v3235
        %3279 = vmatpush.bf16.msra.mxu0 %v3234
        %3280 = vmatmul.bf16.gmra.mxu0 %v2611
        %v3281 = vpop.f32.mrf.mxu0
        %v3282 = vadd.f32 %v3268, %v3281
        %v3283 = vpop.f32.mrf.mxu0
        %v3284 = vadd.f32 %v3270, %v3283
        %3285 = vdwg.mxu0
        %v3286 = vadd.f32 %v3282, %v2931
        %v3287 = vadd.f32 %v3284, %v2931
        %v3288 = vadd.s32 %v1873, 16
        %v3289 = vadd.s32 %v1873, 24
        %vm3290 = vcmp.eq.s32.totalorder %v3288, %v1876
        %vm3291 = vcmp.eq.s32.totalorder %v3289, %v1876
        %v3292 = vsel %vm3290, 1, 0
        %v3293 = vsel %vm3291, 1, 0
        %v3294 = vcvt.s32.f32 %v3292
        %v3295 = vcvt.s32.f32 %v3293
        %vm3296 = vcmp.eq.s32.totalorder %v3288, %v1880
        %vm3297 = vcmp.eq.s32.totalorder %v3289, %v1880
        %v3298 = vsel %vm3296, 1, 0
        %v3299 = vsel %vm3297, 1, 0
        %v3300 = vcvt.s32.f32 %v3298
        %v3301 = vcvt.s32.f32 %v3299
        %vm3302 = vcmask 130048
        %v3303 = vsel %vm3302, %v1883, 0
        %v3305 = vsel %vm3302, %v2453, 0
        %v3308 = vsel %vm3302, %v3300, 0
        %v3311 = vsel %vm3302, %v3301, 0
        %3313 = vmatpush.msra.mxu0 0.0
        %3314 = vmatpush.msra.mxu0 0.0
        %3315 = vmatpush.msra.mxu0 0.0
        %3316 = vmatpush.msra.mxu0 0.0
        %3317 = vmatpush.msra.mxu0 0.0
        %3318 = vmatpush.msra.mxu0 0.0
        %3319 = vmatpush.msra.mxu0 0.0
        %3320 = vmatpush.msra.mxu0 0.0
        %3321 = vmatpush.msra.mxu0 0.0
        %3322 = vmatpush.msra.mxu0 0.0
        %3323 = vmatpush.msra.mxu0 0.0
        %3324 = vmatpush.msra.mxu0 0.0
        %3325 = vmatpush.msra.mxu0 0.0
        %3326 = vmatpush.msra.mxu0 0.0
        %3327 = vmatpush.msra.mxu0 %v3287
        %3328 = vmatpush.msra.mxu0 %v3286
        %3329 = vmatmul.f32.gmra.mxu0 %v3303
        %v3330 = vpop.f32.mrf.mxu0
        %v3331 = vadd.f32 0.0, %v3330
        %3332 = vmatmul.f32.gmra.mxu0 %v3305
        %v3333 = vpop.f32.mrf.mxu0
        %v3334 = vadd.f32 0.0, %v3333
        %3335 = vmatmul.f32.gmra.mxu0 %v3308
        %v3336 = vpop.f32.mrf.mxu0
        %v3337 = vadd.f32 0.0, %v3336
        %3338 = vmatmul.f32.gmra.mxu0 %v3311
        %v3339 = vpop.f32.mrf.mxu0
        %v3340 = vadd.f32 0.0, %v3339
        %3341 = vdwg.mxu0
        %v3342 = vsel %vm3302, %v1879, 0
        %v3344 = vsel %vm3302, %v2450, 0
        %v3347 = vsel %vm3302, %v3294, 0
        %v3350 = vsel %vm3302, %v3295, 0
        %3352 = vmatpush.msra.mxu0 0.0
        %3353 = vmatpush.msra.mxu0 0.0
        %3354 = vmatpush.msra.mxu0 0.0
        %3355 = vmatpush.msra.mxu0 0.0
        %3356 = vmatpush.msra.mxu0 0.0
        %3357 = vmatpush.msra.mxu0 0.0
        %3358 = vmatpush.msra.mxu0 0.0
        %3359 = vmatpush.msra.mxu0 0.0
        %3360 = vmatpush.msra.mxu0 0.0
        %3361 = vmatpush.msra.mxu0 0.0
        %3362 = vmatpush.msra.mxu0 0.0
        %3363 = vmatpush.msra.mxu0 0.0
        %3364 = vmatpush.msra.mxu0 0.0
        %3365 = vmatpush.msra.mxu0 0.0
        %3366 = vmatpush.msra.mxu0 %v2934
        %3367 = vmatpush.msra.mxu0 %v2933
        %3368 = vmatmul.f32.gmra.mxu0 %v3342
        %v3369 = vpop.f32.mrf.mxu0
        %v3370 = vadd.f32 %v3331, %v3369
        %3371 = vmatmul.f32.gmra.mxu0 %v3344
        %v3372 = vpop.f32.mrf.mxu0
        %v3373 = vadd.f32 %v3334, %v3372
        %3374 = vmatmul.f32.gmra.mxu0 %v3347
        %v3375 = vpop.f32.mrf.mxu0
        %v3376 = vadd.f32 %v3337, %v3375
        %3377 = vmatmul.f32.gmra.mxu0 %v3350
        %v3378 = vpop.f32.mrf.mxu0
        %v3379 = vadd.f32 %v3340, %v3378
        %3380 = vdwg.mxu0
        %vm3381 = vcmask 785408
        %3382 = vst.msk [vmem:[%s417] sm:$0xff] %vm3381, %v3370
        %3383 = vst.msk [vmem:[%s417 + $0x8] sm:$0xff] %vm3381, %v3373
        %3384 = vst.msk [vmem:[%s417 + $0x10] sm:$0xff] %vm3381, %v3376
        %3385 = vst.msk [vmem:[%s417 + $0x18] sm:$0xff] %vm3381, %v3379
        %p3386 = scmp.lt.s32.totalorder %s24, 1
        %s3387 = scalar_select %p3386, %s24, 1
        %s3388 = smul.addr %s3387, 4
        %s3389 = smul.addr %s3388, 8
        %s3390 = scalar_lea.vmem %s11, %s3389
        // Predicated region
        $region73: #{decoder_forward.1} parent=63 // pred_check
          %p3391 = pneg %p278
        $region74: #{decoder_forward.1} parent=63 // pred_check_branch
          %3393 = sbr.rel (%p3391) target = $region76
        $region75: #{decoder_forward.1} parent=63 // pred_region
          _
        $region76: #{decoder_forward.1} parent=63 // pred_fallthru
          _
      $region64: #{decoder_forward.1} parent=5 // pred_fallthru
        _
      %p3394 = scmp.le.s32.totalorder 2, %s19
      // Predicated region
      $region77: #{decoder_forward.1} parent=5 // pred_check
        %p3395 = pneg %p3394
      $region78: #{decoder_forward.1} parent=5 // pred_check_branch
        %3397 = sbr.rel (%p3395) target = $region80
      $region79: #{decoder_forward.1} parent=5 // pred_region
        %s3398 = ssub.s32 %s19, 2
        // Predicated region
        $region81: #{decoder_forward.1} parent=79 // pred_check
          %p3399 = pneg %p284
        $region82: #{decoder_forward.1} parent=79 // pred_check_branch
          %3401 = sbr.rel (%p3399) target = $region84
        $region83: #{decoder_forward.1} parent=79 // pred_region
          %p3402 = scmp.lt.s32.totalorder %s25, 1
          %s3403 = scalar_select %p3402, %s25, 1
          %s3404 = smul.addr %s3403, 4
          %s3405 = smul.addr %s3404, 8
          %s3406 = scalar_lea.vmem %s11, %s3405
        $region84: #{decoder_forward.1} parent=79 // pred_fallthru
          _
      $region80: #{decoder_forward.1} parent=5 // pred_fallthru
        _
    $region6: #{decoder_forward.1} parent=1 // loop_footer
      %s23 = sadd.s32 1, %s19
    $region7: #{decoder_forward.1} parent=1 // loop_footer_branch
      %18 = sbr.rel target = $region3
    $region8: #{decoder_forward.1} parent=1 // loop_exit
      _
    %3407 = vsyncpa [#allocation8], 1
    %s3408 = scalar_lea.sflag [#allocation8], 1
    %3409 = vsyncpa %s3408, 1
    %3410 = vsyncpa [#allocation10], 1

</llo_original>
